<compile_context>
chip_gen: v6e
topology: v6e:2x2x1
jax: 0.10.0
libtpu: 0.0.40
codegen_flags: <defaults>
</compile_context>

<pallas_src>
import functools
import math

import jax
import jax.numpy as jnp
from jax.experimental import pallas as pl
from jax.experimental.pallas import tpu as pltpu


# ----------------------------------------------------------------------------
# Kernel
# ----------------------------------------------------------------------------
def cross_attention_kernel(a_ref, b_ref,
                           w_ref,      # (E, 4E) = [Wq.T*scale | Wk.T | Wv.T | Wo.T]
                           bias_ref,   # (3, 2E) rows: [bq*scale|bo], [bk|bv], [gamma|beta]
                           out_ref,    # (Bt, S, E)
                           *, num_heads, eps=1e-5):
    Bt, S, E = a_ref.shape
    hd = E // num_heads
    M = Bt * S

    # Flatten the batch block into the matmul M dimension.
    a2 = a_ref[...].reshape(M, E)
    b2 = b_ref[...].reshape(M, E)

    # ---- unpack the fused weight / bias slabs (static slices, no DMAs) -------
    w = w_ref[...]
    wq_t = w[:, 0 * E:1 * E]          # pre-transposed, pre-scaled by 1/sqrt(hd)
    wkv_t = w[:, 1 * E:3 * E]         # fused [Wk.T | Wv.T]
    wo_t = w[:, 3 * E:4 * E]

    bias = bias_ref[...]
    bq = bias[0:1, :E]                # pre-scaled
    bo = bias[0:1, E:]
    bkv = bias[1:2, :]                # fused [bk | bv]
    gamma = bias[2:3, :E]
    beta = bias[2:3, E:]

    # ---- input projections ----------------------------------------------------
    q = jnp.dot(a2, wq_t, preferred_element_type=jnp.float32) + bq        # (M, E)
    kv = jnp.dot(b2, wkv_t, preferred_element_type=jnp.float32) + bkv     # (M, 2E)
    k = kv[:, :E]
    v = kv[:, E:]

    # ---- attention + fused output projection, all in vregs ---------------------
    # attn_out @ Wo.T == sum_h  oh @ Wo.T[h*hd:(h+1)*hd, :]
    # so each head's contribution is accumulated directly into `proj`; no
    # VMEM scratch, no lane-slice stores, no concatenate.
    proj = jnp.zeros((M, E), jnp.float32)
    for h in range(num_heads):                       # nh is small & static
        sl = slice(h * hd, (h + 1) * hd)
        qh = q[:, sl].reshape(Bt, S, hd)
        kh = k[:, sl].reshape(Bt, S, hd)
        vh = v[:, sl].reshape(Bt, S, hd)

        s = jnp.einsum('bqd,bkd->bqk', qh, kh,
                       preferred_element_type=jnp.float32)               # (Bt,S,S)
        m = jnp.max(s, axis=-1, keepdims=True)
        p = jnp.exp(s - m)
        denom = jnp.sum(p, axis=-1, keepdims=True)                        # (Bt,S,1)

        oh = jnp.einsum('bqk,bkd->bqd', p, vh,
                        preferred_element_type=jnp.float32)              # (Bt,S,hd)
        # Deferred softmax normalization; exact divide on the tiny denom tile.
        oh = oh / denom

        proj = proj + jnp.dot(oh.reshape(M, hd), wo_t[sl, :],
                              preferred_element_type=jnp.float32)
    proj = proj + bo

    # ---- LayerNorm over last dim (biased variance, eps=1e-5, PyTorch) ----------
    mean = jnp.mean(proj, axis=-1, keepdims=True)
    centered = proj - mean
    var = jnp.mean(centered * centered, axis=-1, keepdims=True)
    y = centered * jax.lax.rsqrt(var + eps) * gamma + beta

    out_ref[...] = y.reshape(Bt, S, E).astype(out_ref.dtype)


# ----------------------------------------------------------------------------
# Wrapper
# ----------------------------------------------------------------------------
def _pick_block_batch(B, S, target_rows=256):
    """Rows-per-grid-step.  Never split the batch unless each step still feeds
    the MXU >= target_rows rows (Bt*S): on single-TC chips (v5e/v6e) an extra
    grid step is pure ~600-cycle overhead, and even on v7x splitting only pays
    once per-step compute covers the step cost."""
    if B <= 1 or B * S < 2 * target_rows:
        return B
    for bt in range(1, B + 1):           # smallest divisor block that is still "tall"
        if B % bt == 0 and bt * S >= target_rows:
            return bt
    return B


def _vmem_limit_bytes(Bt, S, E):
    """Actual working set + headroom; stays far below v7x's 64 MiB physical VMEM."""
    itemsize = 4
    io = 3 * 2 * Bt * S * E * itemsize                  # a, b, out (double-buffered)
    weights = 2 * (E * 4 * E + 3 * 2 * E) * itemsize    # packed slabs (double-buffered)
    working = io + weights
    return int(min(32 * 1024 * 1024, max(4 * 1024 * 1024, 4 * working)))


def cross_attention(modality_a, modality_b, params, num_heads, block_batch=None):
    """modality_a, modality_b: (B, S, E) float32. Returns (B, S, E)."""
    B, S, E = modality_a.shape
    assert E % num_heads == 0
    hd = E // num_heads
    scale = 1.0 / math.sqrt(hd)

    if block_batch is None:
        block_batch = _pick_block_batch(B, S)
    assert B % block_batch == 0
    Bt = block_batch
    grid = (B // Bt,)

    # Host-side (XLA) weight prep, done once:
    #   * transpose to (in, out) so the kernel does clean (M,K)@(K,N) matmuls,
    #   * fold the softmax scale into the query projection,
    #   * pack everything into two slabs -> only 4 pallas_call operands.
    w_packed = jnp.concatenate(
        [params["wq"].T * scale, params["wk"].T, params["wv"].T, params["wo"].T],
        axis=1)                                                        # (E, 4E)
    bias_packed = jnp.concatenate(
        [jnp.concatenate([params["bq"] * scale, params["bo"]], axis=1),
         jnp.concatenate([params["bk"], params["bv"]], axis=1),
         jnp.concatenate([params["gamma"], params["beta"]], axis=1)],
        axis=0)                                                        # (3, 2E)

    seq_spec = pl.BlockSpec((Bt, S, E), lambda i: (i, 0, 0))
    # Constant index_map: pipeline fetches the weight slabs once, never re-DMAs.
    const2d = lambda shape: pl.BlockSpec(shape, lambda i: (0, 0))

    kernel = functools.partial(cross_attention_kernel, num_heads=num_heads)

    # With grid=(1,) the semantics are irrelevant; when splitting, mark the
    # batch axis parallel.  TODO(synk): use pltpu.CORE_PARALLEL on v7x once
    # per-step work is measured to cover the step cost.
    dim_sem = ("arbitrary",) if grid[0] == 1 else ("parallel",)

    return pl.pallas_call(
        kernel,
        out_shape=jax.ShapeDtypeStruct((B, S, E), modality_a.dtype),
        grid_spec=pltpu.PrefetchScalarGridSpec(
            num_scalar_prefetch=0,
            grid=grid,
            in_specs=[seq_spec, seq_spec,
                      const2d((E, 4 * E)),
                      const2d((3, 2 * E))],
            out_specs=seq_spec,
        ),
        compiler_params=pltpu.CompilerParams(
            dimension_semantics=dim_sem,
            vmem_limit_bytes=_vmem_limit_bytes(Bt, S, E)),
    )(modality_a, modality_b, w_packed, bias_packed)


# ----------------------------------------------------------------------------
# Parameters (PyTorch nn.MultiheadAttention / nn.LayerNorm shapes & init ranges)
# ----------------------------------------------------------------------------
def init_params(key, embed_dim):
    ks = jax.random.split(key, 5)
    E = embed_dim
    scale = 1.0 / math.sqrt(E)
    in_proj_w = jax.random.uniform(ks[0], (3 * E, E), jnp.float32, -scale, scale)
    in_proj_b = jax.random.uniform(ks[1], (3 * E,), jnp.float32, -scale, scale)
    out_w = jax.random.uniform(ks[2], (E, E), jnp.float32, -scale, scale)
    out_b = jax.random.uniform(ks[3], (E,), jnp.float32, -scale, scale)
    return {
        "wq": in_proj_w[0 * E:1 * E],
        "wk": in_proj_w[1 * E:2 * E],
        "wv": in_proj_w[2 * E:3 * E],
        "bq": in_proj_b[0 * E:1 * E].reshape(1, E),
        "bk": in_proj_b[1 * E:2 * E].reshape(1, E),
        "bv": in_proj_b[2 * E:3 * E].reshape(1, E),
        "wo": out_w,
        "bo": out_b.reshape(1, E),
        "gamma": jnp.ones((1, E), jnp.float32),
        "beta": jnp.zeros((1, E), jnp.float32),
    }


def cross_attention_ref(a, b, params, num_heads):
    """Pure-JAX reference (PyTorch MultiheadAttention + LayerNorm semantics)."""
    B, S, E = a.shape
    hd = E // num_heads
    q = a @ params["wq"].T + params["bq"]
    k = b @ params["wk"].T + params["bk"]
    v = b @ params["wv"].T + params["bv"]
    q = q.reshape(B, S, num_heads, hd).transpose(0, 2, 1, 3)
    k = k.reshape(B, S, num_heads, hd).transpose(0, 2, 1, 3)
    v = v.reshape(B, S, num_heads, hd).transpose(0, 2, 1, 3)
    scores = jnp.einsum("bhqd,bhkd->bhqk", q, k) / math.sqrt(hd)
    attn = jax.nn.softmax(scores, axis=-1)
    out = jnp.einsum("bhqk,bhkd->bhqd", attn, v).transpose(0, 2, 1, 3).reshape(B, S, E)
    proj = out @ params["wo"].T + params["bo"]
    mean = proj.mean(-1, keepdims=True)
    var = ((proj - mean) ** 2).mean(-1, keepdims=True)
    return (proj - mean) / jnp.sqrt(var + 1e-5) * params["gamma"] + params["beta"]


if __name__ == "__main__":
    # Small shapes consistent with forward(): (batch, node_num, embed_dim).
    batch, seq, embed_dim, num_heads = 4, 8, 32, 4

    key = jax.random.PRNGKey(0)
    k_a, k_b, k_p = jax.random.split(key, 3)
    modality_a = jax.random.normal(k_a, (batch, seq, embed_dim), jnp.float32)
    modality_b = jax.random.normal(k_b, (batch, seq, embed_dim), jnp.float32)
    params = init_params(k_p, embed_dim)

    out = cross_attention(modality_a, modality_b, params, num_heads)
    out = jax.block_until_ready(out)

    ref = cross_attention_ref(modality_a, modality_b, params, num_heads)
    assert out.shape == (batch, seq, embed_dim)
    assert jnp.allclose(out, ref, atol=2e-3, rtol=2e-3), "mismatch vs reference"

    print("KERNEL_OK")
</pallas_src>

<mosaic_0001>
module attributes {stable_mosaic.version = 11 : i64} {
  func.func @cross_attention_kernel(%arg0: i32, %arg1: memref<4x8x32xf32, #tpu.memory_space<vmem>>, %arg2: memref<4x8x32xf32, #tpu.memory_space<vmem>>, %arg3: memref<32x128xf32, #tpu.memory_space<vmem>>, %arg4: memref<3x64xf32, #tpu.memory_space<vmem>>, %arg5: memref<4x8x32xf32, #tpu.memory_space<vmem>>) attributes {dimension_semantics = [#tpu.dimension_semantics<arbitrary>], iteration_bounds = array<i64: 1>, scalar_prefetch = 0 : i64, scratch_operands = 0 : i64, tpu.core_type = #tpu.core_type<tc>, window_params = [{transform_indices = @transform_0, window_bounds = array<i64: 4, 8, 32>}, {transform_indices = @transform_1, window_bounds = array<i64: 4, 8, 32>}, {pipeline_mode = #tpu.pipeline_mode<synchronous>, transform_indices = @transform_2, window_bounds = array<i64: 32, 128>}, {pipeline_mode = #tpu.pipeline_mode<synchronous>, transform_indices = @transform_3, window_bounds = array<i64: 3, 64>}, {transform_indices = @transform_4, window_bounds = array<i64: 4, 8, 32>}]} {
    %c0 = arith.constant 0 : index
    %c0_0 = arith.constant 0 : index
    %c0_1 = arith.constant 0 : index
    %0 = vector.load %arg1[%c0, %c0_0, %c0_1] : memref<4x8x32xf32, #tpu.memory_space<vmem>>, vector<4x8x32xf32>
    %1 = vector.shape_cast %0 : vector<4x8x32xf32> to vector<32x32xf32>
    %c0_2 = arith.constant 0 : index
    %c0_3 = arith.constant 0 : index
    %c0_4 = arith.constant 0 : index
    %2 = vector.load %arg2[%c0_2, %c0_3, %c0_4] : memref<4x8x32xf32, #tpu.memory_space<vmem>>, vector<4x8x32xf32>
    %3 = vector.shape_cast %2 : vector<4x8x32xf32> to vector<32x32xf32>
    %c0_5 = arith.constant 0 : index
    %c0_6 = arith.constant 0 : index
    %4 = vector.load %arg3[%c0_5, %c0_6] : memref<32x128xf32, #tpu.memory_space<vmem>>, vector<32x128xf32>
    %5 = vector.extract_strided_slice %4 {offsets = [0, 0], sizes = [32, 32], strides = [1, 1]} : vector<32x128xf32> to vector<32x32xf32>
    %6 = vector.extract_strided_slice %4 {offsets = [0, 32], sizes = [32, 64], strides = [1, 1]} : vector<32x128xf32> to vector<32x64xf32>
    %7 = vector.extract_strided_slice %4 {offsets = [0, 96], sizes = [32, 32], strides = [1, 1]} : vector<32x128xf32> to vector<32x32xf32>
    %c0_7 = arith.constant 0 : index
    %c0_8 = arith.constant 0 : index
    %8 = vector.load %arg4[%c0_7, %c0_8] : memref<3x64xf32, #tpu.memory_space<vmem>>, vector<3x64xf32>
    %9 = vector.extract_strided_slice %8 {offsets = [0, 0], sizes = [1, 32], strides = [1, 1]} : vector<3x64xf32> to vector<1x32xf32>
    %10 = vector.extract_strided_slice %8 {offsets = [0, 32], sizes = [1, 32], strides = [1, 1]} : vector<3x64xf32> to vector<1x32xf32>
    %11 = vector.extract_strided_slice %8 {offsets = [1, 0], sizes = [1, 64], strides = [1, 1]} : vector<3x64xf32> to vector<1x64xf32>
    %12 = vector.extract_strided_slice %8 {offsets = [2, 0], sizes = [1, 32], strides = [1, 1]} : vector<3x64xf32> to vector<1x32xf32>
    %13 = vector.extract_strided_slice %8 {offsets = [2, 32], sizes = [1, 32], strides = [1, 1]} : vector<3x64xf32> to vector<1x32xf32>
    %cst = arith.constant dense<0.000000e+00> : vector<32x32xf32>
    %14 = tpu.matmul %1, %5, %cst {dimension_numbers = #tpu.dot_dimension_numbers<[1], [0], [0], [1], [0, 0, 1, 1], [], []>} : vector<32x32xf32>, vector<32x32xf32>, vector<32x32xf32> -> vector<32x32xf32>
    %15 = vector.broadcast %9 : vector<1x32xf32> to vector<32x32xf32>
    %16 = arith.addf %14, %15 : vector<32x32xf32>
    %cst_9 = arith.constant dense<0.000000e+00> : vector<32x64xf32>
    %17 = tpu.matmul %3, %6, %cst_9 {dimension_numbers = #tpu.dot_dimension_numbers<[1], [0], [0], [1], [0, 0, 1, 1], [], []>} : vector<32x32xf32>, vector<32x64xf32>, vector<32x64xf32> -> vector<32x64xf32>
    %18 = vector.broadcast %11 : vector<1x64xf32> to vector<32x64xf32>
    %19 = arith.addf %17, %18 : vector<32x64xf32>
    %20 = vector.extract_strided_slice %19 {offsets = [0, 0], sizes = [32, 32], strides = [1, 1]} : vector<32x64xf32> to vector<32x32xf32>
    %21 = vector.extract_strided_slice %19 {offsets = [0, 32], sizes = [32, 32], strides = [1, 1]} : vector<32x64xf32> to vector<32x32xf32>
    %cst_10 = arith.constant 0.000000e+00 : f32
    %22 = vector.broadcast %cst_10 : f32 to vector<32x32xf32>
    %23 = vector.extract_strided_slice %16 {offsets = [0, 0], sizes = [32, 8], strides = [1, 1]} : vector<32x32xf32> to vector<32x8xf32>
    %24 = vector.shape_cast %23 : vector<32x8xf32> to vector<4x8x8xf32>
    %25 = vector.extract_strided_slice %20 {offsets = [0, 0], sizes = [32, 8], strides = [1, 1]} : vector<32x32xf32> to vector<32x8xf32>
    %26 = vector.shape_cast %25 : vector<32x8xf32> to vector<4x8x8xf32>
    %27 = vector.extract_strided_slice %21 {offsets = [0, 0], sizes = [32, 8], strides = [1, 1]} : vector<32x32xf32> to vector<32x8xf32>
    %28 = vector.shape_cast %27 : vector<32x8xf32> to vector<4x8x8xf32>
    "tpu.trace_start"() <{level = 10 : i32, message = "bqd,bkd->bqk"}> : () -> ()
    %cst_11 = arith.constant dense<0.000000e+00> : vector<4x8x8xf32>
    %29 = tpu.matmul %24, %26, %cst_11 {dimension_numbers = #tpu.dot_dimension_numbers<[2], [2], [1], [1], [0, 0, 0, 1, 1, 1], [0], [0]>} : vector<4x8x8xf32>, vector<4x8x8xf32>, vector<4x8x8xf32> -> vector<4x8x8xf32>
    "tpu.trace_stop"() : () -> ()
    %cst_12 = arith.constant dense<0xFF800000> : vector<4x8xf32>
    %30 = vector.multi_reduction <maximumf>, %29, %cst_12 [2] : vector<4x8x8xf32> to vector<4x8xf32>
    %31 = vector.shape_cast %30 : vector<4x8xf32> to vector<4x8x1xf32>
    %32 = vector.broadcast %31 : vector<4x8x1xf32> to vector<4x8x8xf32>
    %33 = arith.subf %29, %32 : vector<4x8x8xf32>
    %34 = math.exp %33 : vector<4x8x8xf32>
    %cst_13 = arith.constant dense<0.000000e+00> : vector<4x8xf32>
    %35 = vector.multi_reduction <add>, %34, %cst_13 [2] : vector<4x8x8xf32> to vector<4x8xf32>
    %36 = vector.shape_cast %35 : vector<4x8xf32> to vector<4x8x1xf32>
    "tpu.trace_start"() <{level = 10 : i32, message = "bqk,bkd->bqd"}> : () -> ()
    %cst_14 = arith.constant dense<0.000000e+00> : vector<4x8x8xf32>
    %37 = tpu.matmul %34, %28, %cst_14 {dimension_numbers = #tpu.dot_dimension_numbers<[2], [1], [1], [2], [0, 0, 0, 1, 1, 2], [0], [0]>} : vector<4x8x8xf32>, vector<4x8x8xf32>, vector<4x8x8xf32> -> vector<4x8x8xf32>
    "tpu.trace_stop"() : () -> ()
    %38 = vector.broadcast %36 : vector<4x8x1xf32> to vector<4x8x8xf32>
    %39 = arith.divf %37, %38 : vector<4x8x8xf32>
    %40 = vector.shape_cast %39 : vector<4x8x8xf32> to vector<32x8xf32>
    %41 = vector.extract_strided_slice %7 {offsets = [0, 0], sizes = [8, 32], strides = [1, 1]} : vector<32x32xf32> to vector<8x32xf32>
    %cst_15 = arith.constant dense<0.000000e+00> : vector<32x32xf32>
    %42 = tpu.matmul %40, %41, %cst_15 {dimension_numbers = #tpu.dot_dimension_numbers<[1], [0], [0], [1], [0, 0, 1, 1], [], []>} : vector<32x8xf32>, vector<8x32xf32>, vector<32x32xf32> -> vector<32x32xf32>
    %43 = arith.addf %22, %42 : vector<32x32xf32>
    %44 = vector.extract_strided_slice %16 {offsets = [0, 8], sizes = [32, 8], strides = [1, 1]} : vector<32x32xf32> to vector<32x8xf32>
    %45 = vector.shape_cast %44 : vector<32x8xf32> to vector<4x8x8xf32>
    %46 = vector.extract_strided_slice %20 {offsets = [0, 8], sizes = [32, 8], strides = [1, 1]} : vector<32x32xf32> to vector<32x8xf32>
    %47 = vector.shape_cast %46 : vector<32x8xf32> to vector<4x8x8xf32>
    %48 = vector.extract_strided_slice %21 {offsets = [0, 8], sizes = [32, 8], strides = [1, 1]} : vector<32x32xf32> to vector<32x8xf32>
    %49 = vector.shape_cast %48 : vector<32x8xf32> to vector<4x8x8xf32>
    "tpu.trace_start"() <{level = 10 : i32, message = "bqd,bkd->bqk"}> : () -> ()
    %cst_16 = arith.constant dense<0.000000e+00> : vector<4x8x8xf32>
    %50 = tpu.matmul %45, %47, %cst_16 {dimension_numbers = #tpu.dot_dimension_numbers<[2], [2], [1], [1], [0, 0, 0, 1, 1, 1], [0], [0]>} : vector<4x8x8xf32>, vector<4x8x8xf32>, vector<4x8x8xf32> -> vector<4x8x8xf32>
    "tpu.trace_stop"() : () -> ()
    %cst_17 = arith.constant dense<0xFF800000> : vector<4x8xf32>
    %51 = vector.multi_reduction <maximumf>, %50, %cst_17 [2] : vector<4x8x8xf32> to vector<4x8xf32>
    %52 = vector.shape_cast %51 : vector<4x8xf32> to vector<4x8x1xf32>
    %53 = vector.broadcast %52 : vector<4x8x1xf32> to vector<4x8x8xf32>
    %54 = arith.subf %50, %53 : vector<4x8x8xf32>
    %55 = math.exp %54 : vector<4x8x8xf32>
    %cst_18 = arith.constant dense<0.000000e+00> : vector<4x8xf32>
    %56 = vector.multi_reduction <add>, %55, %cst_18 [2] : vector<4x8x8xf32> to vector<4x8xf32>
    %57 = vector.shape_cast %56 : vector<4x8xf32> to vector<4x8x1xf32>
    "tpu.trace_start"() <{level = 10 : i32, message = "bqk,bkd->bqd"}> : () -> ()
    %cst_19 = arith.constant dense<0.000000e+00> : vector<4x8x8xf32>
    %58 = tpu.matmul %55, %49, %cst_19 {dimension_numbers = #tpu.dot_dimension_numbers<[2], [1], [1], [2], [0, 0, 0, 1, 1, 2], [0], [0]>} : vector<4x8x8xf32>, vector<4x8x8xf32>, vector<4x8x8xf32> -> vector<4x8x8xf32>
    "tpu.trace_stop"() : () -> ()
    %59 = vector.broadcast %57 : vector<4x8x1xf32> to vector<4x8x8xf32>
    %60 = arith.divf %58, %59 : vector<4x8x8xf32>
    %61 = vector.shape_cast %60 : vector<4x8x8xf32> to vector<32x8xf32>
    %62 = vector.extract_strided_slice %7 {offsets = [8, 0], sizes = [8, 32], strides = [1, 1]} : vector<32x32xf32> to vector<8x32xf32>
    %cst_20 = arith.constant dense<0.000000e+00> : vector<32x32xf32>
    %63 = tpu.matmul %61, %62, %cst_20 {dimension_numbers = #tpu.dot_dimension_numbers<[1], [0], [0], [1], [0, 0, 1, 1], [], []>} : vector<32x8xf32>, vector<8x32xf32>, vector<32x32xf32> -> vector<32x32xf32>
    %64 = arith.addf %43, %63 : vector<32x32xf32>
    %65 = vector.extract_strided_slice %16 {offsets = [0, 16], sizes = [32, 8], strides = [1, 1]} : vector<32x32xf32> to vector<32x8xf32>
    %66 = vector.shape_cast %65 : vector<32x8xf32> to vector<4x8x8xf32>
    %67 = vector.extract_strided_slice %20 {offsets = [0, 16], sizes = [32, 8], strides = [1, 1]} : vector<32x32xf32> to vector<32x8xf32>
    %68 = vector.shape_cast %67 : vector<32x8xf32> to vector<4x8x8xf32>
    %69 = vector.extract_strided_slice %21 {offsets = [0, 16], sizes = [32, 8], strides = [1, 1]} : vector<32x32xf32> to vector<32x8xf32>
    %70 = vector.shape_cast %69 : vector<32x8xf32> to vector<4x8x8xf32>
    "tpu.trace_start"() <{level = 10 : i32, message = "bqd,bkd->bqk"}> : () -> ()
    %cst_21 = arith.constant dense<0.000000e+00> : vector<4x8x8xf32>
    %71 = tpu.matmul %66, %68, %cst_21 {dimension_numbers = #tpu.dot_dimension_numbers<[2], [2], [1], [1], [0, 0, 0, 1, 1, 1], [0], [0]>} : vector<4x8x8xf32>, vector<4x8x8xf32>, vector<4x8x8xf32> -> vector<4x8x8xf32>
    "tpu.trace_stop"() : () -> ()
    %cst_22 = arith.constant dense<0xFF800000> : vector<4x8xf32>
    %72 = vector.multi_reduction <maximumf>, %71, %cst_22 [2] : vector<4x8x8xf32> to vector<4x8xf32>
    %73 = vector.shape_cast %72 : vector<4x8xf32> to vector<4x8x1xf32>
    %74 = vector.broadcast %73 : vector<4x8x1xf32> to vector<4x8x8xf32>
    %75 = arith.subf %71, %74 : vector<4x8x8xf32>
    %76 = math.exp %75 : vector<4x8x8xf32>
    %cst_23 = arith.constant dense<0.000000e+00> : vector<4x8xf32>
    %77 = vector.multi_reduction <add>, %76, %cst_23 [2] : vector<4x8x8xf32> to vector<4x8xf32>
    %78 = vector.shape_cast %77 : vector<4x8xf32> to vector<4x8x1xf32>
    "tpu.trace_start"() <{level = 10 : i32, message = "bqk,bkd->bqd"}> : () -> ()
    %cst_24 = arith.constant dense<0.000000e+00> : vector<4x8x8xf32>
    %79 = tpu.matmul %76, %70, %cst_24 {dimension_numbers = #tpu.dot_dimension_numbers<[2], [1], [1], [2], [0, 0, 0, 1, 1, 2], [0], [0]>} : vector<4x8x8xf32>, vector<4x8x8xf32>, vector<4x8x8xf32> -> vector<4x8x8xf32>
    "tpu.trace_stop"() : () -> ()
    %80 = vector.broadcast %78 : vector<4x8x1xf32> to vector<4x8x8xf32>
    %81 = arith.divf %79, %80 : vector<4x8x8xf32>
    %82 = vector.shape_cast %81 : vector<4x8x8xf32> to vector<32x8xf32>
    %83 = vector.extract_strided_slice %7 {offsets = [16, 0], sizes = [8, 32], strides = [1, 1]} : vector<32x32xf32> to vector<8x32xf32>
    %cst_25 = arith.constant dense<0.000000e+00> : vector<32x32xf32>
    %84 = tpu.matmul %82, %83, %cst_25 {dimension_numbers = #tpu.dot_dimension_numbers<[1], [0], [0], [1], [0, 0, 1, 1], [], []>} : vector<32x8xf32>, vector<8x32xf32>, vector<32x32xf32> -> vector<32x32xf32>
    %85 = arith.addf %64, %84 : vector<32x32xf32>
    %86 = vector.extract_strided_slice %16 {offsets = [0, 24], sizes = [32, 8], strides = [1, 1]} : vector<32x32xf32> to vector<32x8xf32>
    %87 = vector.shape_cast %86 : vector<32x8xf32> to vector<4x8x8xf32>
    %88 = vector.extract_strided_slice %20 {offsets = [0, 24], sizes = [32, 8], strides = [1, 1]} : vector<32x32xf32> to vector<32x8xf32>
    %89 = vector.shape_cast %88 : vector<32x8xf32> to vector<4x8x8xf32>
    %90 = vector.extract_strided_slice %21 {offsets = [0, 24], sizes = [32, 8], strides = [1, 1]} : vector<32x32xf32> to vector<32x8xf32>
    %91 = vector.shape_cast %90 : vector<32x8xf32> to vector<4x8x8xf32>
    "tpu.trace_start"() <{level = 10 : i32, message = "bqd,bkd->bqk"}> : () -> ()
    %cst_26 = arith.constant dense<0.000000e+00> : vector<4x8x8xf32>
    %92 = tpu.matmul %87, %89, %cst_26 {dimension_numbers = #tpu.dot_dimension_numbers<[2], [2], [1], [1], [0, 0, 0, 1, 1, 1], [0], [0]>} : vector<4x8x8xf32>, vector<4x8x8xf32>, vector<4x8x8xf32> -> vector<4x8x8xf32>
    "tpu.trace_stop"() : () -> ()
    %cst_27 = arith.constant dense<0xFF800000> : vector<4x8xf32>
    %93 = vector.multi_reduction <maximumf>, %92, %cst_27 [2] : vector<4x8x8xf32> to vector<4x8xf32>
    %94 = vector.shape_cast %93 : vector<4x8xf32> to vector<4x8x1xf32>
    %95 = vector.broadcast %94 : vector<4x8x1xf32> to vector<4x8x8xf32>
    %96 = arith.subf %92, %95 : vector<4x8x8xf32>
    %97 = math.exp %96 : vector<4x8x8xf32>
    %cst_28 = arith.constant dense<0.000000e+00> : vector<4x8xf32>
    %98 = vector.multi_reduction <add>, %97, %cst_28 [2] : vector<4x8x8xf32> to vector<4x8xf32>
    %99 = vector.shape_cast %98 : vector<4x8xf32> to vector<4x8x1xf32>
    "tpu.trace_start"() <{level = 10 : i32, message = "bqk,bkd->bqd"}> : () -> ()
    %cst_29 = arith.constant dense<0.000000e+00> : vector<4x8x8xf32>
    %100 = tpu.matmul %97, %91, %cst_29 {dimension_numbers = #tpu.dot_dimension_numbers<[2], [1], [1], [2], [0, 0, 0, 1, 1, 2], [0], [0]>} : vector<4x8x8xf32>, vector<4x8x8xf32>, vector<4x8x8xf32> -> vector<4x8x8xf32>
    "tpu.trace_stop"() : () -> ()
    %101 = vector.broadcast %99 : vector<4x8x1xf32> to vector<4x8x8xf32>
    %102 = arith.divf %100, %101 : vector<4x8x8xf32>
    %103 = vector.shape_cast %102 : vector<4x8x8xf32> to vector<32x8xf32>
    %104 = vector.extract_strided_slice %7 {offsets = [24, 0], sizes = [8, 32], strides = [1, 1]} : vector<32x32xf32> to vector<8x32xf32>
    %cst_30 = arith.constant dense<0.000000e+00> : vector<32x32xf32>
    %105 = tpu.matmul %103, %104, %cst_30 {dimension_numbers = #tpu.dot_dimension_numbers<[1], [0], [0], [1], [0, 0, 1, 1], [], []>} : vector<32x8xf32>, vector<8x32xf32>, vector<32x32xf32> -> vector<32x32xf32>
    %106 = arith.addf %85, %105 : vector<32x32xf32>
    %107 = vector.broadcast %10 : vector<1x32xf32> to vector<32x32xf32>
    %108 = arith.addf %106, %107 : vector<32x32xf32>
    %cst_31 = arith.constant dense<0.000000e+00> : vector<32xf32>
    %109 = vector.multi_reduction <add>, %108, %cst_31 [1] : vector<32x32xf32> to vector<32xf32>
    %110 = vector.shape_cast %109 : vector<32xf32> to vector<32x1xf32>
    %cst_32 = arith.constant 3.200000e+01 : f32
    %111 = vector.broadcast %cst_32 : f32 to vector<32x1xf32>
    %112 = arith.divf %110, %111 : vector<32x1xf32>
    %113 = vector.broadcast %112 : vector<32x1xf32> to vector<32x32xf32>
    %114 = arith.subf %108, %113 : vector<32x32xf32>
    %115 = arith.mulf %114, %114 : vector<32x32xf32>
    %cst_33 = arith.constant dense<0.000000e+00> : vector<32xf32>
    %116 = vector.multi_reduction <add>, %115, %cst_33 [1] : vector<32x32xf32> to vector<32xf32>
    %117 = vector.shape_cast %116 : vector<32xf32> to vector<32x1xf32>
    %cst_34 = arith.constant 3.200000e+01 : f32
    %118 = vector.broadcast %cst_34 : f32 to vector<32x1xf32>
    %119 = arith.divf %117, %118 : vector<32x1xf32>
    %cst_35 = arith.constant 9.99999974E-6 : f32
    %120 = vector.broadcast %cst_35 : f32 to vector<32x1xf32>
    %121 = arith.addf %119, %120 : vector<32x1xf32>
    %122 = math.rsqrt %121 : vector<32x1xf32>
    %123 = vector.broadcast %122 : vector<32x1xf32> to vector<32x32xf32>
    %124 = arith.mulf %114, %123 : vector<32x32xf32>
    %125 = vector.broadcast %12 : vector<1x32xf32> to vector<32x32xf32>
    %126 = arith.mulf %124, %125 : vector<32x32xf32>
    %127 = vector.broadcast %13 : vector<1x32xf32> to vector<32x32xf32>
    %128 = arith.addf %126, %127 : vector<32x32xf32>
    %129 = vector.shape_cast %128 : vector<32x32xf32> to vector<4x8x32xf32>
    %c0_36 = arith.constant 0 : index
    %c0_37 = arith.constant 0 : index
    %c0_38 = arith.constant 0 : index
    %130 = vector.load %arg5[%c0_36, %c0_37, %c0_38] : memref<4x8x32xf32, #tpu.memory_space<vmem>>, vector<4x8x32xf32>
    tpu.vector_store %arg5[%c0_36, %c0_37, %c0_38], %129 {strides = array<i32>} : memref<4x8x32xf32, #tpu.memory_space<vmem>>, vector<4x8x32xf32>,
    return
  }
  func.func @transform_0(%arg0: i32) -> (i32, i32, i32) {
    %c0_i32 = arith.constant 0 : i32
    %c0_i32_0 = arith.constant 0 : i32
    %c0_i32_1 = arith.constant 0 : i32
    return %arg0, %c0_i32, %c0_i32_0 : i32, i32, i32
  }
  func.func @transform_1(%arg0: i32) -> (i32, i32, i32) {
    %c0_i32 = arith.constant 0 : i32
    %c0_i32_0 = arith.constant 0 : i32
    %c0_i32_1 = arith.constant 0 : i32
    return %arg0, %c0_i32, %c0_i32_0 : i32, i32, i32
  }
  func.func @transform_2(%arg0: i32) -> (i32, i32) {
    %c0_i32 = arith.constant 0 : i32
    %c0_i32_0 = arith.constant 0 : i32
    %c0_i32_1 = arith.constant 0 : i32
    return %c0_i32, %c0_i32_0 : i32, i32
  }
  func.func @transform_3(%arg0: i32) -> (i32, i32) {
    %c0_i32 = arith.constant 0 : i32
    %c0_i32_0 = arith.constant 0 : i32
    %c0_i32_1 = arith.constant 0 : i32
    return %c0_i32, %c0_i32_0 : i32, i32
  }
  func.func @transform_4(%arg0: i32) -> (i32, i32, i32) {
    %c0_i32 = arith.constant 0 : i32
    %c0_i32_0 = arith.constant 0 : i32
    %c0_i32_1 = arith.constant 0 : i32
    return %arg0, %c0_i32, %c0_i32_0 : i32, i32, i32
  }
}

</mosaic_0001>

<llo_original>
// kernel: tpu_custom_call.1
$region0: #{tpu_custom_call.1}
  #allocation0 [shape = 'u32[]', space=smem, size = 0x4, offset = 0x4, fixed_abs, tag = 'smem constant byte address 0x4 - core index']
  #allocation1 [shape = 'u32[144,128]{1,0:T(1,128)}', space=vmem, size = 0x12000, scoped, tag = 'internal scratch']
  %s0 = inlined_call_operand.hbm [shape: f32[4,8,32], index: 0, kind: input, shape index: {}]
  %s1 = inlined_call_operand.hbm [shape: f32[4,8,32], index: 1, kind: input, shape index: {}]
  %s2 = inlined_call_operand.hbm [shape: f32[32,128], index: 2, kind: input, shape index: {}]
  %s3 = inlined_call_operand.vmem [shape: f32[3,64], index: 3, kind: input, shape index: {}]
  %s4 = inlined_call_operand.hbm [shape: f32[4,8,32], index: 4, kind: output, shape index: {}]
  %s5 = sld [smem:[#allocation0]]
  $region38: #{tpu_custom_call.1} parent=0
    _
  %s7 = ssub.s32 1, %s5
  %s8 = scalar_select 0, %s7, %s5
  $region1: #{tpu_custom_call.1} parent=0
    #allocation2 [shape = 'u8[16384]{0}', space=vmem, size = 0x4000, scoped, tag = 'input window, operand 0, single buffered']
    #allocation3 [shape = 's32[1]{0}', space=sflag, size = 0x4, scoped, tag = 'scoped memory for tpu_custom_call.1']
    #allocation4 [shape = 's32[1]{0}', space=sflag, size = 0x4, scoped, tag = 'scoped memory for tpu_custom_call.1']
    #allocation5 [shape = 'u8[16384]{0}', space=vmem, size = 0x4000, scoped, tag = 'input window, operand 1, single buffered']
    #allocation6 [shape = 's32[1]{0}', space=sflag, size = 0x4, scoped, tag = 'scoped memory for tpu_custom_call.1']
    #allocation7 [shape = 'u8[16384]{0}', space=vmem, size = 0x4000, scoped, tag = 'input window, operand 2, single buffered']
    #allocation8 [shape = 'u8[16384]{0}', space=vmem, size = 0x4000, scoped, tag = 'output window, operand 0, single buffered']
    %9 = vsyncpa [#allocation3], 0
    %10 = vsyncpa [#allocation6], 0
    %11 = vsyncpa [#allocation4], 0
    // Predicated region
    $region2: #{tpu_custom_call.1} parent=1 // pred_check
      _
    $region3: #{tpu_custom_call.1} parent=1 // pred_check_branch
      %13 = sbr.rel (0) target = $region5
    $region4: #{tpu_custom_call.1} parent=1 // pred_region
      %s15 = ssub.s32 512, 512
      %16 = vsyncadd [#allocation3], %s15
      %s17 = sshll.u32 [#allocation2], 4
      %s18 = int_to_ptr.vmem [resolvable:$true] %s17
      %23 = dma.hbm_to_vmem [thread:$0]  %s0, 512, %s18, [#allocation3], 128, 128, 8
    $region5: #{tpu_custom_call.1} parent=1 // pred_fallthru
      _
    // Predicated region
    $region6: #{tpu_custom_call.1} parent=1 // pred_check
      _
    $region7: #{tpu_custom_call.1} parent=1 // pred_check_branch
      %25 = sbr.rel (0) target = $region9
    $region8: #{tpu_custom_call.1} parent=1 // pred_region
      %s27 = ssub.s32 512, 512
      %28 = vsyncadd [#allocation6], %s27
      %s29 = sshll.u32 [#allocation5], 4
      %s30 = int_to_ptr.vmem [resolvable:$true] %s29
      %35 = dma.hbm_to_vmem [thread:$0]  %s1, 512, %s30, [#allocation6], 128, 128, 8
    $region9: #{tpu_custom_call.1} parent=1 // pred_fallthru
      _
    // Predicated region
    $region10: #{tpu_custom_call.1} parent=1 // pred_check
      _
    $region11: #{tpu_custom_call.1} parent=1 // pred_check_branch
      %37 = sbr.rel (0) target = $region13
    $region12: #{tpu_custom_call.1} parent=1 // pred_region
      %s39 = ssub.s32 512, 512
      %40 = vsyncadd [#allocation6], %s39
      %s41 = sshll.u32 [#allocation7], 4
      %s42 = int_to_ptr.vmem [resolvable:$true] %s41
      %47 = dma.hbm_to_vmem [thread:$0]  %s2, 512, %s42, [#allocation6], 128, 128, 8
    $region13: #{tpu_custom_call.1} parent=1 // pred_fallthru
      _
    // Predicated region
    $region14: #{tpu_custom_call.1} parent=1 // pred_check
      _
    $region15: #{tpu_custom_call.1} parent=1 // pred_check_branch
      %49 = sbr.rel (0) target = $region17
    $region16: #{tpu_custom_call.1} parent=1 // pred_region
      _
    $region17: #{tpu_custom_call.1} parent=1 // pred_fallthru
      _
    // Predicated region
    $region18: #{tpu_custom_call.1} parent=1 // pred_check
      _
    $region19: #{tpu_custom_call.1} parent=1 // pred_check_branch
      %51 = sbr.rel (0) target = $region21
    $region20: #{tpu_custom_call.1} parent=1 // pred_region
      %52 = dma.done [#allocation3], 512
    $region21: #{tpu_custom_call.1} parent=1 // pred_fallthru
      _
    // Predicated region
    $region22: #{tpu_custom_call.1} parent=1 // pred_check
      _
    $region23: #{tpu_custom_call.1} parent=1 // pred_check_branch
      %54 = sbr.rel (0) target = $region25
    $region24: #{tpu_custom_call.1} parent=1 // pred_region
      %55 = dma.done [#allocation6], 512
    $region25: #{tpu_custom_call.1} parent=1 // pred_fallthru
      _
    // Predicated region
    $region26: #{tpu_custom_call.1} parent=1 // pred_check
      _
    $region27: #{tpu_custom_call.1} parent=1 // pred_check_branch
      %57 = sbr.rel (0) target = $region29
    $region28: #{tpu_custom_call.1} parent=1 // pred_region
      %58 = dma.done [#allocation6], 512
    $region29: #{tpu_custom_call.1} parent=1 // pred_fallthru
      _
    %v59 = vld [vmem:[#allocation2] sm:$0xff]
    %v60 = vld [vmem:[#allocation2 + $0x8] sm:$0xff]
    %v61 = vld [vmem:[#allocation2 + $0x10] sm:$0xff]
    %v62 = vld [vmem:[#allocation2 + $0x18] sm:$0xff]
    %v63 = vld [vmem:[#allocation5] sm:$0xff]
    %v64 = vld [vmem:[#allocation5 + $0x8] sm:$0xff]
    %v65 = vld [vmem:[#allocation5 + $0x10] sm:$0xff]
    %v66 = vld [vmem:[#allocation5 + $0x18] sm:$0xff]
    %v67 = vld [vmem:[#allocation7] sm:$0xff]
    %v68 = vld [vmem:[#allocation7 + $0x8] sm:$0xff]
    %v69 = vld [vmem:[#allocation7 + $0x10] sm:$0xff]
    %v70 = vld [vmem:[#allocation7 + $0x18] sm:$0xff]
    %v71 = vld [vmem:[%s3] sm:$0x7]
    %v72 = vlaneseq
    %v73 = vshrl.u32 %v72, 7
    %v74 = vsub.s32 0, %v73
    %v75 = vrot.slane %v71, %v74
    %vm76 = vcmask 261120
    %v78 = vsel %vm76, %v59, 0
    %v81 = vsel %vm76, %v60, 0
    %v84 = vsel %vm76, %v61, 0
    %v87 = vsel %vm76, %v62, 0
    %89 = vmatprep.subr.mxu0 0.0
    %90 = vmatpush1.msra.mxu0 0.0
    %91 = vmatprep.subr.mxu0 0.0
    %92 = vmatpush1.msra.mxu0 0.0
    %93 = vmatprep.subr.mxu0 0.0
    %94 = vmatpush1.msra.mxu0 0.0
    %95 = vmatprep.subr.mxu0 0.0
    %96 = vmatpush1.msra.mxu0 0.0
    %97 = vmatprep.subr.mxu0 0.0
    %98 = vmatpush1.msra.mxu0 0.0
    %99 = vmatprep.subr.mxu0 0.0
    %100 = vmatpush1.msra.mxu0 0.0
    %101 = vmatprep.subr.mxu0 0.0
    %102 = vmatpush1.msra.mxu0 0.0
    %103 = vmatprep.subr.mxu0 0.0
    %104 = vmatpush1.msra.mxu0 0.0
    %105 = vmatprep.subr.mxu0 0.0
    %106 = vmatpush1.msra.mxu0 0.0
    %107 = vmatprep.subr.mxu0 0.0
    %108 = vmatpush1.msra.mxu0 0.0
    %109 = vmatprep.subr.mxu0 0.0
    %110 = vmatpush1.msra.mxu0 0.0
    %111 = vmatprep.subr.mxu0 0.0
    %112 = vmatpush1.msra.mxu0 0.0
    %113 = vmatprep.subr.mxu0 0.0
    %114 = vmatpush1.msra.mxu0 %v70
    %115 = vmatprep.subr.mxu0 0.0
    %116 = vmatpush1.msra.mxu0 %v69
    %117 = vmatprep.subr.mxu0 0.0
    %118 = vmatpush1.msra.mxu0 %v68
    %119 = vmatprep.subr.mxu0 0.0
    %120 = vmatpush1.msra.mxu0 %v67
    %121 = vmatprep.subr.mxu0 0.0
    %122 = vmatpush2.msra.mxu0 0.0
    %123 = vmatprep.subr.mxu0 0.0
    %124 = vmatpush2.msra.mxu0 0.0
    %125 = vmatprep.subr.mxu0 0.0
    %126 = vmatpush2.msra.mxu0 0.0
    %127 = vmatprep.subr.mxu0 0.0
    %128 = vmatpush2.msra.mxu0 0.0
    %129 = vmatprep.subr.mxu0 0.0
    %130 = vmatpush2.msra.mxu0 0.0
    %131 = vmatprep.subr.mxu0 0.0
    %132 = vmatpush2.msra.mxu0 0.0
    %133 = vmatprep.subr.mxu0 0.0
    %134 = vmatpush2.msra.mxu0 0.0
    %135 = vmatprep.subr.mxu0 0.0
    %136 = vmatpush2.msra.mxu0 0.0
    %137 = vmatprep.subr.mxu0 0.0
    %138 = vmatpush2.msra.mxu0 0.0
    %139 = vmatprep.subr.mxu0 0.0
    %140 = vmatpush2.msra.mxu0 0.0
    %141 = vmatprep.subr.mxu0 0.0
    %142 = vmatpush2.msra.mxu0 0.0
    %143 = vmatprep.subr.mxu0 0.0
    %144 = vmatpush2.msra.mxu0 0.0
    %145 = vmatprep.subr.mxu0 0.0
    %146 = vmatpush2.msra.mxu0 0.0
    %147 = vmatprep.subr.mxu0 0.0
    %148 = vmatpush2.msra.mxu0 0.0
    %149 = vmatprep.subr.mxu0 0.0
    %150 = vmatpush2.msra.mxu0 0.0
    %151 = vmatprep.subr.mxu0 0.0
    %152 = vmatpush2.msra.mxu0 0.0
    %153 = vmatprep.mubr.f32.mxu0 0.0
    %154 = vmatmul.mubr.f32.gmra.mxu0 %v78
    %v155 = vpop.f32.mrf.mxu0
    %v156 = vadd.f32 %v75, %v155
    %v157 = vpop.f32.mrf.mxu0
    %158 = vmatprep.mubr.f32.mxu0 0.0
    %159 = vmatmul.mubr.f32.gmra.mxu0 %v81
    %v160 = vpop.f32.mrf.mxu0
    %v161 = vadd.f32 %v75, %v160
    %v162 = vpop.f32.mrf.mxu0
    %163 = vmatprep.mubr.f32.mxu0 0.0
    %164 = vmatmul.mubr.f32.gmra.mxu0 %v84
    %v165 = vpop.f32.mrf.mxu0
    %v166 = vadd.f32 %v75, %v165
    %v167 = vpop.f32.mrf.mxu0
    %168 = vmatprep.mubr.f32.mxu0 0.0
    %169 = vmatmul.mubr.f32.gmra.mxu0 %v87
    %v170 = vpop.f32.mrf.mxu0
    %v171 = vadd.f32 %v75, %v170
    %v172 = vpop.f32.mrf.mxu0
    %173 = vdwg.mxu0
    %v174 = vlaneseq
    %v175 = vshrl.u32 %v174, 7
    %v176 = vsub.s32 1, %v175
    %v177 = vrot.slane %v71, %v176
    %182 = vrot.lane.b32.xlu0 %v67, 96
    %v183 = vpop.permute.xlu0 %182
    %184 = vrot.lane.b32.xlu0 %v68, 96
    %v185 = vpop.permute.xlu0 %184
    %186 = vrot.lane.b32.xlu0 %v69, 96
    %v187 = vpop.permute.xlu0 %186
    %188 = vrot.lane.b32.xlu0 %v70, 96
    %v189 = vpop.permute.xlu0 %188
    %v195 = vsel %vm76, %v63, 0
    %v198 = vsel %vm76, %v64, 0
    %v201 = vsel %vm76, %v65, 0
    %v204 = vsel %vm76, %v66, 0
    %206 = vmatprep.subr.mxu0 0.0
    %207 = vmatpush1.msra.mxu0 0.0
    %208 = vmatprep.subr.mxu0 0.0
    %209 = vmatpush1.msra.mxu0 0.0
    %210 = vmatprep.subr.mxu0 0.0
    %211 = vmatpush1.msra.mxu0 0.0
    %212 = vmatprep.subr.mxu0 0.0
    %213 = vmatpush1.msra.mxu0 0.0
    %214 = vmatprep.subr.mxu0 0.0
    %215 = vmatpush1.msra.mxu0 0.0
    %216 = vmatprep.subr.mxu0 0.0
    %217 = vmatpush1.msra.mxu0 0.0
    %218 = vmatprep.subr.mxu0 0.0
    %219 = vmatpush1.msra.mxu0 0.0
    %220 = vmatprep.subr.mxu0 0.0
    %221 = vmatpush1.msra.mxu0 0.0
    %222 = vmatprep.subr.mxu0 0.0
    %223 = vmatpush1.msra.mxu0 0.0
    %224 = vmatprep.subr.mxu0 0.0
    %225 = vmatpush1.msra.mxu0 0.0
    %226 = vmatprep.subr.mxu0 0.0
    %227 = vmatpush1.msra.mxu0 0.0
    %228 = vmatprep.subr.mxu0 0.0
    %229 = vmatpush1.msra.mxu0 0.0
    %230 = vmatprep.subr.mxu0 0.0
    %231 = vmatpush1.msra.mxu0 %v189
    %232 = vmatprep.subr.mxu0 0.0
    %233 = vmatpush1.msra.mxu0 %v187
    %234 = vmatprep.subr.mxu0 0.0
    %235 = vmatpush1.msra.mxu0 %v185
    %236 = vmatprep.subr.mxu0 0.0
    %237 = vmatpush1.msra.mxu0 %v183
    %238 = vmatprep.subr.mxu0 0.0
    %239 = vmatpush2.msra.mxu0 0.0
    %240 = vmatprep.subr.mxu0 0.0
    %241 = vmatpush2.msra.mxu0 0.0
    %242 = vmatprep.subr.mxu0 0.0
    %243 = vmatpush2.msra.mxu0 0.0
    %244 = vmatprep.subr.mxu0 0.0
    %245 = vmatpush2.msra.mxu0 0.0
    %246 = vmatprep.subr.mxu0 0.0
    %247 = vmatpush2.msra.mxu0 0.0
    %248 = vmatprep.subr.mxu0 0.0
    %249 = vmatpush2.msra.mxu0 0.0
    %250 = vmatprep.subr.mxu0 0.0
    %251 = vmatpush2.msra.mxu0 0.0
    %252 = vmatprep.subr.mxu0 0.0
    %253 = vmatpush2.msra.mxu0 0.0
    %254 = vmatprep.subr.mxu0 0.0
    %255 = vmatpush2.msra.mxu0 0.0
    %256 = vmatprep.subr.mxu0 0.0
    %257 = vmatpush2.msra.mxu0 0.0
    %258 = vmatprep.subr.mxu0 0.0
    %259 = vmatpush2.msra.mxu0 0.0
    %260 = vmatprep.subr.mxu0 0.0
    %261 = vmatpush2.msra.mxu0 0.0
    %262 = vmatprep.subr.mxu0 0.0
    %263 = vmatpush2.msra.mxu0 0.0
    %264 = vmatprep.subr.mxu0 0.0
    %265 = vmatpush2.msra.mxu0 0.0
    %266 = vmatprep.subr.mxu0 0.0
    %267 = vmatpush2.msra.mxu0 0.0
    %268 = vmatprep.subr.mxu0 0.0
    %269 = vmatpush2.msra.mxu0 0.0
    %270 = vmatprep.mubr.f32.mxu0 0.0
    %271 = vmatmul.mubr.f32.gmra.mxu0 %v195
    %v272 = vpop.f32.mrf.mxu0
    %v273 = vadd.f32 %v177, %v272
    %v274 = vpop.f32.mrf.mxu0
    %275 = vmatprep.mubr.f32.mxu0 0.0
    %276 = vmatmul.mubr.f32.gmra.mxu0 %v198
    %v277 = vpop.f32.mrf.mxu0
    %v278 = vadd.f32 %v177, %v277
    %v279 = vpop.f32.mrf.mxu0
    %280 = vmatprep.mubr.f32.mxu0 0.0
    %281 = vmatmul.mubr.f32.gmra.mxu0 %v201
    %v282 = vpop.f32.mrf.mxu0
    %v283 = vadd.f32 %v177, %v282
    %v284 = vpop.f32.mrf.mxu0
    %285 = vmatprep.mubr.f32.mxu0 0.0
    %286 = vmatmul.mubr.f32.gmra.mxu0 %v204
    %v287 = vpop.f32.mrf.mxu0
    %v288 = vadd.f32 %v177, %v287
    %v289 = vpop.f32.mrf.mxu0
    %290 = vdwg.mxu0
    %vm291 = vcmask 64512
    %v293 = vsel %vm291, %v156, 0
    %v296 = vsel %vm291, %v273, 0
    %298 = vmatprep.subr.mxu0 0.0
    %299 = vmatpush1.xpose.msra.mxu0 0.0
    %300 = vmatprep.subr.mxu0 0.0
    %301 = vmatpush1.xpose.msra.mxu0 0.0
    %302 = vmatprep.subr.mxu0 0.0
    %303 = vmatpush1.xpose.msra.mxu0 0.0
    %304 = vmatprep.subr.mxu0 0.0
    %305 = vmatpush1.xpose.msra.mxu0 0.0
    %306 = vmatprep.subr.mxu0 0.0
    %307 = vmatpush1.xpose.msra.mxu0 0.0
    %308 = vmatprep.subr.mxu0 0.0
    %309 = vmatpush1.xpose.msra.mxu0 0.0
    %310 = vmatprep.subr.mxu0 0.0
    %311 = vmatpush1.xpose.msra.mxu0 0.0
    %312 = vmatprep.subr.mxu0 0.0
    %313 = vmatpush1.xpose.msra.mxu0 0.0
    %314 = vmatprep.subr.mxu0 0.0
    %315 = vmatpush1.xpose.msra.mxu0 0.0
    %316 = vmatprep.subr.mxu0 0.0
    %317 = vmatpush1.xpose.msra.mxu0 0.0
    %318 = vmatprep.subr.mxu0 0.0
    %319 = vmatpush1.xpose.msra.mxu0 0.0
    %320 = vmatprep.subr.mxu0 0.0
    %321 = vmatpush1.xpose.msra.mxu0 0.0
    %322 = vmatprep.subr.mxu0 0.0
    %323 = vmatpush1.xpose.msra.mxu0 0.0
    %324 = vmatprep.subr.mxu0 0.0
    %325 = vmatpush1.xpose.msra.mxu0 0.0
    %326 = vmatprep.subr.mxu0 0.0
    %327 = vmatpush1.xpose.msra.mxu0 0.0
    %328 = vmatprep.subr.mxu0 0.0
    %329 = vmatpush1.xpose.msra.mxu0 %v296
    %330 = vmatprep.subr.mxu0 0.0
    %331 = vmatpush2.xpose.msra.mxu0 0.0
    %332 = vmatprep.subr.mxu0 0.0
    %333 = vmatpush2.xpose.msra.mxu0 0.0
    %334 = vmatprep.subr.mxu0 0.0
    %335 = vmatpush2.xpose.msra.mxu0 0.0
    %336 = vmatprep.subr.mxu0 0.0
    %337 = vmatpush2.xpose.msra.mxu0 0.0
    %338 = vmatprep.subr.mxu0 0.0
    %339 = vmatpush2.xpose.msra.mxu0 0.0
    %340 = vmatprep.subr.mxu0 0.0
    %341 = vmatpush2.xpose.msra.mxu0 0.0
    %342 = vmatprep.subr.mxu0 0.0
    %343 = vmatpush2.xpose.msra.mxu0 0.0
    %344 = vmatprep.subr.mxu0 0.0
    %345 = vmatpush2.xpose.msra.mxu0 0.0
    %346 = vmatprep.subr.mxu0 0.0
    %347 = vmatpush2.xpose.msra.mxu0 0.0
    %348 = vmatprep.subr.mxu0 0.0
    %349 = vmatpush2.xpose.msra.mxu0 0.0
    %350 = vmatprep.subr.mxu0 0.0
    %351 = vmatpush2.xpose.msra.mxu0 0.0
    %352 = vmatprep.subr.mxu0 0.0
    %353 = vmatpush2.xpose.msra.mxu0 0.0
    %354 = vmatprep.subr.mxu0 0.0
    %355 = vmatpush2.xpose.msra.mxu0 0.0
    %356 = vmatprep.subr.mxu0 0.0
    %357 = vmatpush2.xpose.msra.mxu0 0.0
    %358 = vmatprep.subr.mxu0 0.0
    %359 = vmatpush2.xpose.msra.mxu0 0.0
    %360 = vmatprep.subr.mxu0 0.0
    %361 = vmatpush2.xpose.msra.mxu0 0.0
    %362 = vmatprep.mubr.f32.mxu0 0.0
    %363 = vmatmul.mubr.f32.gmra.mxu0 %v293
    %v364 = vpop.f32.mrf.mxu0
    %v365 = vadd.f32 0.0, %v364
    %v366 = vpop.f32.mrf.mxu0
    %367 = vdwg.mxu0
    %v369 = vsel %vm291, %v161, 0
    %v372 = vsel %vm291, %v278, 0
    %374 = vmatprep.subr.mxu0 0.0
    %375 = vmatpush1.xpose.msra.mxu0 0.0
    %376 = vmatprep.subr.mxu0 0.0
    %377 = vmatpush1.xpose.msra.mxu0 0.0
    %378 = vmatprep.subr.mxu0 0.0
    %379 = vmatpush1.xpose.msra.mxu0 0.0
    %380 = vmatprep.subr.mxu0 0.0
    %381 = vmatpush1.xpose.msra.mxu0 0.0
    %382 = vmatprep.subr.mxu0 0.0
    %383 = vmatpush1.xpose.msra.mxu0 0.0
    %384 = vmatprep.subr.mxu0 0.0
    %385 = vmatpush1.xpose.msra.mxu0 0.0
    %386 = vmatprep.subr.mxu0 0.0
    %387 = vmatpush1.xpose.msra.mxu0 0.0
    %388 = vmatprep.subr.mxu0 0.0
    %389 = vmatpush1.xpose.msra.mxu0 0.0
    %390 = vmatprep.subr.mxu0 0.0
    %391 = vmatpush1.xpose.msra.mxu0 0.0
    %392 = vmatprep.subr.mxu0 0.0
    %393 = vmatpush1.xpose.msra.mxu0 0.0
    %394 = vmatprep.subr.mxu0 0.0
    %395 = vmatpush1.xpose.msra.mxu0 0.0
    %396 = vmatprep.subr.mxu0 0.0
    %397 = vmatpush1.xpose.msra.mxu0 0.0
    %398 = vmatprep.subr.mxu0 0.0
    %399 = vmatpush1.xpose.msra.mxu0 0.0
    %400 = vmatprep.subr.mxu0 0.0
    %401 = vmatpush1.xpose.msra.mxu0 0.0
    %402 = vmatprep.subr.mxu0 0.0
    %403 = vmatpush1.xpose.msra.mxu0 0.0
    %404 = vmatprep.subr.mxu0 0.0
    %405 = vmatpush1.xpose.msra.mxu0 %v372
    %406 = vmatprep.subr.mxu0 0.0
    %407 = vmatpush2.xpose.msra.mxu0 0.0
    %408 = vmatprep.subr.mxu0 0.0
    %409 = vmatpush2.xpose.msra.mxu0 0.0
    %410 = vmatprep.subr.mxu0 0.0
    %411 = vmatpush2.xpose.msra.mxu0 0.0
    %412 = vmatprep.subr.mxu0 0.0
    %413 = vmatpush2.xpose.msra.mxu0 0.0
    %414 = vmatprep.subr.mxu0 0.0
    %415 = vmatpush2.xpose.msra.mxu0 0.0
    %416 = vmatprep.subr.mxu0 0.0
    %417 = vmatpush2.xpose.msra.mxu0 0.0
    %418 = vmatprep.subr.mxu0 0.0
    %419 = vmatpush2.xpose.msra.mxu0 0.0
    %420 = vmatprep.subr.mxu0 0.0
    %421 = vmatpush2.xpose.msra.mxu0 0.0
    %422 = vmatprep.subr.mxu0 0.0
    %423 = vmatpush2.xpose.msra.mxu0 0.0
    %424 = vmatprep.subr.mxu0 0.0
    %425 = vmatpush2.xpose.msra.mxu0 0.0
    %426 = vmatprep.subr.mxu0 0.0
    %427 = vmatpush2.xpose.msra.mxu0 0.0
    %428 = vmatprep.subr.mxu0 0.0
    %429 = vmatpush2.xpose.msra.mxu0 0.0
    %430 = vmatprep.subr.mxu0 0.0
    %431 = vmatpush2.xpose.msra.mxu0 0.0
    %432 = vmatprep.subr.mxu0 0.0
    %433 = vmatpush2.xpose.msra.mxu0 0.0
    %434 = vmatprep.subr.mxu0 0.0
    %435 = vmatpush2.xpose.msra.mxu0 0.0
    %436 = vmatprep.subr.mxu0 0.0
    %437 = vmatpush2.xpose.msra.mxu0 0.0
    %438 = vmatprep.mubr.f32.mxu0 0.0
    %439 = vmatmul.mubr.f32.gmra.mxu0 %v369
    %v440 = vpop.f32.mrf.mxu0
    %v441 = vadd.f32 0.0, %v440
    %v442 = vpop.f32.mrf.mxu0
    %443 = vdwg.mxu0
    %v445 = vsel %vm291, %v166, 0
    %v448 = vsel %vm291, %v283, 0
    %450 = vmatprep.subr.mxu0 0.0
    %451 = vmatpush1.xpose.msra.mxu0 0.0
    %452 = vmatprep.subr.mxu0 0.0
    %453 = vmatpush1.xpose.msra.mxu0 0.0
    %454 = vmatprep.subr.mxu0 0.0
    %455 = vmatpush1.xpose.msra.mxu0 0.0
    %456 = vmatprep.subr.mxu0 0.0
    %457 = vmatpush1.xpose.msra.mxu0 0.0
    %458 = vmatprep.subr.mxu0 0.0
    %459 = vmatpush1.xpose.msra.mxu0 0.0
    %460 = vmatprep.subr.mxu0 0.0
    %461 = vmatpush1.xpose.msra.mxu0 0.0
    %462 = vmatprep.subr.mxu0 0.0
    %463 = vmatpush1.xpose.msra.mxu0 0.0
    %464 = vmatprep.subr.mxu0 0.0
    %465 = vmatpush1.xpose.msra.mxu0 0.0
    %466 = vmatprep.subr.mxu0 0.0
    %467 = vmatpush1.xpose.msra.mxu0 0.0
    %468 = vmatprep.subr.mxu0 0.0
    %469 = vmatpush1.xpose.msra.mxu0 0.0
    %470 = vmatprep.subr.mxu0 0.0
    %471 = vmatpush1.xpose.msra.mxu0 0.0
    %472 = vmatprep.subr.mxu0 0.0
    %473 = vmatpush1.xpose.msra.mxu0 0.0
    %474 = vmatprep.subr.mxu0 0.0
    %475 = vmatpush1.xpose.msra.mxu0 0.0
    %476 = vmatprep.subr.mxu0 0.0
    %477 = vmatpush1.xpose.msra.mxu0 0.0
    %478 = vmatprep.subr.mxu0 0.0
    %479 = vmatpush1.xpose.msra.mxu0 0.0
    %480 = vmatprep.subr.mxu0 0.0
    %481 = vmatpush1.xpose.msra.mxu0 %v448
    %482 = vmatprep.subr.mxu0 0.0
    %483 = vmatpush2.xpose.msra.mxu0 0.0
    %484 = vmatprep.subr.mxu0 0.0
    %485 = vmatpush2.xpose.msra.mxu0 0.0
    %486 = vmatprep.subr.mxu0 0.0
    %487 = vmatpush2.xpose.msra.mxu0 0.0
    %488 = vmatprep.subr.mxu0 0.0
    %489 = vmatpush2.xpose.msra.mxu0 0.0
    %490 = vmatprep.subr.mxu0 0.0
    %491 = vmatpush2.xpose.msra.mxu0 0.0
    %492 = vmatprep.subr.mxu0 0.0
    %493 = vmatpush2.xpose.msra.mxu0 0.0
    %494 = vmatprep.subr.mxu0 0.0
    %495 = vmatpush2.xpose.msra.mxu0 0.0
    %496 = vmatprep.subr.mxu0 0.0
    %497 = vmatpush2.xpose.msra.mxu0 0.0
    %498 = vmatprep.subr.mxu0 0.0
    %499 = vmatpush2.xpose.msra.mxu0 0.0
    %500 = vmatprep.subr.mxu0 0.0
    %501 = vmatpush2.xpose.msra.mxu0 0.0
    %502 = vmatprep.subr.mxu0 0.0
    %503 = vmatpush2.xpose.msra.mxu0 0.0
    %504 = vmatprep.subr.mxu0 0.0
    %505 = vmatpush2.xpose.msra.mxu0 0.0
    %506 = vmatprep.subr.mxu0 0.0
    %507 = vmatpush2.xpose.msra.mxu0 0.0
    %508 = vmatprep.subr.mxu0 0.0
    %509 = vmatpush2.xpose.msra.mxu0 0.0
    %510 = vmatprep.subr.mxu0 0.0
    %511 = vmatpush2.xpose.msra.mxu0 0.0
    %512 = vmatprep.subr.mxu0 0.0
    %513 = vmatpush2.xpose.msra.mxu0 0.0
    %514 = vmatprep.mubr.f32.mxu0 0.0
    %515 = vmatmul.mubr.f32.gmra.mxu0 %v445
    %v516 = vpop.f32.mrf.mxu0
    %v517 = vadd.f32 0.0, %v516
    %v518 = vpop.f32.mrf.mxu0
    %519 = vdwg.mxu0
    %v521 = vsel %vm291, %v171, 0
    %v524 = vsel %vm291, %v288, 0
    %526 = vmatprep.subr.mxu0 0.0
    %527 = vmatpush1.xpose.msra.mxu0 0.0
    %528 = vmatprep.subr.mxu0 0.0
    %529 = vmatpush1.xpose.msra.mxu0 0.0
    %530 = vmatprep.subr.mxu0 0.0
    %531 = vmatpush1.xpose.msra.mxu0 0.0
    %532 = vmatprep.subr.mxu0 0.0
    %533 = vmatpush1.xpose.msra.mxu0 0.0
    %534 = vmatprep.subr.mxu0 0.0
    %535 = vmatpush1.xpose.msra.mxu0 0.0
    %536 = vmatprep.subr.mxu0 0.0
    %537 = vmatpush1.xpose.msra.mxu0 0.0
    %538 = vmatprep.subr.mxu0 0.0
    %539 = vmatpush1.xpose.msra.mxu0 0.0
    %540 = vmatprep.subr.mxu0 0.0
    %541 = vmatpush1.xpose.msra.mxu0 0.0
    %542 = vmatprep.subr.mxu0 0.0
    %543 = vmatpush1.xpose.msra.mxu0 0.0
    %544 = vmatprep.subr.mxu0 0.0
    %545 = vmatpush1.xpose.msra.mxu0 0.0
    %546 = vmatprep.subr.mxu0 0.0
    %547 = vmatpush1.xpose.msra.mxu0 0.0
    %548 = vmatprep.subr.mxu0 0.0
    %549 = vmatpush1.xpose.msra.mxu0 0.0
    %550 = vmatprep.subr.mxu0 0.0
    %551 = vmatpush1.xpose.msra.mxu0 0.0
    %552 = vmatprep.subr.mxu0 0.0
    %553 = vmatpush1.xpose.msra.mxu0 0.0
    %554 = vmatprep.subr.mxu0 0.0
    %555 = vmatpush1.xpose.msra.mxu0 0.0
    %556 = vmatprep.subr.mxu0 0.0
    %557 = vmatpush1.xpose.msra.mxu0 %v524
    %558 = vmatprep.subr.mxu0 0.0
    %559 = vmatpush2.xpose.msra.mxu0 0.0
    %560 = vmatprep.subr.mxu0 0.0
    %561 = vmatpush2.xpose.msra.mxu0 0.0
    %562 = vmatprep.subr.mxu0 0.0
    %563 = vmatpush2.xpose.msra.mxu0 0.0
    %564 = vmatprep.subr.mxu0 0.0
    %565 = vmatpush2.xpose.msra.mxu0 0.0
    %566 = vmatprep.subr.mxu0 0.0
    %567 = vmatpush2.xpose.msra.mxu0 0.0
    %568 = vmatprep.subr.mxu0 0.0
    %569 = vmatpush2.xpose.msra.mxu0 0.0
    %570 = vmatprep.subr.mxu0 0.0
    %571 = vmatpush2.xpose.msra.mxu0 0.0
    %572 = vmatprep.subr.mxu0 0.0
    %573 = vmatpush2.xpose.msra.mxu0 0.0
    %574 = vmatprep.subr.mxu0 0.0
    %575 = vmatpush2.xpose.msra.mxu0 0.0
    %576 = vmatprep.subr.mxu0 0.0
    %577 = vmatpush2.xpose.msra.mxu0 0.0
    %578 = vmatprep.subr.mxu0 0.0
    %579 = vmatpush2.xpose.msra.mxu0 0.0
    %580 = vmatprep.subr.mxu0 0.0
    %581 = vmatpush2.xpose.msra.mxu0 0.0
    %582 = vmatprep.subr.mxu0 0.0
    %583 = vmatpush2.xpose.msra.mxu0 0.0
    %584 = vmatprep.subr.mxu0 0.0
    %585 = vmatpush2.xpose.msra.mxu0 0.0
    %586 = vmatprep.subr.mxu0 0.0
    %587 = vmatpush2.xpose.msra.mxu0 0.0
    %588 = vmatprep.subr.mxu0 0.0
    %589 = vmatpush2.xpose.msra.mxu0 0.0
    %590 = vmatprep.mubr.f32.mxu0 0.0
    %591 = vmatmul.mubr.f32.gmra.mxu0 %v521
    %v592 = vpop.f32.mrf.mxu0
    %v593 = vadd.f32 0.0, %v592
    %v594 = vpop.f32.mrf.mxu0
    %595 = vdwg.mxu0
    %v596 = vsel %vm291, %v365, -inf
    %597 = vmax.xlane.f32.xlu0 %v596
    %v598 = vpop.xlane.xlu0 %597
    %v599 = vsel %vm291, %v441, -inf
    %600 = vmax.xlane.f32.xlu0 %v599
    %v601 = vpop.xlane.xlu0 %600
    %v602 = vsel %vm291, %v517, -inf
    %603 = vmax.xlane.f32.xlu0 %v602
    %v604 = vpop.xlane.xlu0 %603
    %v605 = vsel %vm291, %v593, -inf
    %606 = vmax.xlane.f32.xlu0 %v605
    %v607 = vpop.xlane.xlu0 %606
    %v608 = vsub.f32 %v365, %v598
    %v609 = vsub.f32 %v441, %v601
    %v610 = vsub.f32 %v517, %v604
    %v611 = vsub.f32 %v593, %v607
    %v612 = vmul.f32 %v608, 1.442695
    %v613 = vpow.pop %v612
    %v614 = vmul.f32 %v609, 1.442695
    %v615 = vpow.pop %v614
    %v616 = vmul.f32 %v610, 1.442695
    %v617 = vpow.pop %v616
    %v618 = vmul.f32 %v611, 1.442695
    %v619 = vpow.pop %v618
    %v620 = vsel %vm291, %v613, 0.0
    %621 = vadd.xlane.f32.xlu0 %v620
    %v622 = vpop.xlane.xlu0 %621
    %v623 = vsel %vm291, %v615, 0.0
    %624 = vadd.xlane.f32.xlu0 %v623
    %v625 = vpop.xlane.xlu0 %624
    %v626 = vsel %vm291, %v617, 0.0
    %627 = vadd.xlane.f32.xlu0 %v626
    %v628 = vpop.xlane.xlu0 %627
    %v629 = vsel %vm291, %v619, 0.0
    %630 = vadd.xlane.f32.xlu0 %v629
    %v631 = vpop.xlane.xlu0 %630
    %632 = vrot.lane.b32.xlu0 %v273, 96
    %v633 = vpop.permute.xlu0 %632
    %v636 = vsel %vm291, %v613, 0
    %638 = vmatprep.subr.mxu0 0.0
    %639 = vmatpush1.msra.mxu0 0.0
    %640 = vmatprep.subr.mxu0 0.0
    %641 = vmatpush1.msra.mxu0 0.0
    %642 = vmatprep.subr.mxu0 0.0
    %643 = vmatpush1.msra.mxu0 0.0
    %644 = vmatprep.subr.mxu0 0.0
    %645 = vmatpush1.msra.mxu0 0.0
    %646 = vmatprep.subr.mxu0 0.0
    %647 = vmatpush1.msra.mxu0 0.0
    %648 = vmatprep.subr.mxu0 0.0
    %649 = vmatpush1.msra.mxu0 0.0
    %650 = vmatprep.subr.mxu0 0.0
    %651 = vmatpush1.msra.mxu0 0.0
    %652 = vmatprep.subr.mxu0 0.0
    %653 = vmatpush1.msra.mxu0 0.0
    %654 = vmatprep.subr.mxu0 0.0
    %655 = vmatpush1.msra.mxu0 0.0
    %656 = vmatprep.subr.mxu0 0.0
    %657 = vmatpush1.msra.mxu0 0.0
    %658 = vmatprep.subr.mxu0 0.0
    %659 = vmatpush1.msra.mxu0 0.0
    %660 = vmatprep.subr.mxu0 0.0
    %661 = vmatpush1.msra.mxu0 0.0
    %662 = vmatprep.subr.mxu0 0.0
    %663 = vmatpush1.msra.mxu0 0.0
    %664 = vmatprep.subr.mxu0 0.0
    %665 = vmatpush1.msra.mxu0 0.0
    %666 = vmatprep.subr.mxu0 0.0
    %667 = vmatpush1.msra.mxu0 0.0
    %668 = vmatprep.subr.mxu0 0.0
    %669 = vmatpush1.msra.mxu0 %v633
    %670 = vmatprep.subr.mxu0 0.0
    %671 = vmatpush2.msra.mxu0 0.0
    %672 = vmatprep.subr.mxu0 0.0
    %673 = vmatpush2.msra.mxu0 0.0
    %674 = vmatprep.subr.mxu0 0.0
    %675 = vmatpush2.msra.mxu0 0.0
    %676 = vmatprep.subr.mxu0 0.0
    %677 = vmatpush2.msra.mxu0 0.0
    %678 = vmatprep.subr.mxu0 0.0
    %679 = vmatpush2.msra.mxu0 0.0
    %680 = vmatprep.subr.mxu0 0.0
    %681 = vmatpush2.msra.mxu0 0.0
    %682 = vmatprep.subr.mxu0 0.0
    %683 = vmatpush2.msra.mxu0 0.0
    %684 = vmatprep.subr.mxu0 0.0
    %685 = vmatpush2.msra.mxu0 0.0
    %686 = vmatprep.subr.mxu0 0.0
    %687 = vmatpush2.msra.mxu0 0.0
    %688 = vmatprep.subr.mxu0 0.0
    %689 = vmatpush2.msra.mxu0 0.0
    %690 = vmatprep.subr.mxu0 0.0
    %691 = vmatpush2.msra.mxu0 0.0
    %692 = vmatprep.subr.mxu0 0.0
    %693 = vmatpush2.msra.mxu0 0.0
    %694 = vmatprep.subr.mxu0 0.0
    %695 = vmatpush2.msra.mxu0 0.0
    %696 = vmatprep.subr.mxu0 0.0
    %697 = vmatpush2.msra.mxu0 0.0
    %698 = vmatprep.subr.mxu0 0.0
    %699 = vmatpush2.msra.mxu0 0.0
    %700 = vmatprep.subr.mxu0 0.0
    %701 = vmatpush2.msra.mxu0 0.0
    %702 = vmatprep.mubr.f32.mxu0 0.0
    %703 = vmatmul.mubr.f32.gmra.mxu0 %v636
    %v704 = vpop.f32.mrf.mxu0
    %v705 = vadd.f32 0.0, %v704
    %v706 = vpop.f32.mrf.mxu0
    %707 = vdwg.mxu0
    %708 = vrot.lane.b32.xlu0 %v278, 96
    %v709 = vpop.permute.xlu0 %708
    %v712 = vsel %vm291, %v615, 0
    %714 = vmatprep.subr.mxu0 0.0
    %715 = vmatpush1.msra.mxu0 0.0
    %716 = vmatprep.subr.mxu0 0.0
    %717 = vmatpush1.msra.mxu0 0.0
    %718 = vmatprep.subr.mxu0 0.0
    %719 = vmatpush1.msra.mxu0 0.0
    %720 = vmatprep.subr.mxu0 0.0
    %721 = vmatpush1.msra.mxu0 0.0
    %722 = vmatprep.subr.mxu0 0.0
    %723 = vmatpush1.msra.mxu0 0.0
    %724 = vmatprep.subr.mxu0 0.0
    %725 = vmatpush1.msra.mxu0 0.0
    %726 = vmatprep.subr.mxu0 0.0
    %727 = vmatpush1.msra.mxu0 0.0
    %728 = vmatprep.subr.mxu0 0.0
    %729 = vmatpush1.msra.mxu0 0.0
    %730 = vmatprep.subr.mxu0 0.0
    %731 = vmatpush1.msra.mxu0 0.0
    %732 = vmatprep.subr.mxu0 0.0
    %733 = vmatpush1.msra.mxu0 0.0
    %734 = vmatprep.subr.mxu0 0.0
    %735 = vmatpush1.msra.mxu0 0.0
    %736 = vmatprep.subr.mxu0 0.0
    %737 = vmatpush1.msra.mxu0 0.0
    %738 = vmatprep.subr.mxu0 0.0
    %739 = vmatpush1.msra.mxu0 0.0
    %740 = vmatprep.subr.mxu0 0.0
    %741 = vmatpush1.msra.mxu0 0.0
    %742 = vmatprep.subr.mxu0 0.0
    %743 = vmatpush1.msra.mxu0 0.0
    %744 = vmatprep.subr.mxu0 0.0
    %745 = vmatpush1.msra.mxu0 %v709
    %746 = vmatprep.subr.mxu0 0.0
    %747 = vmatpush2.msra.mxu0 0.0
    %748 = vmatprep.subr.mxu0 0.0
    %749 = vmatpush2.msra.mxu0 0.0
    %750 = vmatprep.subr.mxu0 0.0
    %751 = vmatpush2.msra.mxu0 0.0
    %752 = vmatprep.subr.mxu0 0.0
    %753 = vmatpush2.msra.mxu0 0.0
    %754 = vmatprep.subr.mxu0 0.0
    %755 = vmatpush2.msra.mxu0 0.0
    %756 = vmatprep.subr.mxu0 0.0
    %757 = vmatpush2.msra.mxu0 0.0
    %758 = vmatprep.subr.mxu0 0.0
    %759 = vmatpush2.msra.mxu0 0.0
    %760 = vmatprep.subr.mxu0 0.0
    %761 = vmatpush2.msra.mxu0 0.0
    %762 = vmatprep.subr.mxu0 0.0
    %763 = vmatpush2.msra.mxu0 0.0
    %764 = vmatprep.subr.mxu0 0.0
    %765 = vmatpush2.msra.mxu0 0.0
    %766 = vmatprep.subr.mxu0 0.0
    %767 = vmatpush2.msra.mxu0 0.0
    %768 = vmatprep.subr.mxu0 0.0
    %769 = vmatpush2.msra.mxu0 0.0
    %770 = vmatprep.subr.mxu0 0.0
    %771 = vmatpush2.msra.mxu0 0.0
    %772 = vmatprep.subr.mxu0 0.0
    %773 = vmatpush2.msra.mxu0 0.0
    %774 = vmatprep.subr.mxu0 0.0
    %775 = vmatpush2.msra.mxu0 0.0
    %776 = vmatprep.subr.mxu0 0.0
    %777 = vmatpush2.msra.mxu0 0.0
    %778 = vmatprep.mubr.f32.mxu0 0.0
    %779 = vmatmul.mubr.f32.gmra.mxu0 %v712
    %v780 = vpop.f32.mrf.mxu0
    %v781 = vadd.f32 0.0, %v780
    %v782 = vpop.f32.mrf.mxu0
    %783 = vdwg.mxu0
    %784 = vrot.lane.b32.xlu0 %v283, 96
    %v785 = vpop.permute.xlu0 %784
    %v788 = vsel %vm291, %v617, 0
    %790 = vmatprep.subr.mxu0 0.0
    %791 = vmatpush1.msra.mxu0 0.0
    %792 = vmatprep.subr.mxu0 0.0
    %793 = vmatpush1.msra.mxu0 0.0
    %794 = vmatprep.subr.mxu0 0.0
    %795 = vmatpush1.msra.mxu0 0.0
    %796 = vmatprep.subr.mxu0 0.0
    %797 = vmatpush1.msra.mxu0 0.0
    %798 = vmatprep.subr.mxu0 0.0
    %799 = vmatpush1.msra.mxu0 0.0
    %800 = vmatprep.subr.mxu0 0.0
    %801 = vmatpush1.msra.mxu0 0.0
    %802 = vmatprep.subr.mxu0 0.0
    %803 = vmatpush1.msra.mxu0 0.0
    %804 = vmatprep.subr.mxu0 0.0
    %805 = vmatpush1.msra.mxu0 0.0
    %806 = vmatprep.subr.mxu0 0.0
    %807 = vmatpush1.msra.mxu0 0.0
    %808 = vmatprep.subr.mxu0 0.0
    %809 = vmatpush1.msra.mxu0 0.0
    %810 = vmatprep.subr.mxu0 0.0
    %811 = vmatpush1.msra.mxu0 0.0
    %812 = vmatprep.subr.mxu0 0.0
    %813 = vmatpush1.msra.mxu0 0.0
    %814 = vmatprep.subr.mxu0 0.0
    %815 = vmatpush1.msra.mxu0 0.0
    %816 = vmatprep.subr.mxu0 0.0
    %817 = vmatpush1.msra.mxu0 0.0
    %818 = vmatprep.subr.mxu0 0.0
    %819 = vmatpush1.msra.mxu0 0.0
    %820 = vmatprep.subr.mxu0 0.0
    %821 = vmatpush1.msra.mxu0 %v785
    %822 = vmatprep.subr.mxu0 0.0
    %823 = vmatpush2.msra.mxu0 0.0
    %824 = vmatprep.subr.mxu0 0.0
    %825 = vmatpush2.msra.mxu0 0.0
    %826 = vmatprep.subr.mxu0 0.0
    %827 = vmatpush2.msra.mxu0 0.0
    %828 = vmatprep.subr.mxu0 0.0
    %829 = vmatpush2.msra.mxu0 0.0
    %830 = vmatprep.subr.mxu0 0.0
    %831 = vmatpush2.msra.mxu0 0.0
    %832 = vmatprep.subr.mxu0 0.0
    %833 = vmatpush2.msra.mxu0 0.0
    %834 = vmatprep.subr.mxu0 0.0
    %835 = vmatpush2.msra.mxu0 0.0
    %836 = vmatprep.subr.mxu0 0.0
    %837 = vmatpush2.msra.mxu0 0.0
    %838 = vmatprep.subr.mxu0 0.0
    %839 = vmatpush2.msra.mxu0 0.0
    %840 = vmatprep.subr.mxu0 0.0
    %841 = vmatpush2.msra.mxu0 0.0
    %842 = vmatprep.subr.mxu0 0.0
    %843 = vmatpush2.msra.mxu0 0.0
    %844 = vmatprep.subr.mxu0 0.0
    %845 = vmatpush2.msra.mxu0 0.0
    %846 = vmatprep.subr.mxu0 0.0
    %847 = vmatpush2.msra.mxu0 0.0
    %848 = vmatprep.subr.mxu0 0.0
    %849 = vmatpush2.msra.mxu0 0.0
    %850 = vmatprep.subr.mxu0 0.0
    %851 = vmatpush2.msra.mxu0 0.0
    %852 = vmatprep.subr.mxu0 0.0
    %853 = vmatpush2.msra.mxu0 0.0
    %854 = vmatprep.mubr.f32.mxu0 0.0
    %855 = vmatmul.mubr.f32.gmra.mxu0 %v788
    %v856 = vpop.f32.mrf.mxu0
    %v857 = vadd.f32 0.0, %v856
    %v858 = vpop.f32.mrf.mxu0
    %859 = vdwg.mxu0
    %860 = vrot.lane.b32.xlu0 %v288, 96
    %v861 = vpop.permute.xlu0 %860
    %v864 = vsel %vm291, %v619, 0
    %866 = vmatprep.subr.mxu0 0.0
    %867 = vmatpush1.msra.mxu0 0.0
    %868 = vmatprep.subr.mxu0 0.0
    %869 = vmatpush1.msra.mxu0 0.0
    %870 = vmatprep.subr.mxu0 0.0
    %871 = vmatpush1.msra.mxu0 0.0
    %872 = vmatprep.subr.mxu0 0.0
    %873 = vmatpush1.msra.mxu0 0.0
    %874 = vmatprep.subr.mxu0 0.0
    %875 = vmatpush1.msra.mxu0 0.0
    %876 = vmatprep.subr.mxu0 0.0
    %877 = vmatpush1.msra.mxu0 0.0
    %878 = vmatprep.subr.mxu0 0.0
    %879 = vmatpush1.msra.mxu0 0.0
    %880 = vmatprep.subr.mxu0 0.0
    %881 = vmatpush1.msra.mxu0 0.0
    %882 = vmatprep.subr.mxu0 0.0
    %883 = vmatpush1.msra.mxu0 0.0
    %884 = vmatprep.subr.mxu0 0.0
    %885 = vmatpush1.msra.mxu0 0.0
    %886 = vmatprep.subr.mxu0 0.0
    %887 = vmatpush1.msra.mxu0 0.0
    %888 = vmatprep.subr.mxu0 0.0
    %889 = vmatpush1.msra.mxu0 0.0
    %890 = vmatprep.subr.mxu0 0.0
    %891 = vmatpush1.msra.mxu0 0.0
    %892 = vmatprep.subr.mxu0 0.0
    %893 = vmatpush1.msra.mxu0 0.0
    %894 = vmatprep.subr.mxu0 0.0
    %895 = vmatpush1.msra.mxu0 0.0
    %896 = vmatprep.subr.mxu0 0.0
    %897 = vmatpush1.msra.mxu0 %v861
    %898 = vmatprep.subr.mxu0 0.0
    %899 = vmatpush2.msra.mxu0 0.0
    %900 = vmatprep.subr.mxu0 0.0
    %901 = vmatpush2.msra.mxu0 0.0
    %902 = vmatprep.subr.mxu0 0.0
    %903 = vmatpush2.msra.mxu0 0.0
    %904 = vmatprep.subr.mxu0 0.0
    %905 = vmatpush2.msra.mxu0 0.0
    %906 = vmatprep.subr.mxu0 0.0
    %907 = vmatpush2.msra.mxu0 0.0
    %908 = vmatprep.subr.mxu0 0.0
    %909 = vmatpush2.msra.mxu0 0.0
    %910 = vmatprep.subr.mxu0 0.0
    %911 = vmatpush2.msra.mxu0 0.0
    %912 = vmatprep.subr.mxu0 0.0
    %913 = vmatpush2.msra.mxu0 0.0
    %914 = vmatprep.subr.mxu0 0.0
    %915 = vmatpush2.msra.mxu0 0.0
    %916 = vmatprep.subr.mxu0 0.0
    %917 = vmatpush2.msra.mxu0 0.0
    %918 = vmatprep.subr.mxu0 0.0
    %919 = vmatpush2.msra.mxu0 0.0
    %920 = vmatprep.subr.mxu0 0.0
    %921 = vmatpush2.msra.mxu0 0.0
    %922 = vmatprep.subr.mxu0 0.0
    %923 = vmatpush2.msra.mxu0 0.0
    %924 = vmatprep.subr.mxu0 0.0
    %925 = vmatpush2.msra.mxu0 0.0
    %926 = vmatprep.subr.mxu0 0.0
    %927 = vmatpush2.msra.mxu0 0.0
    %928 = vmatprep.subr.mxu0 0.0
    %929 = vmatpush2.msra.mxu0 0.0
    %930 = vmatprep.mubr.f32.mxu0 0.0
    %931 = vmatmul.mubr.f32.gmra.mxu0 %v864
    %v932 = vpop.f32.mrf.mxu0
    %v933 = vadd.f32 0.0, %v932
    %v934 = vpop.f32.mrf.mxu0
    %935 = vdwg.mxu0
    %v936 = vrcp.pop %v622
    %v937 = vmul.f32 %v705, %v936
    %v938 = vrcp.pop %v625
    %v939 = vmul.f32 %v781, %v938
    %v940 = vrcp.pop %v628
    %v941 = vmul.f32 %v857, %v940
    %v942 = vrcp.pop %v631
    %v943 = vmul.f32 %v933, %v942
    %944 = vrot.lane.b32.xlu0 %v156, 120
    %v945 = vpop.permute.xlu0 %944
    %946 = vrot.lane.b32.xlu0 %v273, 120
    %v947 = vpop.permute.xlu0 %946
    %v948 = vsel %vm291, %v945, 0
    %v950 = vsel %vm291, %v947, 0
    %952 = vmatprep.subr.mxu0 0.0
    %953 = vmatpush1.xpose.msra.mxu0 0.0
    %954 = vmatprep.subr.mxu0 0.0
    %955 = vmatpush1.xpose.msra.mxu0 0.0
    %956 = vmatprep.subr.mxu0 0.0
    %957 = vmatpush1.xpose.msra.mxu0 0.0
    %958 = vmatprep.subr.mxu0 0.0
    %959 = vmatpush1.xpose.msra.mxu0 0.0
    %960 = vmatprep.subr.mxu0 0.0
    %961 = vmatpush1.xpose.msra.mxu0 0.0
    %962 = vmatprep.subr.mxu0 0.0
    %963 = vmatpush1.xpose.msra.mxu0 0.0
    %964 = vmatprep.subr.mxu0 0.0
    %965 = vmatpush1.xpose.msra.mxu0 0.0
    %966 = vmatprep.subr.mxu0 0.0
    %967 = vmatpush1.xpose.msra.mxu0 0.0
    %968 = vmatprep.subr.mxu0 0.0
    %969 = vmatpush1.xpose.msra.mxu0 0.0
    %970 = vmatprep.subr.mxu0 0.0
    %971 = vmatpush1.xpose.msra.mxu0 0.0
    %972 = vmatprep.subr.mxu0 0.0
    %973 = vmatpush1.xpose.msra.mxu0 0.0
    %974 = vmatprep.subr.mxu0 0.0
    %975 = vmatpush1.xpose.msra.mxu0 0.0
    %976 = vmatprep.subr.mxu0 0.0
    %977 = vmatpush1.xpose.msra.mxu0 0.0
    %978 = vmatprep.subr.mxu0 0.0
    %979 = vmatpush1.xpose.msra.mxu0 0.0
    %980 = vmatprep.subr.mxu0 0.0
    %981 = vmatpush1.xpose.msra.mxu0 0.0
    %982 = vmatprep.subr.mxu0 0.0
    %983 = vmatpush1.xpose.msra.mxu0 %v950
    %984 = vmatprep.subr.mxu0 0.0
    %985 = vmatpush2.xpose.msra.mxu0 0.0
    %986 = vmatprep.subr.mxu0 0.0
    %987 = vmatpush2.xpose.msra.mxu0 0.0
    %988 = vmatprep.subr.mxu0 0.0
    %989 = vmatpush2.xpose.msra.mxu0 0.0
    %990 = vmatprep.subr.mxu0 0.0
    %991 = vmatpush2.xpose.msra.mxu0 0.0
    %992 = vmatprep.subr.mxu0 0.0
    %993 = vmatpush2.xpose.msra.mxu0 0.0
    %994 = vmatprep.subr.mxu0 0.0
    %995 = vmatpush2.xpose.msra.mxu0 0.0
    %996 = vmatprep.subr.mxu0 0.0
    %997 = vmatpush2.xpose.msra.mxu0 0.0
    %998 = vmatprep.subr.mxu0 0.0
    %999 = vmatpush2.xpose.msra.mxu0 0.0
    %1000 = vmatprep.subr.mxu0 0.0
    %1001 = vmatpush2.xpose.msra.mxu0 0.0
    %1002 = vmatprep.subr.mxu0 0.0
    %1003 = vmatpush2.xpose.msra.mxu0 0.0
    %1004 = vmatprep.subr.mxu0 0.0
    %1005 = vmatpush2.xpose.msra.mxu0 0.0
    %1006 = vmatprep.subr.mxu0 0.0
    %1007 = vmatpush2.xpose.msra.mxu0 0.0
    %1008 = vmatprep.subr.mxu0 0.0
    %1009 = vmatpush2.xpose.msra.mxu0 0.0
    %1010 = vmatprep.subr.mxu0 0.0
    %1011 = vmatpush2.xpose.msra.mxu0 0.0
    %1012 = vmatprep.subr.mxu0 0.0
    %1013 = vmatpush2.xpose.msra.mxu0 0.0
    %1014 = vmatprep.subr.mxu0 0.0
    %1015 = vmatpush2.xpose.msra.mxu0 0.0
    %1016 = vmatprep.mubr.f32.mxu0 0.0
    %1017 = vmatmul.mubr.f32.gmra.mxu0 %v948
    %v1018 = vpop.f32.mrf.mxu0
    %v1019 = vadd.f32 0.0, %v1018
    %v1020 = vpop.f32.mrf.mxu0
    %1021 = vdwg.mxu0
    %1022 = vrot.lane.b32.xlu0 %v161, 120
    %v1023 = vpop.permute.xlu0 %1022
    %1024 = vrot.lane.b32.xlu0 %v278, 120
    %v1025 = vpop.permute.xlu0 %1024
    %v1026 = vsel %vm291, %v1023, 0
    %v1028 = vsel %vm291, %v1025, 0
    %1030 = vmatprep.subr.mxu0 0.0
    %1031 = vmatpush1.xpose.msra.mxu0 0.0
    %1032 = vmatprep.subr.mxu0 0.0
    %1033 = vmatpush1.xpose.msra.mxu0 0.0
    %1034 = vmatprep.subr.mxu0 0.0
    %1035 = vmatpush1.xpose.msra.mxu0 0.0
    %1036 = vmatprep.subr.mxu0 0.0
    %1037 = vmatpush1.xpose.msra.mxu0 0.0
    %1038 = vmatprep.subr.mxu0 0.0
    %1039 = vmatpush1.xpose.msra.mxu0 0.0
    %1040 = vmatprep.subr.mxu0 0.0
    %1041 = vmatpush1.xpose.msra.mxu0 0.0
    %1042 = vmatprep.subr.mxu0 0.0
    %1043 = vmatpush1.xpose.msra.mxu0 0.0
    %1044 = vmatprep.subr.mxu0 0.0
    %1045 = vmatpush1.xpose.msra.mxu0 0.0
    %1046 = vmatprep.subr.mxu0 0.0
    %1047 = vmatpush1.xpose.msra.mxu0 0.0
    %1048 = vmatprep.subr.mxu0 0.0
    %1049 = vmatpush1.xpose.msra.mxu0 0.0
    %1050 = vmatprep.subr.mxu0 0.0
    %1051 = vmatpush1.xpose.msra.mxu0 0.0
    %1052 = vmatprep.subr.mxu0 0.0
    %1053 = vmatpush1.xpose.msra.mxu0 0.0
    %1054 = vmatprep.subr.mxu0 0.0
    %1055 = vmatpush1.xpose.msra.mxu0 0.0
    %1056 = vmatprep.subr.mxu0 0.0
    %1057 = vmatpush1.xpose.msra.mxu0 0.0
    %1058 = vmatprep.subr.mxu0 0.0
    %1059 = vmatpush1.xpose.msra.mxu0 0.0
    %1060 = vmatprep.subr.mxu0 0.0
    %1061 = vmatpush1.xpose.msra.mxu0 %v1028
    %1062 = vmatprep.subr.mxu0 0.0
    %1063 = vmatpush2.xpose.msra.mxu0 0.0
    %1064 = vmatprep.subr.mxu0 0.0
    %1065 = vmatpush2.xpose.msra.mxu0 0.0
    %1066 = vmatprep.subr.mxu0 0.0
    %1067 = vmatpush2.xpose.msra.mxu0 0.0
    %1068 = vmatprep.subr.mxu0 0.0
    %1069 = vmatpush2.xpose.msra.mxu0 0.0
    %1070 = vmatprep.subr.mxu0 0.0
    %1071 = vmatpush2.xpose.msra.mxu0 0.0
    %1072 = vmatprep.subr.mxu0 0.0
    %1073 = vmatpush2.xpose.msra.mxu0 0.0
    %1074 = vmatprep.subr.mxu0 0.0
    %1075 = vmatpush2.xpose.msra.mxu0 0.0
    %1076 = vmatprep.subr.mxu0 0.0
    %1077 = vmatpush2.xpose.msra.mxu0 0.0
    %1078 = vmatprep.subr.mxu0 0.0
    %1079 = vmatpush2.xpose.msra.mxu0 0.0
    %1080 = vmatprep.subr.mxu0 0.0
    %1081 = vmatpush2.xpose.msra.mxu0 0.0
    %1082 = vmatprep.subr.mxu0 0.0
    %1083 = vmatpush2.xpose.msra.mxu0 0.0
    %1084 = vmatprep.subr.mxu0 0.0
    %1085 = vmatpush2.xpose.msra.mxu0 0.0
    %1086 = vmatprep.subr.mxu0 0.0
    %1087 = vmatpush2.xpose.msra.mxu0 0.0
    %1088 = vmatprep.subr.mxu0 0.0
    %1089 = vmatpush2.xpose.msra.mxu0 0.0
    %1090 = vmatprep.subr.mxu0 0.0
    %1091 = vmatpush2.xpose.msra.mxu0 0.0
    %1092 = vmatprep.subr.mxu0 0.0
    %1093 = vmatpush2.xpose.msra.mxu0 0.0
    %1094 = vmatprep.mubr.f32.mxu0 0.0
    %1095 = vmatmul.mubr.f32.gmra.mxu0 %v1026
    %v1096 = vpop.f32.mrf.mxu0
    %v1097 = vadd.f32 0.0, %v1096
    %v1098 = vpop.f32.mrf.mxu0
    %1099 = vdwg.mxu0
    %1100 = vrot.lane.b32.xlu0 %v166, 120
    %v1101 = vpop.permute.xlu0 %1100
    %1102 = vrot.lane.b32.xlu0 %v283, 120
    %v1103 = vpop.permute.xlu0 %1102
    %v1104 = vsel %vm291, %v1101, 0
    %v1106 = vsel %vm291, %v1103, 0
    %1108 = vmatprep.subr.mxu0 0.0
    %1109 = vmatpush1.xpose.msra.mxu0 0.0
    %1110 = vmatprep.subr.mxu0 0.0
    %1111 = vmatpush1.xpose.msra.mxu0 0.0
    %1112 = vmatprep.subr.mxu0 0.0
    %1113 = vmatpush1.xpose.msra.mxu0 0.0
    %1114 = vmatprep.subr.mxu0 0.0
    %1115 = vmatpush1.xpose.msra.mxu0 0.0
    %1116 = vmatprep.subr.mxu0 0.0
    %1117 = vmatpush1.xpose.msra.mxu0 0.0
    %1118 = vmatprep.subr.mxu0 0.0
    %1119 = vmatpush1.xpose.msra.mxu0 0.0
    %1120 = vmatprep.subr.mxu0 0.0
    %1121 = vmatpush1.xpose.msra.mxu0 0.0
    %1122 = vmatprep.subr.mxu0 0.0
    %1123 = vmatpush1.xpose.msra.mxu0 0.0
    %1124 = vmatprep.subr.mxu0 0.0
    %1125 = vmatpush1.xpose.msra.mxu0 0.0
    %1126 = vmatprep.subr.mxu0 0.0
    %1127 = vmatpush1.xpose.msra.mxu0 0.0
    %1128 = vmatprep.subr.mxu0 0.0
    %1129 = vmatpush1.xpose.msra.mxu0 0.0
    %1130 = vmatprep.subr.mxu0 0.0
    %1131 = vmatpush1.xpose.msra.mxu0 0.0
    %1132 = vmatprep.subr.mxu0 0.0
    %1133 = vmatpush1.xpose.msra.mxu0 0.0
    %1134 = vmatprep.subr.mxu0 0.0
    %1135 = vmatpush1.xpose.msra.mxu0 0.0
    %1136 = vmatprep.subr.mxu0 0.0
    %1137 = vmatpush1.xpose.msra.mxu0 0.0
    %1138 = vmatprep.subr.mxu0 0.0
    %1139 = vmatpush1.xpose.msra.mxu0 %v1106
    %1140 = vmatprep.subr.mxu0 0.0
    %1141 = vmatpush2.xpose.msra.mxu0 0.0
    %1142 = vmatprep.subr.mxu0 0.0
    %1143 = vmatpush2.xpose.msra.mxu0 0.0
    %1144 = vmatprep.subr.mxu0 0.0
    %1145 = vmatpush2.xpose.msra.mxu0 0.0
    %1146 = vmatprep.subr.mxu0 0.0
    %1147 = vmatpush2.xpose.msra.mxu0 0.0
    %1148 = vmatprep.subr.mxu0 0.0
    %1149 = vmatpush2.xpose.msra.mxu0 0.0
    %1150 = vmatprep.subr.mxu0 0.0
    %1151 = vmatpush2.xpose.msra.mxu0 0.0
    %1152 = vmatprep.subr.mxu0 0.0
    %1153 = vmatpush2.xpose.msra.mxu0 0.0
    %1154 = vmatprep.subr.mxu0 0.0
    %1155 = vmatpush2.xpose.msra.mxu0 0.0
    %1156 = vmatprep.subr.mxu0 0.0
    %1157 = vmatpush2.xpose.msra.mxu0 0.0
    %1158 = vmatprep.subr.mxu0 0.0
    %1159 = vmatpush2.xpose.msra.mxu0 0.0
    %1160 = vmatprep.subr.mxu0 0.0
    %1161 = vmatpush2.xpose.msra.mxu0 0.0
    %1162 = vmatprep.subr.mxu0 0.0
    %1163 = vmatpush2.xpose.msra.mxu0 0.0
    %1164 = vmatprep.subr.mxu0 0.0
    %1165 = vmatpush2.xpose.msra.mxu0 0.0
    %1166 = vmatprep.subr.mxu0 0.0
    %1167 = vmatpush2.xpose.msra.mxu0 0.0
    %1168 = vmatprep.subr.mxu0 0.0
    %1169 = vmatpush2.xpose.msra.mxu0 0.0
    %1170 = vmatprep.subr.mxu0 0.0
    %1171 = vmatpush2.xpose.msra.mxu0 0.0
    %1172 = vmatprep.mubr.f32.mxu0 0.0
    %1173 = vmatmul.mubr.f32.gmra.mxu0 %v1104
    %v1174 = vpop.f32.mrf.mxu0
    %v1175 = vadd.f32 0.0, %v1174
    %v1176 = vpop.f32.mrf.mxu0
    %1177 = vdwg.mxu0
    %1178 = vrot.lane.b32.xlu0 %v171, 120
    %v1179 = vpop.permute.xlu0 %1178
    %1180 = vrot.lane.b32.xlu0 %v288, 120
    %v1181 = vpop.permute.xlu0 %1180
    %v1182 = vsel %vm291, %v1179, 0
    %v1184 = vsel %vm291, %v1181, 0
    %1186 = vmatprep.subr.mxu0 0.0
    %1187 = vmatpush1.xpose.msra.mxu0 0.0
    %1188 = vmatprep.subr.mxu0 0.0
    %1189 = vmatpush1.xpose.msra.mxu0 0.0
    %1190 = vmatprep.subr.mxu0 0.0
    %1191 = vmatpush1.xpose.msra.mxu0 0.0
    %1192 = vmatprep.subr.mxu0 0.0
    %1193 = vmatpush1.xpose.msra.mxu0 0.0
    %1194 = vmatprep.subr.mxu0 0.0
    %1195 = vmatpush1.xpose.msra.mxu0 0.0
    %1196 = vmatprep.subr.mxu0 0.0
    %1197 = vmatpush1.xpose.msra.mxu0 0.0
    %1198 = vmatprep.subr.mxu0 0.0
    %1199 = vmatpush1.xpose.msra.mxu0 0.0
    %1200 = vmatprep.subr.mxu0 0.0
    %1201 = vmatpush1.xpose.msra.mxu0 0.0
    %1202 = vmatprep.subr.mxu0 0.0
    %1203 = vmatpush1.xpose.msra.mxu0 0.0
    %1204 = vmatprep.subr.mxu0 0.0
    %1205 = vmatpush1.xpose.msra.mxu0 0.0
    %1206 = vmatprep.subr.mxu0 0.0
    %1207 = vmatpush1.xpose.msra.mxu0 0.0
    %1208 = vmatprep.subr.mxu0 0.0
    %1209 = vmatpush1.xpose.msra.mxu0 0.0
    %1210 = vmatprep.subr.mxu0 0.0
    %1211 = vmatpush1.xpose.msra.mxu0 0.0
    %1212 = vmatprep.subr.mxu0 0.0
    %1213 = vmatpush1.xpose.msra.mxu0 0.0
    %1214 = vmatprep.subr.mxu0 0.0
    %1215 = vmatpush1.xpose.msra.mxu0 0.0
    %1216 = vmatprep.subr.mxu0 0.0
    %1217 = vmatpush1.xpose.msra.mxu0 %v1184
    %1218 = vmatprep.subr.mxu0 0.0
    %1219 = vmatpush2.xpose.msra.mxu0 0.0
    %1220 = vmatprep.subr.mxu0 0.0
    %1221 = vmatpush2.xpose.msra.mxu0 0.0
    %1222 = vmatprep.subr.mxu0 0.0
    %1223 = vmatpush2.xpose.msra.mxu0 0.0
    %1224 = vmatprep.subr.mxu0 0.0
    %1225 = vmatpush2.xpose.msra.mxu0 0.0
    %1226 = vmatprep.subr.mxu0 0.0
    %1227 = vmatpush2.xpose.msra.mxu0 0.0
    %1228 = vmatprep.subr.mxu0 0.0
    %1229 = vmatpush2.xpose.msra.mxu0 0.0
    %1230 = vmatprep.subr.mxu0 0.0
    %1231 = vmatpush2.xpose.msra.mxu0 0.0
    %1232 = vmatprep.subr.mxu0 0.0
    %1233 = vmatpush2.xpose.msra.mxu0 0.0
    %1234 = vmatprep.subr.mxu0 0.0
    %1235 = vmatpush2.xpose.msra.mxu0 0.0
    %1236 = vmatprep.subr.mxu0 0.0
    %1237 = vmatpush2.xpose.msra.mxu0 0.0
    %1238 = vmatprep.subr.mxu0 0.0
    %1239 = vmatpush2.xpose.msra.mxu0 0.0
    %1240 = vmatprep.subr.mxu0 0.0
    %1241 = vmatpush2.xpose.msra.mxu0 0.0
    %1242 = vmatprep.subr.mxu0 0.0
    %1243 = vmatpush2.xpose.msra.mxu0 0.0
    %1244 = vmatprep.subr.mxu0 0.0
    %1245 = vmatpush2.xpose.msra.mxu0 0.0
    %1246 = vmatprep.subr.mxu0 0.0
    %1247 = vmatpush2.xpose.msra.mxu0 0.0
    %1248 = vmatprep.subr.mxu0 0.0
    %1249 = vmatpush2.xpose.msra.mxu0 0.0
    %1250 = vmatprep.mubr.f32.mxu0 0.0
    %1251 = vmatmul.mubr.f32.gmra.mxu0 %v1182
    %v1252 = vpop.f32.mrf.mxu0
    %v1253 = vadd.f32 0.0, %v1252
    %v1254 = vpop.f32.mrf.mxu0
    %1255 = vdwg.mxu0
    %v1256 = vsel %vm291, %v1019, -inf
    %1257 = vmax.xlane.f32.xlu0 %v1256
    %v1258 = vpop.xlane.xlu0 %1257
    %v1259 = vsel %vm291, %v1097, -inf
    %1260 = vmax.xlane.f32.xlu0 %v1259
    %v1261 = vpop.xlane.xlu0 %1260
    %v1262 = vsel %vm291, %v1175, -inf
    %1263 = vmax.xlane.f32.xlu0 %v1262
    %v1264 = vpop.xlane.xlu0 %1263
    %v1265 = vsel %vm291, %v1253, -inf
    %1266 = vmax.xlane.f32.xlu0 %v1265
    %v1267 = vpop.xlane.xlu0 %1266
    %v1268 = vsub.f32 %v1019, %v1258
    %v1269 = vsub.f32 %v1097, %v1261
    %v1270 = vsub.f32 %v1175, %v1264
    %v1271 = vsub.f32 %v1253, %v1267
    %v1272 = vmul.f32 %v1268, 1.442695
    %v1273 = vpow.pop %v1272
    %v1274 = vmul.f32 %v1269, 1.442695
    %v1275 = vpow.pop %v1274
    %v1276 = vmul.f32 %v1270, 1.442695
    %v1277 = vpow.pop %v1276
    %v1278 = vmul.f32 %v1271, 1.442695
    %v1279 = vpow.pop %v1278
    %v1280 = vsel %vm291, %v1273, 0.0
    %1281 = vadd.xlane.f32.xlu0 %v1280
    %v1282 = vpop.xlane.xlu0 %1281
    %v1283 = vsel %vm291, %v1275, 0.0
    %1284 = vadd.xlane.f32.xlu0 %v1283
    %v1285 = vpop.xlane.xlu0 %1284
    %v1286 = vsel %vm291, %v1277, 0.0
    %1287 = vadd.xlane.f32.xlu0 %v1286
    %v1288 = vpop.xlane.xlu0 %1287
    %v1289 = vsel %vm291, %v1279, 0.0
    %1290 = vadd.xlane.f32.xlu0 %v1289
    %v1291 = vpop.xlane.xlu0 %1290
    %1292 = vrot.lane.b32.xlu0 %v273, 88
    %v1293 = vpop.permute.xlu0 %1292
    %v1296 = vsel %vm291, %v1273, 0
    %1298 = vmatprep.subr.mxu0 0.0
    %1299 = vmatpush1.msra.mxu0 0.0
    %1300 = vmatprep.subr.mxu0 0.0
    %1301 = vmatpush1.msra.mxu0 0.0
    %1302 = vmatprep.subr.mxu0 0.0
    %1303 = vmatpush1.msra.mxu0 0.0
    %1304 = vmatprep.subr.mxu0 0.0
    %1305 = vmatpush1.msra.mxu0 0.0
    %1306 = vmatprep.subr.mxu0 0.0
    %1307 = vmatpush1.msra.mxu0 0.0
    %1308 = vmatprep.subr.mxu0 0.0
    %1309 = vmatpush1.msra.mxu0 0.0
    %1310 = vmatprep.subr.mxu0 0.0
    %1311 = vmatpush1.msra.mxu0 0.0
    %1312 = vmatprep.subr.mxu0 0.0
    %1313 = vmatpush1.msra.mxu0 0.0
    %1314 = vmatprep.subr.mxu0 0.0
    %1315 = vmatpush1.msra.mxu0 0.0
    %1316 = vmatprep.subr.mxu0 0.0
    %1317 = vmatpush1.msra.mxu0 0.0
    %1318 = vmatprep.subr.mxu0 0.0
    %1319 = vmatpush1.msra.mxu0 0.0
    %1320 = vmatprep.subr.mxu0 0.0
    %1321 = vmatpush1.msra.mxu0 0.0
    %1322 = vmatprep.subr.mxu0 0.0
    %1323 = vmatpush1.msra.mxu0 0.0
    %1324 = vmatprep.subr.mxu0 0.0
    %1325 = vmatpush1.msra.mxu0 0.0
    %1326 = vmatprep.subr.mxu0 0.0
    %1327 = vmatpush1.msra.mxu0 0.0
    %1328 = vmatprep.subr.mxu0 0.0
    %1329 = vmatpush1.msra.mxu0 %v1293
    %1330 = vmatprep.subr.mxu0 0.0
    %1331 = vmatpush2.msra.mxu0 0.0
    %1332 = vmatprep.subr.mxu0 0.0
    %1333 = vmatpush2.msra.mxu0 0.0
    %1334 = vmatprep.subr.mxu0 0.0
    %1335 = vmatpush2.msra.mxu0 0.0
    %1336 = vmatprep.subr.mxu0 0.0
    %1337 = vmatpush2.msra.mxu0 0.0
    %1338 = vmatprep.subr.mxu0 0.0
    %1339 = vmatpush2.msra.mxu0 0.0
    %1340 = vmatprep.subr.mxu0 0.0
    %1341 = vmatpush2.msra.mxu0 0.0
    %1342 = vmatprep.subr.mxu0 0.0
    %1343 = vmatpush2.msra.mxu0 0.0
    %1344 = vmatprep.subr.mxu0 0.0
    %1345 = vmatpush2.msra.mxu0 0.0
    %1346 = vmatprep.subr.mxu0 0.0
    %1347 = vmatpush2.msra.mxu0 0.0
    %1348 = vmatprep.subr.mxu0 0.0
    %1349 = vmatpush2.msra.mxu0 0.0
    %1350 = vmatprep.subr.mxu0 0.0
    %1351 = vmatpush2.msra.mxu0 0.0
    %1352 = vmatprep.subr.mxu0 0.0
    %1353 = vmatpush2.msra.mxu0 0.0
    %1354 = vmatprep.subr.mxu0 0.0
    %1355 = vmatpush2.msra.mxu0 0.0
    %1356 = vmatprep.subr.mxu0 0.0
    %1357 = vmatpush2.msra.mxu0 0.0
    %1358 = vmatprep.subr.mxu0 0.0
    %1359 = vmatpush2.msra.mxu0 0.0
    %1360 = vmatprep.subr.mxu0 0.0
    %1361 = vmatpush2.msra.mxu0 0.0
    %1362 = vmatprep.mubr.f32.mxu0 0.0
    %1363 = vmatmul.mubr.f32.gmra.mxu0 %v1296
    %v1364 = vpop.f32.mrf.mxu0
    %v1365 = vadd.f32 0.0, %v1364
    %v1366 = vpop.f32.mrf.mxu0
    %1367 = vdwg.mxu0
    %1368 = vrot.lane.b32.xlu0 %v278, 88
    %v1369 = vpop.permute.xlu0 %1368
    %v1372 = vsel %vm291, %v1275, 0
    %1374 = vmatprep.subr.mxu0 0.0
    %1375 = vmatpush1.msra.mxu0 0.0
    %1376 = vmatprep.subr.mxu0 0.0
    %1377 = vmatpush1.msra.mxu0 0.0
    %1378 = vmatprep.subr.mxu0 0.0
    %1379 = vmatpush1.msra.mxu0 0.0
    %1380 = vmatprep.subr.mxu0 0.0
    %1381 = vmatpush1.msra.mxu0 0.0
    %1382 = vmatprep.subr.mxu0 0.0
    %1383 = vmatpush1.msra.mxu0 0.0
    %1384 = vmatprep.subr.mxu0 0.0
    %1385 = vmatpush1.msra.mxu0 0.0
    %1386 = vmatprep.subr.mxu0 0.0
    %1387 = vmatpush1.msra.mxu0 0.0
    %1388 = vmatprep.subr.mxu0 0.0
    %1389 = vmatpush1.msra.mxu0 0.0
    %1390 = vmatprep.subr.mxu0 0.0
    %1391 = vmatpush1.msra.mxu0 0.0
    %1392 = vmatprep.subr.mxu0 0.0
    %1393 = vmatpush1.msra.mxu0 0.0
    %1394 = vmatprep.subr.mxu0 0.0
    %1395 = vmatpush1.msra.mxu0 0.0
    %1396 = vmatprep.subr.mxu0 0.0
    %1397 = vmatpush1.msra.mxu0 0.0
    %1398 = vmatprep.subr.mxu0 0.0
    %1399 = vmatpush1.msra.mxu0 0.0
    %1400 = vmatprep.subr.mxu0 0.0
    %1401 = vmatpush1.msra.mxu0 0.0
    %1402 = vmatprep.subr.mxu0 0.0
    %1403 = vmatpush1.msra.mxu0 0.0
    %1404 = vmatprep.subr.mxu0 0.0
    %1405 = vmatpush1.msra.mxu0 %v1369
    %1406 = vmatprep.subr.mxu0 0.0
    %1407 = vmatpush2.msra.mxu0 0.0
    %1408 = vmatprep.subr.mxu0 0.0
    %1409 = vmatpush2.msra.mxu0 0.0
    %1410 = vmatprep.subr.mxu0 0.0
    %1411 = vmatpush2.msra.mxu0 0.0
    %1412 = vmatprep.subr.mxu0 0.0
    %1413 = vmatpush2.msra.mxu0 0.0
    %1414 = vmatprep.subr.mxu0 0.0
    %1415 = vmatpush2.msra.mxu0 0.0
    %1416 = vmatprep.subr.mxu0 0.0
    %1417 = vmatpush2.msra.mxu0 0.0
    %1418 = vmatprep.subr.mxu0 0.0
    %1419 = vmatpush2.msra.mxu0 0.0
    %1420 = vmatprep.subr.mxu0 0.0
    %1421 = vmatpush2.msra.mxu0 0.0
    %1422 = vmatprep.subr.mxu0 0.0
    %1423 = vmatpush2.msra.mxu0 0.0
    %1424 = vmatprep.subr.mxu0 0.0
    %1425 = vmatpush2.msra.mxu0 0.0
    %1426 = vmatprep.subr.mxu0 0.0
    %1427 = vmatpush2.msra.mxu0 0.0
    %1428 = vmatprep.subr.mxu0 0.0
    %1429 = vmatpush2.msra.mxu0 0.0
    %1430 = vmatprep.subr.mxu0 0.0
    %1431 = vmatpush2.msra.mxu0 0.0
    %1432 = vmatprep.subr.mxu0 0.0
    %1433 = vmatpush2.msra.mxu0 0.0
    %1434 = vmatprep.subr.mxu0 0.0
    %1435 = vmatpush2.msra.mxu0 0.0
    %1436 = vmatprep.subr.mxu0 0.0
    %1437 = vmatpush2.msra.mxu0 0.0
    %1438 = vmatprep.mubr.f32.mxu0 0.0
    %1439 = vmatmul.mubr.f32.gmra.mxu0 %v1372
    %v1440 = vpop.f32.mrf.mxu0
    %v1441 = vadd.f32 0.0, %v1440
    %v1442 = vpop.f32.mrf.mxu0
    %1443 = vdwg.mxu0
    %1444 = vrot.lane.b32.xlu0 %v283, 88
    %v1445 = vpop.permute.xlu0 %1444
    %v1448 = vsel %vm291, %v1277, 0
    %1450 = vmatprep.subr.mxu0 0.0
    %1451 = vmatpush1.msra.mxu0 0.0
    %1452 = vmatprep.subr.mxu0 0.0
    %1453 = vmatpush1.msra.mxu0 0.0
    %1454 = vmatprep.subr.mxu0 0.0
    %1455 = vmatpush1.msra.mxu0 0.0
    %1456 = vmatprep.subr.mxu0 0.0
    %1457 = vmatpush1.msra.mxu0 0.0
    %1458 = vmatprep.subr.mxu0 0.0
    %1459 = vmatpush1.msra.mxu0 0.0
    %1460 = vmatprep.subr.mxu0 0.0
    %1461 = vmatpush1.msra.mxu0 0.0
    %1462 = vmatprep.subr.mxu0 0.0
    %1463 = vmatpush1.msra.mxu0 0.0
    %1464 = vmatprep.subr.mxu0 0.0
    %1465 = vmatpush1.msra.mxu0 0.0
    %1466 = vmatprep.subr.mxu0 0.0
    %1467 = vmatpush1.msra.mxu0 0.0
    %1468 = vmatprep.subr.mxu0 0.0
    %1469 = vmatpush1.msra.mxu0 0.0
    %1470 = vmatprep.subr.mxu0 0.0
    %1471 = vmatpush1.msra.mxu0 0.0
    %1472 = vmatprep.subr.mxu0 0.0
    %1473 = vmatpush1.msra.mxu0 0.0
    %1474 = vmatprep.subr.mxu0 0.0
    %1475 = vmatpush1.msra.mxu0 0.0
    %1476 = vmatprep.subr.mxu0 0.0
    %1477 = vmatpush1.msra.mxu0 0.0
    %1478 = vmatprep.subr.mxu0 0.0
    %1479 = vmatpush1.msra.mxu0 0.0
    %1480 = vmatprep.subr.mxu0 0.0
    %1481 = vmatpush1.msra.mxu0 %v1445
    %1482 = vmatprep.subr.mxu0 0.0
    %1483 = vmatpush2.msra.mxu0 0.0
    %1484 = vmatprep.subr.mxu0 0.0
    %1485 = vmatpush2.msra.mxu0 0.0
    %1486 = vmatprep.subr.mxu0 0.0
    %1487 = vmatpush2.msra.mxu0 0.0
    %1488 = vmatprep.subr.mxu0 0.0
    %1489 = vmatpush2.msra.mxu0 0.0
    %1490 = vmatprep.subr.mxu0 0.0
    %1491 = vmatpush2.msra.mxu0 0.0
    %1492 = vmatprep.subr.mxu0 0.0
    %1493 = vmatpush2.msra.mxu0 0.0
    %1494 = vmatprep.subr.mxu0 0.0
    %1495 = vmatpush2.msra.mxu0 0.0
    %1496 = vmatprep.subr.mxu0 0.0
    %1497 = vmatpush2.msra.mxu0 0.0
    %1498 = vmatprep.subr.mxu0 0.0
    %1499 = vmatpush2.msra.mxu0 0.0
    %1500 = vmatprep.subr.mxu0 0.0
    %1501 = vmatpush2.msra.mxu0 0.0
    %1502 = vmatprep.subr.mxu0 0.0
    %1503 = vmatpush2.msra.mxu0 0.0
    %1504 = vmatprep.subr.mxu0 0.0
    %1505 = vmatpush2.msra.mxu0 0.0
    %1506 = vmatprep.subr.mxu0 0.0
    %1507 = vmatpush2.msra.mxu0 0.0
    %1508 = vmatprep.subr.mxu0 0.0
    %1509 = vmatpush2.msra.mxu0 0.0
    %1510 = vmatprep.subr.mxu0 0.0
    %1511 = vmatpush2.msra.mxu0 0.0
    %1512 = vmatprep.subr.mxu0 0.0
    %1513 = vmatpush2.msra.mxu0 0.0
    %1514 = vmatprep.mubr.f32.mxu0 0.0
    %1515 = vmatmul.mubr.f32.gmra.mxu0 %v1448
    %v1516 = vpop.f32.mrf.mxu0
    %v1517 = vadd.f32 0.0, %v1516
    %v1518 = vpop.f32.mrf.mxu0
    %1519 = vdwg.mxu0
    %1520 = vrot.lane.b32.xlu0 %v288, 88
    %v1521 = vpop.permute.xlu0 %1520
    %v1524 = vsel %vm291, %v1279, 0
    %1526 = vmatprep.subr.mxu0 0.0
    %1527 = vmatpush1.msra.mxu0 0.0
    %1528 = vmatprep.subr.mxu0 0.0
    %1529 = vmatpush1.msra.mxu0 0.0
    %1530 = vmatprep.subr.mxu0 0.0
    %1531 = vmatpush1.msra.mxu0 0.0
    %1532 = vmatprep.subr.mxu0 0.0
    %1533 = vmatpush1.msra.mxu0 0.0
    %1534 = vmatprep.subr.mxu0 0.0
    %1535 = vmatpush1.msra.mxu0 0.0
    %1536 = vmatprep.subr.mxu0 0.0
    %1537 = vmatpush1.msra.mxu0 0.0
    %1538 = vmatprep.subr.mxu0 0.0
    %1539 = vmatpush1.msra.mxu0 0.0
    %1540 = vmatprep.subr.mxu0 0.0
    %1541 = vmatpush1.msra.mxu0 0.0
    %1542 = vmatprep.subr.mxu0 0.0
    %1543 = vmatpush1.msra.mxu0 0.0
    %1544 = vmatprep.subr.mxu0 0.0
    %1545 = vmatpush1.msra.mxu0 0.0
    %1546 = vmatprep.subr.mxu0 0.0
    %1547 = vmatpush1.msra.mxu0 0.0
    %1548 = vmatprep.subr.mxu0 0.0
    %1549 = vmatpush1.msra.mxu0 0.0
    %1550 = vmatprep.subr.mxu0 0.0
    %1551 = vmatpush1.msra.mxu0 0.0
    %1552 = vmatprep.subr.mxu0 0.0
    %1553 = vmatpush1.msra.mxu0 0.0
    %1554 = vmatprep.subr.mxu0 0.0
    %1555 = vmatpush1.msra.mxu0 0.0
    %1556 = vmatprep.subr.mxu0 0.0
    %1557 = vmatpush1.msra.mxu0 %v1521
    %1558 = vmatprep.subr.mxu0 0.0
    %1559 = vmatpush2.msra.mxu0 0.0
    %1560 = vmatprep.subr.mxu0 0.0
    %1561 = vmatpush2.msra.mxu0 0.0
    %1562 = vmatprep.subr.mxu0 0.0
    %1563 = vmatpush2.msra.mxu0 0.0
    %1564 = vmatprep.subr.mxu0 0.0
    %1565 = vmatpush2.msra.mxu0 0.0
    %1566 = vmatprep.subr.mxu0 0.0
    %1567 = vmatpush2.msra.mxu0 0.0
    %1568 = vmatprep.subr.mxu0 0.0
    %1569 = vmatpush2.msra.mxu0 0.0
    %1570 = vmatprep.subr.mxu0 0.0
    %1571 = vmatpush2.msra.mxu0 0.0
    %1572 = vmatprep.subr.mxu0 0.0
    %1573 = vmatpush2.msra.mxu0 0.0
    %1574 = vmatprep.subr.mxu0 0.0
    %1575 = vmatpush2.msra.mxu0 0.0
    %1576 = vmatprep.subr.mxu0 0.0
    %1577 = vmatpush2.msra.mxu0 0.0
    %1578 = vmatprep.subr.mxu0 0.0
    %1579 = vmatpush2.msra.mxu0 0.0
    %1580 = vmatprep.subr.mxu0 0.0
    %1581 = vmatpush2.msra.mxu0 0.0
    %1582 = vmatprep.subr.mxu0 0.0
    %1583 = vmatpush2.msra.mxu0 0.0
    %1584 = vmatprep.subr.mxu0 0.0
    %1585 = vmatpush2.msra.mxu0 0.0
    %1586 = vmatprep.subr.mxu0 0.0
    %1587 = vmatpush2.msra.mxu0 0.0
    %1588 = vmatprep.subr.mxu0 0.0
    %1589 = vmatpush2.msra.mxu0 0.0
    %1590 = vmatprep.mubr.f32.mxu0 0.0
    %1591 = vmatmul.mubr.f32.gmra.mxu0 %v1524
    %v1592 = vpop.f32.mrf.mxu0
    %v1593 = vadd.f32 0.0, %v1592
    %v1594 = vpop.f32.mrf.mxu0
    %1595 = vdwg.mxu0
    %v1596 = vrcp.pop %v1282
    %v1597 = vmul.f32 %v1365, %v1596
    %v1598 = vrcp.pop %v1285
    %v1599 = vmul.f32 %v1441, %v1598
    %v1600 = vrcp.pop %v1288
    %v1601 = vmul.f32 %v1517, %v1600
    %v1602 = vrcp.pop %v1291
    %v1603 = vmul.f32 %v1593, %v1602
    %1604 = vrot.lane.b32.xlu0 %v68, 32
    %v1605 = vpop.permute.xlu0 %1604
    %v1608 = vsel %vm291, %v1597, 0
    %v1611 = vsel %vm291, %v1599, 0
    %v1614 = vsel %vm291, %v1601, 0
    %v1617 = vsel %vm291, %v1603, 0
    %1619 = vmatprep.subr.mxu0 0.0
    %1620 = vmatpush1.msra.mxu0 0.0
    %1621 = vmatprep.subr.mxu0 0.0
    %1622 = vmatpush1.msra.mxu0 0.0
    %1623 = vmatprep.subr.mxu0 0.0
    %1624 = vmatpush1.msra.mxu0 0.0
    %1625 = vmatprep.subr.mxu0 0.0
    %1626 = vmatpush1.msra.mxu0 0.0
    %1627 = vmatprep.subr.mxu0 0.0
    %1628 = vmatpush1.msra.mxu0 0.0
    %1629 = vmatprep.subr.mxu0 0.0
    %1630 = vmatpush1.msra.mxu0 0.0
    %1631 = vmatprep.subr.mxu0 0.0
    %1632 = vmatpush1.msra.mxu0 0.0
    %1633 = vmatprep.subr.mxu0 0.0
    %1634 = vmatpush1.msra.mxu0 0.0
    %1635 = vmatprep.subr.mxu0 0.0
    %1636 = vmatpush1.msra.mxu0 0.0
    %1637 = vmatprep.subr.mxu0 0.0
    %1638 = vmatpush1.msra.mxu0 0.0
    %1639 = vmatprep.subr.mxu0 0.0
    %1640 = vmatpush1.msra.mxu0 0.0
    %1641 = vmatprep.subr.mxu0 0.0
    %1642 = vmatpush1.msra.mxu0 0.0
    %1643 = vmatprep.subr.mxu0 0.0
    %1644 = vmatpush1.msra.mxu0 0.0
    %1645 = vmatprep.subr.mxu0 0.0
    %1646 = vmatpush1.msra.mxu0 0.0
    %1647 = vmatprep.subr.mxu0 0.0
    %1648 = vmatpush1.msra.mxu0 0.0
    %1649 = vmatprep.subr.mxu0 0.0
    %1650 = vmatpush1.msra.mxu0 %v1605
    %1651 = vmatprep.subr.mxu0 0.0
    %1652 = vmatpush2.msra.mxu0 0.0
    %1653 = vmatprep.subr.mxu0 0.0
    %1654 = vmatpush2.msra.mxu0 0.0
    %1655 = vmatprep.subr.mxu0 0.0
    %1656 = vmatpush2.msra.mxu0 0.0
    %1657 = vmatprep.subr.mxu0 0.0
    %1658 = vmatpush2.msra.mxu0 0.0
    %1659 = vmatprep.subr.mxu0 0.0
    %1660 = vmatpush2.msra.mxu0 0.0
    %1661 = vmatprep.subr.mxu0 0.0
    %1662 = vmatpush2.msra.mxu0 0.0
    %1663 = vmatprep.subr.mxu0 0.0
    %1664 = vmatpush2.msra.mxu0 0.0
    %1665 = vmatprep.subr.mxu0 0.0
    %1666 = vmatpush2.msra.mxu0 0.0
    %1667 = vmatprep.subr.mxu0 0.0
    %1668 = vmatpush2.msra.mxu0 0.0
    %1669 = vmatprep.subr.mxu0 0.0
    %1670 = vmatpush2.msra.mxu0 0.0
    %1671 = vmatprep.subr.mxu0 0.0
    %1672 = vmatpush2.msra.mxu0 0.0
    %1673 = vmatprep.subr.mxu0 0.0
    %1674 = vmatpush2.msra.mxu0 0.0
    %1675 = vmatprep.subr.mxu0 0.0
    %1676 = vmatpush2.msra.mxu0 0.0
    %1677 = vmatprep.subr.mxu0 0.0
    %1678 = vmatpush2.msra.mxu0 0.0
    %1679 = vmatprep.subr.mxu0 0.0
    %1680 = vmatpush2.msra.mxu0 0.0
    %1681 = vmatprep.subr.mxu0 0.0
    %1682 = vmatpush2.msra.mxu0 0.0
    %1683 = vmatprep.mubr.f32.mxu0 0.0
    %1684 = vmatmul.mubr.f32.gmra.mxu0 %v1608
    %v1685 = vpop.f32.mrf.mxu0
    %v1686 = vadd.f32 0.0, %v1685
    %v1687 = vpop.f32.mrf.mxu0
    %1688 = vmatprep.mubr.f32.mxu0 0.0
    %1689 = vmatmul.mubr.f32.gmra.mxu0 %v1611
    %v1690 = vpop.f32.mrf.mxu0
    %v1691 = vadd.f32 0.0, %v1690
    %v1692 = vpop.f32.mrf.mxu0
    %1693 = vmatprep.mubr.f32.mxu0 0.0
    %1694 = vmatmul.mubr.f32.gmra.mxu0 %v1614
    %v1695 = vpop.f32.mrf.mxu0
    %v1696 = vadd.f32 0.0, %v1695
    %v1697 = vpop.f32.mrf.mxu0
    %1698 = vmatprep.mubr.f32.mxu0 0.0
    %1699 = vmatmul.mubr.f32.gmra.mxu0 %v1617
    %v1700 = vpop.f32.mrf.mxu0
    %v1701 = vadd.f32 0.0, %v1700
    %v1702 = vpop.f32.mrf.mxu0
    %1703 = vdwg.mxu0
    %1704 = vrot.lane.b32.xlu0 %v67, 32
    %v1705 = vpop.permute.xlu0 %1704
    %v1708 = vsel %vm291, %v937, 0
    %v1711 = vsel %vm291, %v939, 0
    %v1714 = vsel %vm291, %v941, 0
    %v1717 = vsel %vm291, %v943, 0
    %1719 = vmatprep.subr.mxu0 0.0
    %1720 = vmatpush1.msra.mxu0 0.0
    %1721 = vmatprep.subr.mxu0 0.0
    %1722 = vmatpush1.msra.mxu0 0.0
    %1723 = vmatprep.subr.mxu0 0.0
    %1724 = vmatpush1.msra.mxu0 0.0
    %1725 = vmatprep.subr.mxu0 0.0
    %1726 = vmatpush1.msra.mxu0 0.0
    %1727 = vmatprep.subr.mxu0 0.0
    %1728 = vmatpush1.msra.mxu0 0.0
    %1729 = vmatprep.subr.mxu0 0.0
    %1730 = vmatpush1.msra.mxu0 0.0
    %1731 = vmatprep.subr.mxu0 0.0
    %1732 = vmatpush1.msra.mxu0 0.0
    %1733 = vmatprep.subr.mxu0 0.0
    %1734 = vmatpush1.msra.mxu0 0.0
    %1735 = vmatprep.subr.mxu0 0.0
    %1736 = vmatpush1.msra.mxu0 0.0
    %1737 = vmatprep.subr.mxu0 0.0
    %1738 = vmatpush1.msra.mxu0 0.0
    %1739 = vmatprep.subr.mxu0 0.0
    %1740 = vmatpush1.msra.mxu0 0.0
    %1741 = vmatprep.subr.mxu0 0.0
    %1742 = vmatpush1.msra.mxu0 0.0
    %1743 = vmatprep.subr.mxu0 0.0
    %1744 = vmatpush1.msra.mxu0 0.0
    %1745 = vmatprep.subr.mxu0 0.0
    %1746 = vmatpush1.msra.mxu0 0.0
    %1747 = vmatprep.subr.mxu0 0.0
    %1748 = vmatpush1.msra.mxu0 0.0
    %1749 = vmatprep.subr.mxu0 0.0
    %1750 = vmatpush1.msra.mxu0 %v1705
    %1751 = vmatprep.subr.mxu0 0.0
    %1752 = vmatpush2.msra.mxu0 0.0
    %1753 = vmatprep.subr.mxu0 0.0
    %1754 = vmatpush2.msra.mxu0 0.0
    %1755 = vmatprep.subr.mxu0 0.0
    %1756 = vmatpush2.msra.mxu0 0.0
    %1757 = vmatprep.subr.mxu0 0.0
    %1758 = vmatpush2.msra.mxu0 0.0
    %1759 = vmatprep.subr.mxu0 0.0
    %1760 = vmatpush2.msra.mxu0 0.0
    %1761 = vmatprep.subr.mxu0 0.0
    %1762 = vmatpush2.msra.mxu0 0.0
    %1763 = vmatprep.subr.mxu0 0.0
    %1764 = vmatpush2.msra.mxu0 0.0
    %1765 = vmatprep.subr.mxu0 0.0
    %1766 = vmatpush2.msra.mxu0 0.0
    %1767 = vmatprep.subr.mxu0 0.0
    %1768 = vmatpush2.msra.mxu0 0.0
    %1769 = vmatprep.subr.mxu0 0.0
    %1770 = vmatpush2.msra.mxu0 0.0
    %1771 = vmatprep.subr.mxu0 0.0
    %1772 = vmatpush2.msra.mxu0 0.0
    %1773 = vmatprep.subr.mxu0 0.0
    %1774 = vmatpush2.msra.mxu0 0.0
    %1775 = vmatprep.subr.mxu0 0.0
    %1776 = vmatpush2.msra.mxu0 0.0
    %1777 = vmatprep.subr.mxu0 0.0
    %1778 = vmatpush2.msra.mxu0 0.0
    %1779 = vmatprep.subr.mxu0 0.0
    %1780 = vmatpush2.msra.mxu0 0.0
    %1781 = vmatprep.subr.mxu0 0.0
    %1782 = vmatpush2.msra.mxu0 0.0
    %1783 = vmatprep.mubr.f32.mxu0 0.0
    %1784 = vmatmul.mubr.f32.gmra.mxu0 %v1708
    %v1785 = vpop.f32.mrf.mxu0
    %v1786 = vadd.f32 %v1686, %v1785
    %v1787 = vpop.f32.mrf.mxu0
    %1788 = vmatprep.mubr.f32.mxu0 0.0
    %1789 = vmatmul.mubr.f32.gmra.mxu0 %v1711
    %v1790 = vpop.f32.mrf.mxu0
    %v1791 = vadd.f32 %v1691, %v1790
    %v1792 = vpop.f32.mrf.mxu0
    %1793 = vmatprep.mubr.f32.mxu0 0.0
    %1794 = vmatmul.mubr.f32.gmra.mxu0 %v1714
    %v1795 = vpop.f32.mrf.mxu0
    %v1796 = vadd.f32 %v1696, %v1795
    %v1797 = vpop.f32.mrf.mxu0
    %1798 = vmatprep.mubr.f32.mxu0 0.0
    %1799 = vmatmul.mubr.f32.gmra.mxu0 %v1717
    %v1800 = vpop.f32.mrf.mxu0
    %v1801 = vadd.f32 %v1701, %v1800
    %v1802 = vpop.f32.mrf.mxu0
    %1803 = vdwg.mxu0
    %1804 = vrot.lane.b32.xlu0 %v156, 112
    %v1805 = vpop.permute.xlu0 %1804
    %1806 = vrot.lane.b32.xlu0 %v273, 112
    %v1807 = vpop.permute.xlu0 %1806
    %v1808 = vsel %vm291, %v1805, 0
    %v1810 = vsel %vm291, %v1807, 0
    %1812 = vmatprep.subr.mxu0 0.0
    %1813 = vmatpush1.xpose.msra.mxu0 0.0
    %1814 = vmatprep.subr.mxu0 0.0
    %1815 = vmatpush1.xpose.msra.mxu0 0.0
    %1816 = vmatprep.subr.mxu0 0.0
    %1817 = vmatpush1.xpose.msra.mxu0 0.0
    %1818 = vmatprep.subr.mxu0 0.0
    %1819 = vmatpush1.xpose.msra.mxu0 0.0
    %1820 = vmatprep.subr.mxu0 0.0
    %1821 = vmatpush1.xpose.msra.mxu0 0.0
    %1822 = vmatprep.subr.mxu0 0.0
    %1823 = vmatpush1.xpose.msra.mxu0 0.0
    %1824 = vmatprep.subr.mxu0 0.0
    %1825 = vmatpush1.xpose.msra.mxu0 0.0
    %1826 = vmatprep.subr.mxu0 0.0
    %1827 = vmatpush1.xpose.msra.mxu0 0.0
    %1828 = vmatprep.subr.mxu0 0.0
    %1829 = vmatpush1.xpose.msra.mxu0 0.0
    %1830 = vmatprep.subr.mxu0 0.0
    %1831 = vmatpush1.xpose.msra.mxu0 0.0
    %1832 = vmatprep.subr.mxu0 0.0
    %1833 = vmatpush1.xpose.msra.mxu0 0.0
    %1834 = vmatprep.subr.mxu0 0.0
    %1835 = vmatpush1.xpose.msra.mxu0 0.0
    %1836 = vmatprep.subr.mxu0 0.0
    %1837 = vmatpush1.xpose.msra.mxu0 0.0
    %1838 = vmatprep.subr.mxu0 0.0
    %1839 = vmatpush1.xpose.msra.mxu0 0.0
    %1840 = vmatprep.subr.mxu0 0.0
    %1841 = vmatpush1.xpose.msra.mxu0 0.0
    %1842 = vmatprep.subr.mxu0 0.0
    %1843 = vmatpush1.xpose.msra.mxu0 %v1810
    %1844 = vmatprep.subr.mxu0 0.0
    %1845 = vmatpush2.xpose.msra.mxu0 0.0
    %1846 = vmatprep.subr.mxu0 0.0
    %1847 = vmatpush2.xpose.msra.mxu0 0.0
    %1848 = vmatprep.subr.mxu0 0.0
    %1849 = vmatpush2.xpose.msra.mxu0 0.0
    %1850 = vmatprep.subr.mxu0 0.0
    %1851 = vmatpush2.xpose.msra.mxu0 0.0
    %1852 = vmatprep.subr.mxu0 0.0
    %1853 = vmatpush2.xpose.msra.mxu0 0.0
    %1854 = vmatprep.subr.mxu0 0.0
    %1855 = vmatpush2.xpose.msra.mxu0 0.0
    %1856 = vmatprep.subr.mxu0 0.0
    %1857 = vmatpush2.xpose.msra.mxu0 0.0
    %1858 = vmatprep.subr.mxu0 0.0
    %1859 = vmatpush2.xpose.msra.mxu0 0.0
    %1860 = vmatprep.subr.mxu0 0.0
    %1861 = vmatpush2.xpose.msra.mxu0 0.0
    %1862 = vmatprep.subr.mxu0 0.0
    %1863 = vmatpush2.xpose.msra.mxu0 0.0
    %1864 = vmatprep.subr.mxu0 0.0
    %1865 = vmatpush2.xpose.msra.mxu0 0.0
    %1866 = vmatprep.subr.mxu0 0.0
    %1867 = vmatpush2.xpose.msra.mxu0 0.0
    %1868 = vmatprep.subr.mxu0 0.0
    %1869 = vmatpush2.xpose.msra.mxu0 0.0
    %1870 = vmatprep.subr.mxu0 0.0
    %1871 = vmatpush2.xpose.msra.mxu0 0.0
    %1872 = vmatprep.subr.mxu0 0.0
    %1873 = vmatpush2.xpose.msra.mxu0 0.0
    %1874 = vmatprep.subr.mxu0 0.0
    %1875 = vmatpush2.xpose.msra.mxu0 0.0
    %1876 = vmatprep.mubr.f32.mxu0 0.0
    %1877 = vmatmul.mubr.f32.gmra.mxu0 %v1808
    %v1878 = vpop.f32.mrf.mxu0
    %v1879 = vadd.f32 0.0, %v1878
    %v1880 = vpop.f32.mrf.mxu0
    %1881 = vdwg.mxu0
    %1882 = vrot.lane.b32.xlu0 %v161, 112
    %v1883 = vpop.permute.xlu0 %1882
    %1884 = vrot.lane.b32.xlu0 %v278, 112
    %v1885 = vpop.permute.xlu0 %1884
    %v1886 = vsel %vm291, %v1883, 0
    %v1888 = vsel %vm291, %v1885, 0
    %1890 = vmatprep.subr.mxu0 0.0
    %1891 = vmatpush1.xpose.msra.mxu0 0.0
    %1892 = vmatprep.subr.mxu0 0.0
    %1893 = vmatpush1.xpose.msra.mxu0 0.0
    %1894 = vmatprep.subr.mxu0 0.0
    %1895 = vmatpush1.xpose.msra.mxu0 0.0
    %1896 = vmatprep.subr.mxu0 0.0
    %1897 = vmatpush1.xpose.msra.mxu0 0.0
    %1898 = vmatprep.subr.mxu0 0.0
    %1899 = vmatpush1.xpose.msra.mxu0 0.0
    %1900 = vmatprep.subr.mxu0 0.0
    %1901 = vmatpush1.xpose.msra.mxu0 0.0
    %1902 = vmatprep.subr.mxu0 0.0
    %1903 = vmatpush1.xpose.msra.mxu0 0.0
    %1904 = vmatprep.subr.mxu0 0.0
    %1905 = vmatpush1.xpose.msra.mxu0 0.0
    %1906 = vmatprep.subr.mxu0 0.0
    %1907 = vmatpush1.xpose.msra.mxu0 0.0
    %1908 = vmatprep.subr.mxu0 0.0
    %1909 = vmatpush1.xpose.msra.mxu0 0.0
    %1910 = vmatprep.subr.mxu0 0.0
    %1911 = vmatpush1.xpose.msra.mxu0 0.0
    %1912 = vmatprep.subr.mxu0 0.0
    %1913 = vmatpush1.xpose.msra.mxu0 0.0
    %1914 = vmatprep.subr.mxu0 0.0
    %1915 = vmatpush1.xpose.msra.mxu0 0.0
    %1916 = vmatprep.subr.mxu0 0.0
    %1917 = vmatpush1.xpose.msra.mxu0 0.0
    %1918 = vmatprep.subr.mxu0 0.0
    %1919 = vmatpush1.xpose.msra.mxu0 0.0
    %1920 = vmatprep.subr.mxu0 0.0
    %1921 = vmatpush1.xpose.msra.mxu0 %v1888
    %1922 = vmatprep.subr.mxu0 0.0
    %1923 = vmatpush2.xpose.msra.mxu0 0.0
    %1924 = vmatprep.subr.mxu0 0.0
    %1925 = vmatpush2.xpose.msra.mxu0 0.0
    %1926 = vmatprep.subr.mxu0 0.0
    %1927 = vmatpush2.xpose.msra.mxu0 0.0
    %1928 = vmatprep.subr.mxu0 0.0
    %1929 = vmatpush2.xpose.msra.mxu0 0.0
    %1930 = vmatprep.subr.mxu0 0.0
    %1931 = vmatpush2.xpose.msra.mxu0 0.0
    %1932 = vmatprep.subr.mxu0 0.0
    %1933 = vmatpush2.xpose.msra.mxu0 0.0
    %1934 = vmatprep.subr.mxu0 0.0
    %1935 = vmatpush2.xpose.msra.mxu0 0.0
    %1936 = vmatprep.subr.mxu0 0.0
    %1937 = vmatpush2.xpose.msra.mxu0 0.0
    %1938 = vmatprep.subr.mxu0 0.0
    %1939 = vmatpush2.xpose.msra.mxu0 0.0
    %1940 = vmatprep.subr.mxu0 0.0
    %1941 = vmatpush2.xpose.msra.mxu0 0.0
    %1942 = vmatprep.subr.mxu0 0.0
    %1943 = vmatpush2.xpose.msra.mxu0 0.0
    %1944 = vmatprep.subr.mxu0 0.0
    %1945 = vmatpush2.xpose.msra.mxu0 0.0
    %1946 = vmatprep.subr.mxu0 0.0
    %1947 = vmatpush2.xpose.msra.mxu0 0.0
    %1948 = vmatprep.subr.mxu0 0.0
    %1949 = vmatpush2.xpose.msra.mxu0 0.0
    %1950 = vmatprep.subr.mxu0 0.0
    %1951 = vmatpush2.xpose.msra.mxu0 0.0
    %1952 = vmatprep.subr.mxu0 0.0
    %1953 = vmatpush2.xpose.msra.mxu0 0.0
    %1954 = vmatprep.mubr.f32.mxu0 0.0
    %1955 = vmatmul.mubr.f32.gmra.mxu0 %v1886
    %v1956 = vpop.f32.mrf.mxu0
    %v1957 = vadd.f32 0.0, %v1956
    %v1958 = vpop.f32.mrf.mxu0
    %1959 = vdwg.mxu0
    %1960 = vrot.lane.b32.xlu0 %v166, 112
    %v1961 = vpop.permute.xlu0 %1960
    %1962 = vrot.lane.b32.xlu0 %v283, 112
    %v1963 = vpop.permute.xlu0 %1962
    %v1964 = vsel %vm291, %v1961, 0
    %v1966 = vsel %vm291, %v1963, 0
    %1968 = vmatprep.subr.mxu0 0.0
    %1969 = vmatpush1.xpose.msra.mxu0 0.0
    %1970 = vmatprep.subr.mxu0 0.0
    %1971 = vmatpush1.xpose.msra.mxu0 0.0
    %1972 = vmatprep.subr.mxu0 0.0
    %1973 = vmatpush1.xpose.msra.mxu0 0.0
    %1974 = vmatprep.subr.mxu0 0.0
    %1975 = vmatpush1.xpose.msra.mxu0 0.0
    %1976 = vmatprep.subr.mxu0 0.0
    %1977 = vmatpush1.xpose.msra.mxu0 0.0
    %1978 = vmatprep.subr.mxu0 0.0
    %1979 = vmatpush1.xpose.msra.mxu0 0.0
    %1980 = vmatprep.subr.mxu0 0.0
    %1981 = vmatpush1.xpose.msra.mxu0 0.0
    %1982 = vmatprep.subr.mxu0 0.0
    %1983 = vmatpush1.xpose.msra.mxu0 0.0
    %1984 = vmatprep.subr.mxu0 0.0
    %1985 = vmatpush1.xpose.msra.mxu0 0.0
    %1986 = vmatprep.subr.mxu0 0.0
    %1987 = vmatpush1.xpose.msra.mxu0 0.0
    %1988 = vmatprep.subr.mxu0 0.0
    %1989 = vmatpush1.xpose.msra.mxu0 0.0
    %1990 = vmatprep.subr.mxu0 0.0
    %1991 = vmatpush1.xpose.msra.mxu0 0.0
    %1992 = vmatprep.subr.mxu0 0.0
    %1993 = vmatpush1.xpose.msra.mxu0 0.0
    %1994 = vmatprep.subr.mxu0 0.0
    %1995 = vmatpush1.xpose.msra.mxu0 0.0
    %1996 = vmatprep.subr.mxu0 0.0
    %1997 = vmatpush1.xpose.msra.mxu0 0.0
    %1998 = vmatprep.subr.mxu0 0.0
    %1999 = vmatpush1.xpose.msra.mxu0 %v1966
    %2000 = vmatprep.subr.mxu0 0.0
    %2001 = vmatpush2.xpose.msra.mxu0 0.0
    %2002 = vmatprep.subr.mxu0 0.0
    %2003 = vmatpush2.xpose.msra.mxu0 0.0
    %2004 = vmatprep.subr.mxu0 0.0
    %2005 = vmatpush2.xpose.msra.mxu0 0.0
    %2006 = vmatprep.subr.mxu0 0.0
    %2007 = vmatpush2.xpose.msra.mxu0 0.0
    %2008 = vmatprep.subr.mxu0 0.0
    %2009 = vmatpush2.xpose.msra.mxu0 0.0
    %2010 = vmatprep.subr.mxu0 0.0
    %2011 = vmatpush2.xpose.msra.mxu0 0.0
    %2012 = vmatprep.subr.mxu0 0.0
    %2013 = vmatpush2.xpose.msra.mxu0 0.0
    %2014 = vmatprep.subr.mxu0 0.0
    %2015 = vmatpush2.xpose.msra.mxu0 0.0
    %2016 = vmatprep.subr.mxu0 0.0
    %2017 = vmatpush2.xpose.msra.mxu0 0.0
    %2018 = vmatprep.subr.mxu0 0.0
    %2019 = vmatpush2.xpose.msra.mxu0 0.0
    %2020 = vmatprep.subr.mxu0 0.0
    %2021 = vmatpush2.xpose.msra.mxu0 0.0
    %2022 = vmatprep.subr.mxu0 0.0
    %2023 = vmatpush2.xpose.msra.mxu0 0.0
    %2024 = vmatprep.subr.mxu0 0.0
    %2025 = vmatpush2.xpose.msra.mxu0 0.0
    %2026 = vmatprep.subr.mxu0 0.0
    %2027 = vmatpush2.xpose.msra.mxu0 0.0
    %2028 = vmatprep.subr.mxu0 0.0
    %2029 = vmatpush2.xpose.msra.mxu0 0.0
    %2030 = vmatprep.subr.mxu0 0.0
    %2031 = vmatpush2.xpose.msra.mxu0 0.0
    %2032 = vmatprep.mubr.f32.mxu0 0.0
    %2033 = vmatmul.mubr.f32.gmra.mxu0 %v1964
    %v2034 = vpop.f32.mrf.mxu0
    %v2035 = vadd.f32 0.0, %v2034
    %v2036 = vpop.f32.mrf.mxu0
    %2037 = vdwg.mxu0
    %2038 = vrot.lane.b32.xlu0 %v171, 112
    %v2039 = vpop.permute.xlu0 %2038
    %2040 = vrot.lane.b32.xlu0 %v288, 112
    %v2041 = vpop.permute.xlu0 %2040
    %v2042 = vsel %vm291, %v2039, 0
    %v2044 = vsel %vm291, %v2041, 0
    %2046 = vmatprep.subr.mxu0 0.0
    %2047 = vmatpush1.xpose.msra.mxu0 0.0
    %2048 = vmatprep.subr.mxu0 0.0
    %2049 = vmatpush1.xpose.msra.mxu0 0.0
    %2050 = vmatprep.subr.mxu0 0.0
    %2051 = vmatpush1.xpose.msra.mxu0 0.0
    %2052 = vmatprep.subr.mxu0 0.0
    %2053 = vmatpush1.xpose.msra.mxu0 0.0
    %2054 = vmatprep.subr.mxu0 0.0
    %2055 = vmatpush1.xpose.msra.mxu0 0.0
    %2056 = vmatprep.subr.mxu0 0.0
    %2057 = vmatpush1.xpose.msra.mxu0 0.0
    %2058 = vmatprep.subr.mxu0 0.0
    %2059 = vmatpush1.xpose.msra.mxu0 0.0
    %2060 = vmatprep.subr.mxu0 0.0
    %2061 = vmatpush1.xpose.msra.mxu0 0.0
    %2062 = vmatprep.subr.mxu0 0.0
    %2063 = vmatpush1.xpose.msra.mxu0 0.0
    %2064 = vmatprep.subr.mxu0 0.0
    %2065 = vmatpush1.xpose.msra.mxu0 0.0
    %2066 = vmatprep.subr.mxu0 0.0
    %2067 = vmatpush1.xpose.msra.mxu0 0.0
    %2068 = vmatprep.subr.mxu0 0.0
    %2069 = vmatpush1.xpose.msra.mxu0 0.0
    %2070 = vmatprep.subr.mxu0 0.0
    %2071 = vmatpush1.xpose.msra.mxu0 0.0
    %2072 = vmatprep.subr.mxu0 0.0
    %2073 = vmatpush1.xpose.msra.mxu0 0.0
    %2074 = vmatprep.subr.mxu0 0.0
    %2075 = vmatpush1.xpose.msra.mxu0 0.0
    %2076 = vmatprep.subr.mxu0 0.0
    %2077 = vmatpush1.xpose.msra.mxu0 %v2044
    %2078 = vmatprep.subr.mxu0 0.0
    %2079 = vmatpush2.xpose.msra.mxu0 0.0
    %2080 = vmatprep.subr.mxu0 0.0
    %2081 = vmatpush2.xpose.msra.mxu0 0.0
    %2082 = vmatprep.subr.mxu0 0.0
    %2083 = vmatpush2.xpose.msra.mxu0 0.0
    %2084 = vmatprep.subr.mxu0 0.0
    %2085 = vmatpush2.xpose.msra.mxu0 0.0
    %2086 = vmatprep.subr.mxu0 0.0
    %2087 = vmatpush2.xpose.msra.mxu0 0.0
    %2088 = vmatprep.subr.mxu0 0.0
    %2089 = vmatpush2.xpose.msra.mxu0 0.0
    %2090 = vmatprep.subr.mxu0 0.0
    %2091 = vmatpush2.xpose.msra.mxu0 0.0
    %2092 = vmatprep.subr.mxu0 0.0
    %2093 = vmatpush2.xpose.msra.mxu0 0.0
    %2094 = vmatprep.subr.mxu0 0.0
    %2095 = vmatpush2.xpose.msra.mxu0 0.0
    %2096 = vmatprep.subr.mxu0 0.0
    %2097 = vmatpush2.xpose.msra.mxu0 0.0
    %2098 = vmatprep.subr.mxu0 0.0
    %2099 = vmatpush2.xpose.msra.mxu0 0.0
    %2100 = vmatprep.subr.mxu0 0.0
    %2101 = vmatpush2.xpose.msra.mxu0 0.0
    %2102 = vmatprep.subr.mxu0 0.0
    %2103 = vmatpush2.xpose.msra.mxu0 0.0
    %2104 = vmatprep.subr.mxu0 0.0
    %2105 = vmatpush2.xpose.msra.mxu0 0.0
    %2106 = vmatprep.subr.mxu0 0.0
    %2107 = vmatpush2.xpose.msra.mxu0 0.0
    %2108 = vmatprep.subr.mxu0 0.0
    %2109 = vmatpush2.xpose.msra.mxu0 0.0
    %2110 = vmatprep.mubr.f32.mxu0 0.0
    %2111 = vmatmul.mubr.f32.gmra.mxu0 %v2042
    %v2112 = vpop.f32.mrf.mxu0
    %v2113 = vadd.f32 0.0, %v2112
    %v2114 = vpop.f32.mrf.mxu0
    %2115 = vdwg.mxu0
    %v2116 = vsel %vm291, %v1879, -inf
    %2117 = vmax.xlane.f32.xlu0 %v2116
    %v2118 = vpop.xlane.xlu0 %2117
    %v2119 = vsel %vm291, %v1957, -inf
    %2120 = vmax.xlane.f32.xlu0 %v2119
    %v2121 = vpop.xlane.xlu0 %2120
    %v2122 = vsel %vm291, %v2035, -inf
    %2123 = vmax.xlane.f32.xlu0 %v2122
    %v2124 = vpop.xlane.xlu0 %2123
    %v2125 = vsel %vm291, %v2113, -inf
    %2126 = vmax.xlane.f32.xlu0 %v2125
    %v2127 = vpop.xlane.xlu0 %2126
    %v2128 = vsub.f32 %v1879, %v2118
    %v2129 = vsub.f32 %v1957, %v2121
    %v2130 = vsub.f32 %v2035, %v2124
    %v2131 = vsub.f32 %v2113, %v2127
    %v2132 = vmul.f32 %v2128, 1.442695
    %v2133 = vpow.pop %v2132
    %v2134 = vmul.f32 %v2129, 1.442695
    %v2135 = vpow.pop %v2134
    %v2136 = vmul.f32 %v2130, 1.442695
    %v2137 = vpow.pop %v2136
    %v2138 = vmul.f32 %v2131, 1.442695
    %v2139 = vpow.pop %v2138
    %v2140 = vsel %vm291, %v2133, 0.0
    %2141 = vadd.xlane.f32.xlu0 %v2140
    %v2142 = vpop.xlane.xlu0 %2141
    %v2143 = vsel %vm291, %v2135, 0.0
    %2144 = vadd.xlane.f32.xlu0 %v2143
    %v2145 = vpop.xlane.xlu0 %2144
    %v2146 = vsel %vm291, %v2137, 0.0
    %2147 = vadd.xlane.f32.xlu0 %v2146
    %v2148 = vpop.xlane.xlu0 %2147
    %v2149 = vsel %vm291, %v2139, 0.0
    %2150 = vadd.xlane.f32.xlu0 %v2149
    %v2151 = vpop.xlane.xlu0 %2150
    %2152 = vrot.lane.b32.xlu0 %v273, 80
    %v2153 = vpop.permute.xlu0 %2152
    %v2156 = vsel %vm291, %v2133, 0
    %2158 = vmatprep.subr.mxu0 0.0
    %2159 = vmatpush1.msra.mxu0 0.0
    %2160 = vmatprep.subr.mxu0 0.0
    %2161 = vmatpush1.msra.mxu0 0.0
    %2162 = vmatprep.subr.mxu0 0.0
    %2163 = vmatpush1.msra.mxu0 0.0
    %2164 = vmatprep.subr.mxu0 0.0
    %2165 = vmatpush1.msra.mxu0 0.0
    %2166 = vmatprep.subr.mxu0 0.0
    %2167 = vmatpush1.msra.mxu0 0.0
    %2168 = vmatprep.subr.mxu0 0.0
    %2169 = vmatpush1.msra.mxu0 0.0
    %2170 = vmatprep.subr.mxu0 0.0
    %2171 = vmatpush1.msra.mxu0 0.0
    %2172 = vmatprep.subr.mxu0 0.0
    %2173 = vmatpush1.msra.mxu0 0.0
    %2174 = vmatprep.subr.mxu0 0.0
    %2175 = vmatpush1.msra.mxu0 0.0
    %2176 = vmatprep.subr.mxu0 0.0
    %2177 = vmatpush1.msra.mxu0 0.0
    %2178 = vmatprep.subr.mxu0 0.0
    %2179 = vmatpush1.msra.mxu0 0.0
    %2180 = vmatprep.subr.mxu0 0.0
    %2181 = vmatpush1.msra.mxu0 0.0
    %2182 = vmatprep.subr.mxu0 0.0
    %2183 = vmatpush1.msra.mxu0 0.0
    %2184 = vmatprep.subr.mxu0 0.0
    %2185 = vmatpush1.msra.mxu0 0.0
    %2186 = vmatprep.subr.mxu0 0.0
    %2187 = vmatpush1.msra.mxu0 0.0
    %2188 = vmatprep.subr.mxu0 0.0
    %2189 = vmatpush1.msra.mxu0 %v2153
    %2190 = vmatprep.subr.mxu0 0.0
    %2191 = vmatpush2.msra.mxu0 0.0
    %2192 = vmatprep.subr.mxu0 0.0
    %2193 = vmatpush2.msra.mxu0 0.0
    %2194 = vmatprep.subr.mxu0 0.0
    %2195 = vmatpush2.msra.mxu0 0.0
    %2196 = vmatprep.subr.mxu0 0.0
    %2197 = vmatpush2.msra.mxu0 0.0
    %2198 = vmatprep.subr.mxu0 0.0
    %2199 = vmatpush2.msra.mxu0 0.0
    %2200 = vmatprep.subr.mxu0 0.0
    %2201 = vmatpush2.msra.mxu0 0.0
    %2202 = vmatprep.subr.mxu0 0.0
    %2203 = vmatpush2.msra.mxu0 0.0
    %2204 = vmatprep.subr.mxu0 0.0
    %2205 = vmatpush2.msra.mxu0 0.0
    %2206 = vmatprep.subr.mxu0 0.0
    %2207 = vmatpush2.msra.mxu0 0.0
    %2208 = vmatprep.subr.mxu0 0.0
    %2209 = vmatpush2.msra.mxu0 0.0
    %2210 = vmatprep.subr.mxu0 0.0
    %2211 = vmatpush2.msra.mxu0 0.0
    %2212 = vmatprep.subr.mxu0 0.0
    %2213 = vmatpush2.msra.mxu0 0.0
    %2214 = vmatprep.subr.mxu0 0.0
    %2215 = vmatpush2.msra.mxu0 0.0
    %2216 = vmatprep.subr.mxu0 0.0
    %2217 = vmatpush2.msra.mxu0 0.0
    %2218 = vmatprep.subr.mxu0 0.0
    %2219 = vmatpush2.msra.mxu0 0.0
    %2220 = vmatprep.subr.mxu0 0.0
    %2221 = vmatpush2.msra.mxu0 0.0
    %2222 = vmatprep.mubr.f32.mxu0 0.0
    %2223 = vmatmul.mubr.f32.gmra.mxu0 %v2156
    %v2224 = vpop.f32.mrf.mxu0
    %v2225 = vadd.f32 0.0, %v2224
    %v2226 = vpop.f32.mrf.mxu0
    %2227 = vdwg.mxu0
    %2228 = vrot.lane.b32.xlu0 %v278, 80
    %v2229 = vpop.permute.xlu0 %2228
    %v2232 = vsel %vm291, %v2135, 0
    %2234 = vmatprep.subr.mxu0 0.0
    %2235 = vmatpush1.msra.mxu0 0.0
    %2236 = vmatprep.subr.mxu0 0.0
    %2237 = vmatpush1.msra.mxu0 0.0
    %2238 = vmatprep.subr.mxu0 0.0
    %2239 = vmatpush1.msra.mxu0 0.0
    %2240 = vmatprep.subr.mxu0 0.0
    %2241 = vmatpush1.msra.mxu0 0.0
    %2242 = vmatprep.subr.mxu0 0.0
    %2243 = vmatpush1.msra.mxu0 0.0
    %2244 = vmatprep.subr.mxu0 0.0
    %2245 = vmatpush1.msra.mxu0 0.0
    %2246 = vmatprep.subr.mxu0 0.0
    %2247 = vmatpush1.msra.mxu0 0.0
    %2248 = vmatprep.subr.mxu0 0.0
    %2249 = vmatpush1.msra.mxu0 0.0
    %2250 = vmatprep.subr.mxu0 0.0
    %2251 = vmatpush1.msra.mxu0 0.0
    %2252 = vmatprep.subr.mxu0 0.0
    %2253 = vmatpush1.msra.mxu0 0.0
    %2254 = vmatprep.subr.mxu0 0.0
    %2255 = vmatpush1.msra.mxu0 0.0
    %2256 = vmatprep.subr.mxu0 0.0
    %2257 = vmatpush1.msra.mxu0 0.0
    %2258 = vmatprep.subr.mxu0 0.0
    %2259 = vmatpush1.msra.mxu0 0.0
    %2260 = vmatprep.subr.mxu0 0.0
    %2261 = vmatpush1.msra.mxu0 0.0
    %2262 = vmatprep.subr.mxu0 0.0
    %2263 = vmatpush1.msra.mxu0 0.0
    %2264 = vmatprep.subr.mxu0 0.0
    %2265 = vmatpush1.msra.mxu0 %v2229
    %2266 = vmatprep.subr.mxu0 0.0
    %2267 = vmatpush2.msra.mxu0 0.0
    %2268 = vmatprep.subr.mxu0 0.0
    %2269 = vmatpush2.msra.mxu0 0.0
    %2270 = vmatprep.subr.mxu0 0.0
    %2271 = vmatpush2.msra.mxu0 0.0
    %2272 = vmatprep.subr.mxu0 0.0
    %2273 = vmatpush2.msra.mxu0 0.0
    %2274 = vmatprep.subr.mxu0 0.0
    %2275 = vmatpush2.msra.mxu0 0.0
    %2276 = vmatprep.subr.mxu0 0.0
    %2277 = vmatpush2.msra.mxu0 0.0
    %2278 = vmatprep.subr.mxu0 0.0
    %2279 = vmatpush2.msra.mxu0 0.0
    %2280 = vmatprep.subr.mxu0 0.0
    %2281 = vmatpush2.msra.mxu0 0.0
    %2282 = vmatprep.subr.mxu0 0.0
    %2283 = vmatpush2.msra.mxu0 0.0
    %2284 = vmatprep.subr.mxu0 0.0
    %2285 = vmatpush2.msra.mxu0 0.0
    %2286 = vmatprep.subr.mxu0 0.0
    %2287 = vmatpush2.msra.mxu0 0.0
    %2288 = vmatprep.subr.mxu0 0.0
    %2289 = vmatpush2.msra.mxu0 0.0
    %2290 = vmatprep.subr.mxu0 0.0
    %2291 = vmatpush2.msra.mxu0 0.0
    %2292 = vmatprep.subr.mxu0 0.0
    %2293 = vmatpush2.msra.mxu0 0.0
    %2294 = vmatprep.subr.mxu0 0.0
    %2295 = vmatpush2.msra.mxu0 0.0
    %2296 = vmatprep.subr.mxu0 0.0
    %2297 = vmatpush2.msra.mxu0 0.0
    %2298 = vmatprep.mubr.f32.mxu0 0.0
    %2299 = vmatmul.mubr.f32.gmra.mxu0 %v2232
    %v2300 = vpop.f32.mrf.mxu0
    %v2301 = vadd.f32 0.0, %v2300
    %v2302 = vpop.f32.mrf.mxu0
    %2303 = vdwg.mxu0
    %2304 = vrot.lane.b32.xlu0 %v283, 80
    %v2305 = vpop.permute.xlu0 %2304
    %v2308 = vsel %vm291, %v2137, 0
    %2310 = vmatprep.subr.mxu0 0.0
    %2311 = vmatpush1.msra.mxu0 0.0
    %2312 = vmatprep.subr.mxu0 0.0
    %2313 = vmatpush1.msra.mxu0 0.0
    %2314 = vmatprep.subr.mxu0 0.0
    %2315 = vmatpush1.msra.mxu0 0.0
    %2316 = vmatprep.subr.mxu0 0.0
    %2317 = vmatpush1.msra.mxu0 0.0
    %2318 = vmatprep.subr.mxu0 0.0
    %2319 = vmatpush1.msra.mxu0 0.0
    %2320 = vmatprep.subr.mxu0 0.0
    %2321 = vmatpush1.msra.mxu0 0.0
    %2322 = vmatprep.subr.mxu0 0.0
    %2323 = vmatpush1.msra.mxu0 0.0
    %2324 = vmatprep.subr.mxu0 0.0
    %2325 = vmatpush1.msra.mxu0 0.0
    %2326 = vmatprep.subr.mxu0 0.0
    %2327 = vmatpush1.msra.mxu0 0.0
    %2328 = vmatprep.subr.mxu0 0.0
    %2329 = vmatpush1.msra.mxu0 0.0
    %2330 = vmatprep.subr.mxu0 0.0
    %2331 = vmatpush1.msra.mxu0 0.0
    %2332 = vmatprep.subr.mxu0 0.0
    %2333 = vmatpush1.msra.mxu0 0.0
    %2334 = vmatprep.subr.mxu0 0.0
    %2335 = vmatpush1.msra.mxu0 0.0
    %2336 = vmatprep.subr.mxu0 0.0
    %2337 = vmatpush1.msra.mxu0 0.0
    %2338 = vmatprep.subr.mxu0 0.0
    %2339 = vmatpush1.msra.mxu0 0.0
    %2340 = vmatprep.subr.mxu0 0.0
    %2341 = vmatpush1.msra.mxu0 %v2305
    %2342 = vmatprep.subr.mxu0 0.0
    %2343 = vmatpush2.msra.mxu0 0.0
    %2344 = vmatprep.subr.mxu0 0.0
    %2345 = vmatpush2.msra.mxu0 0.0
    %2346 = vmatprep.subr.mxu0 0.0
    %2347 = vmatpush2.msra.mxu0 0.0
    %2348 = vmatprep.subr.mxu0 0.0
    %2349 = vmatpush2.msra.mxu0 0.0
    %2350 = vmatprep.subr.mxu0 0.0
    %2351 = vmatpush2.msra.mxu0 0.0
    %2352 = vmatprep.subr.mxu0 0.0
    %2353 = vmatpush2.msra.mxu0 0.0
    %2354 = vmatprep.subr.mxu0 0.0
    %2355 = vmatpush2.msra.mxu0 0.0
    %2356 = vmatprep.subr.mxu0 0.0
    %2357 = vmatpush2.msra.mxu0 0.0
    %2358 = vmatprep.subr.mxu0 0.0
    %2359 = vmatpush2.msra.mxu0 0.0
    %2360 = vmatprep.subr.mxu0 0.0
    %2361 = vmatpush2.msra.mxu0 0.0
    %2362 = vmatprep.subr.mxu0 0.0
    %2363 = vmatpush2.msra.mxu0 0.0
    %2364 = vmatprep.subr.mxu0 0.0
    %2365 = vmatpush2.msra.mxu0 0.0
    %2366 = vmatprep.subr.mxu0 0.0
    %2367 = vmatpush2.msra.mxu0 0.0
    %2368 = vmatprep.subr.mxu0 0.0
    %2369 = vmatpush2.msra.mxu0 0.0
    %2370 = vmatprep.subr.mxu0 0.0
    %2371 = vmatpush2.msra.mxu0 0.0
    %2372 = vmatprep.subr.mxu0 0.0
    %2373 = vmatpush2.msra.mxu0 0.0
    %2374 = vmatprep.mubr.f32.mxu0 0.0
    %2375 = vmatmul.mubr.f32.gmra.mxu0 %v2308
    %v2376 = vpop.f32.mrf.mxu0
    %v2377 = vadd.f32 0.0, %v2376
    %v2378 = vpop.f32.mrf.mxu0
    %2379 = vdwg.mxu0
    %2380 = vrot.lane.b32.xlu0 %v288, 80
    %v2381 = vpop.permute.xlu0 %2380
    %v2384 = vsel %vm291, %v2139, 0
    %2386 = vmatprep.subr.mxu0 0.0
    %2387 = vmatpush1.msra.mxu0 0.0
    %2388 = vmatprep.subr.mxu0 0.0
    %2389 = vmatpush1.msra.mxu0 0.0
    %2390 = vmatprep.subr.mxu0 0.0
    %2391 = vmatpush1.msra.mxu0 0.0
    %2392 = vmatprep.subr.mxu0 0.0
    %2393 = vmatpush1.msra.mxu0 0.0
    %2394 = vmatprep.subr.mxu0 0.0
    %2395 = vmatpush1.msra.mxu0 0.0
    %2396 = vmatprep.subr.mxu0 0.0
    %2397 = vmatpush1.msra.mxu0 0.0
    %2398 = vmatprep.subr.mxu0 0.0
    %2399 = vmatpush1.msra.mxu0 0.0
    %2400 = vmatprep.subr.mxu0 0.0
    %2401 = vmatpush1.msra.mxu0 0.0
    %2402 = vmatprep.subr.mxu0 0.0
    %2403 = vmatpush1.msra.mxu0 0.0
    %2404 = vmatprep.subr.mxu0 0.0
    %2405 = vmatpush1.msra.mxu0 0.0
    %2406 = vmatprep.subr.mxu0 0.0
    %2407 = vmatpush1.msra.mxu0 0.0
    %2408 = vmatprep.subr.mxu0 0.0
    %2409 = vmatpush1.msra.mxu0 0.0
    %2410 = vmatprep.subr.mxu0 0.0
    %2411 = vmatpush1.msra.mxu0 0.0
    %2412 = vmatprep.subr.mxu0 0.0
    %2413 = vmatpush1.msra.mxu0 0.0
    %2414 = vmatprep.subr.mxu0 0.0
    %2415 = vmatpush1.msra.mxu0 0.0
    %2416 = vmatprep.subr.mxu0 0.0
    %2417 = vmatpush1.msra.mxu0 %v2381
    %2418 = vmatprep.subr.mxu0 0.0
    %2419 = vmatpush2.msra.mxu0 0.0
    %2420 = vmatprep.subr.mxu0 0.0
    %2421 = vmatpush2.msra.mxu0 0.0
    %2422 = vmatprep.subr.mxu0 0.0
    %2423 = vmatpush2.msra.mxu0 0.0
    %2424 = vmatprep.subr.mxu0 0.0
    %2425 = vmatpush2.msra.mxu0 0.0
    %2426 = vmatprep.subr.mxu0 0.0
    %2427 = vmatpush2.msra.mxu0 0.0
    %2428 = vmatprep.subr.mxu0 0.0
    %2429 = vmatpush2.msra.mxu0 0.0
    %2430 = vmatprep.subr.mxu0 0.0
    %2431 = vmatpush2.msra.mxu0 0.0
    %2432 = vmatprep.subr.mxu0 0.0
    %2433 = vmatpush2.msra.mxu0 0.0
    %2434 = vmatprep.subr.mxu0 0.0
    %2435 = vmatpush2.msra.mxu0 0.0
    %2436 = vmatprep.subr.mxu0 0.0
    %2437 = vmatpush2.msra.mxu0 0.0
    %2438 = vmatprep.subr.mxu0 0.0
    %2439 = vmatpush2.msra.mxu0 0.0
    %2440 = vmatprep.subr.mxu0 0.0
    %2441 = vmatpush2.msra.mxu0 0.0
    %2442 = vmatprep.subr.mxu0 0.0
    %2443 = vmatpush2.msra.mxu0 0.0
    %2444 = vmatprep.subr.mxu0 0.0
    %2445 = vmatpush2.msra.mxu0 0.0
    %2446 = vmatprep.subr.mxu0 0.0
    %2447 = vmatpush2.msra.mxu0 0.0
    %2448 = vmatprep.subr.mxu0 0.0
    %2449 = vmatpush2.msra.mxu0 0.0
    %2450 = vmatprep.mubr.f32.mxu0 0.0
    %2451 = vmatmul.mubr.f32.gmra.mxu0 %v2384
    %v2452 = vpop.f32.mrf.mxu0
    %v2453 = vadd.f32 0.0, %v2452
    %v2454 = vpop.f32.mrf.mxu0
    %2455 = vdwg.mxu0
    %v2456 = vrcp.pop %v2142
    %v2457 = vmul.f32 %v2225, %v2456
    %v2458 = vrcp.pop %v2145
    %v2459 = vmul.f32 %v2301, %v2458
    %v2460 = vrcp.pop %v2148
    %v2461 = vmul.f32 %v2377, %v2460
    %v2462 = vrcp.pop %v2151
    %v2463 = vmul.f32 %v2453, %v2462
    %2464 = vrot.lane.b32.xlu0 %v69, 32
    %v2465 = vpop.permute.xlu0 %2464
    %v2468 = vsel %vm291, %v2457, 0
    %v2471 = vsel %vm291, %v2459, 0
    %v2474 = vsel %vm291, %v2461, 0
    %v2477 = vsel %vm291, %v2463, 0
    %2479 = vmatprep.subr.mxu0 0.0
    %2480 = vmatpush1.msra.mxu0 0.0
    %2481 = vmatprep.subr.mxu0 0.0
    %2482 = vmatpush1.msra.mxu0 0.0
    %2483 = vmatprep.subr.mxu0 0.0
    %2484 = vmatpush1.msra.mxu0 0.0
    %2485 = vmatprep.subr.mxu0 0.0
    %2486 = vmatpush1.msra.mxu0 0.0
    %2487 = vmatprep.subr.mxu0 0.0
    %2488 = vmatpush1.msra.mxu0 0.0
    %2489 = vmatprep.subr.mxu0 0.0
    %2490 = vmatpush1.msra.mxu0 0.0
    %2491 = vmatprep.subr.mxu0 0.0
    %2492 = vmatpush1.msra.mxu0 0.0
    %2493 = vmatprep.subr.mxu0 0.0
    %2494 = vmatpush1.msra.mxu0 0.0
    %2495 = vmatprep.subr.mxu0 0.0
    %2496 = vmatpush1.msra.mxu0 0.0
    %2497 = vmatprep.subr.mxu0 0.0
    %2498 = vmatpush1.msra.mxu0 0.0
    %2499 = vmatprep.subr.mxu0 0.0
    %2500 = vmatpush1.msra.mxu0 0.0
    %2501 = vmatprep.subr.mxu0 0.0
    %2502 = vmatpush1.msra.mxu0 0.0
    %2503 = vmatprep.subr.mxu0 0.0
    %2504 = vmatpush1.msra.mxu0 0.0
    %2505 = vmatprep.subr.mxu0 0.0
    %2506 = vmatpush1.msra.mxu0 0.0
    %2507 = vmatprep.subr.mxu0 0.0
    %2508 = vmatpush1.msra.mxu0 0.0
    %2509 = vmatprep.subr.mxu0 0.0
    %2510 = vmatpush1.msra.mxu0 %v2465
    %2511 = vmatprep.subr.mxu0 0.0
    %2512 = vmatpush2.msra.mxu0 0.0
    %2513 = vmatprep.subr.mxu0 0.0
    %2514 = vmatpush2.msra.mxu0 0.0
    %2515 = vmatprep.subr.mxu0 0.0
    %2516 = vmatpush2.msra.mxu0 0.0
    %2517 = vmatprep.subr.mxu0 0.0
    %2518 = vmatpush2.msra.mxu0 0.0
    %2519 = vmatprep.subr.mxu0 0.0
    %2520 = vmatpush2.msra.mxu0 0.0
    %2521 = vmatprep.subr.mxu0 0.0
    %2522 = vmatpush2.msra.mxu0 0.0
    %2523 = vmatprep.subr.mxu0 0.0
    %2524 = vmatpush2.msra.mxu0 0.0
    %2525 = vmatprep.subr.mxu0 0.0
    %2526 = vmatpush2.msra.mxu0 0.0
    %2527 = vmatprep.subr.mxu0 0.0
    %2528 = vmatpush2.msra.mxu0 0.0
    %2529 = vmatprep.subr.mxu0 0.0
    %2530 = vmatpush2.msra.mxu0 0.0
    %2531 = vmatprep.subr.mxu0 0.0
    %2532 = vmatpush2.msra.mxu0 0.0
    %2533 = vmatprep.subr.mxu0 0.0
    %2534 = vmatpush2.msra.mxu0 0.0
    %2535 = vmatprep.subr.mxu0 0.0
    %2536 = vmatpush2.msra.mxu0 0.0
    %2537 = vmatprep.subr.mxu0 0.0
    %2538 = vmatpush2.msra.mxu0 0.0
    %2539 = vmatprep.subr.mxu0 0.0
    %2540 = vmatpush2.msra.mxu0 0.0
    %2541 = vmatprep.subr.mxu0 0.0
    %2542 = vmatpush2.msra.mxu0 0.0
    %2543 = vmatprep.mubr.f32.mxu0 0.0
    %2544 = vmatmul.mubr.f32.gmra.mxu0 %v2468
    %v2545 = vpop.f32.mrf.mxu0
    %v2546 = vadd.f32 0.0, %v2545
    %v2547 = vpop.f32.mrf.mxu0
    %2548 = vmatprep.mubr.f32.mxu0 0.0
    %2549 = vmatmul.mubr.f32.gmra.mxu0 %v2471
    %v2550 = vpop.f32.mrf.mxu0
    %v2551 = vadd.f32 0.0, %v2550
    %v2552 = vpop.f32.mrf.mxu0
    %2553 = vmatprep.mubr.f32.mxu0 0.0
    %2554 = vmatmul.mubr.f32.gmra.mxu0 %v2474
    %v2555 = vpop.f32.mrf.mxu0
    %v2556 = vadd.f32 0.0, %v2555
    %v2557 = vpop.f32.mrf.mxu0
    %2558 = vmatprep.mubr.f32.mxu0 0.0
    %2559 = vmatmul.mubr.f32.gmra.mxu0 %v2477
    %v2560 = vpop.f32.mrf.mxu0
    %v2561 = vadd.f32 0.0, %v2560
    %v2562 = vpop.f32.mrf.mxu0
    %2563 = vdwg.mxu0
    %v2564 = vadd.f32 %v1786, %v2546
    %v2565 = vadd.f32 %v1791, %v2551
    %v2566 = vadd.f32 %v1796, %v2556
    %v2567 = vadd.f32 %v1801, %v2561
    %2568 = vrot.lane.b32.xlu0 %v156, 104
    %v2569 = vpop.permute.xlu0 %2568
    %2570 = vrot.lane.b32.xlu0 %v273, 104
    %v2571 = vpop.permute.xlu0 %2570
    %v2572 = vsel %vm291, %v2569, 0
    %v2574 = vsel %vm291, %v2571, 0
    %2576 = vmatprep.subr.mxu0 0.0
    %2577 = vmatpush1.xpose.msra.mxu0 0.0
    %2578 = vmatprep.subr.mxu0 0.0
    %2579 = vmatpush1.xpose.msra.mxu0 0.0
    %2580 = vmatprep.subr.mxu0 0.0
    %2581 = vmatpush1.xpose.msra.mxu0 0.0
    %2582 = vmatprep.subr.mxu0 0.0
    %2583 = vmatpush1.xpose.msra.mxu0 0.0
    %2584 = vmatprep.subr.mxu0 0.0
    %2585 = vmatpush1.xpose.msra.mxu0 0.0
    %2586 = vmatprep.subr.mxu0 0.0
    %2587 = vmatpush1.xpose.msra.mxu0 0.0
    %2588 = vmatprep.subr.mxu0 0.0
    %2589 = vmatpush1.xpose.msra.mxu0 0.0
    %2590 = vmatprep.subr.mxu0 0.0
    %2591 = vmatpush1.xpose.msra.mxu0 0.0
    %2592 = vmatprep.subr.mxu0 0.0
    %2593 = vmatpush1.xpose.msra.mxu0 0.0
    %2594 = vmatprep.subr.mxu0 0.0
    %2595 = vmatpush1.xpose.msra.mxu0 0.0
    %2596 = vmatprep.subr.mxu0 0.0
    %2597 = vmatpush1.xpose.msra.mxu0 0.0
    %2598 = vmatprep.subr.mxu0 0.0
    %2599 = vmatpush1.xpose.msra.mxu0 0.0
    %2600 = vmatprep.subr.mxu0 0.0
    %2601 = vmatpush1.xpose.msra.mxu0 0.0
    %2602 = vmatprep.subr.mxu0 0.0
    %2603 = vmatpush1.xpose.msra.mxu0 0.0
    %2604 = vmatprep.subr.mxu0 0.0
    %2605 = vmatpush1.xpose.msra.mxu0 0.0
    %2606 = vmatprep.subr.mxu0 0.0
    %2607 = vmatpush1.xpose.msra.mxu0 %v2574
    %2608 = vmatprep.subr.mxu0 0.0
    %2609 = vmatpush2.xpose.msra.mxu0 0.0
    %2610 = vmatprep.subr.mxu0 0.0
    %2611 = vmatpush2.xpose.msra.mxu0 0.0
    %2612 = vmatprep.subr.mxu0 0.0
    %2613 = vmatpush2.xpose.msra.mxu0 0.0
    %2614 = vmatprep.subr.mxu0 0.0
    %2615 = vmatpush2.xpose.msra.mxu0 0.0
    %2616 = vmatprep.subr.mxu0 0.0
    %2617 = vmatpush2.xpose.msra.mxu0 0.0
    %2618 = vmatprep.subr.mxu0 0.0
    %2619 = vmatpush2.xpose.msra.mxu0 0.0
    %2620 = vmatprep.subr.mxu0 0.0
    %2621 = vmatpush2.xpose.msra.mxu0 0.0
    %2622 = vmatprep.subr.mxu0 0.0
    %2623 = vmatpush2.xpose.msra.mxu0 0.0
    %2624 = vmatprep.subr.mxu0 0.0
    %2625 = vmatpush2.xpose.msra.mxu0 0.0
    %2626 = vmatprep.subr.mxu0 0.0
    %2627 = vmatpush2.xpose.msra.mxu0 0.0
    %2628 = vmatprep.subr.mxu0 0.0
    %2629 = vmatpush2.xpose.msra.mxu0 0.0
    %2630 = vmatprep.subr.mxu0 0.0
    %2631 = vmatpush2.xpose.msra.mxu0 0.0
    %2632 = vmatprep.subr.mxu0 0.0
    %2633 = vmatpush2.xpose.msra.mxu0 0.0
    %2634 = vmatprep.subr.mxu0 0.0
    %2635 = vmatpush2.xpose.msra.mxu0 0.0
    %2636 = vmatprep.subr.mxu0 0.0
    %2637 = vmatpush2.xpose.msra.mxu0 0.0
    %2638 = vmatprep.subr.mxu0 0.0
    %2639 = vmatpush2.xpose.msra.mxu0 0.0
    %2640 = vmatprep.mubr.f32.mxu0 0.0
    %2641 = vmatmul.mubr.f32.gmra.mxu0 %v2572
    %v2642 = vpop.f32.mrf.mxu0
    %v2643 = vadd.f32 0.0, %v2642
    %v2644 = vpop.f32.mrf.mxu0
    %2645 = vdwg.mxu0
    %2646 = vrot.lane.b32.xlu0 %v161, 104
    %v2647 = vpop.permute.xlu0 %2646
    %2648 = vrot.lane.b32.xlu0 %v278, 104
    %v2649 = vpop.permute.xlu0 %2648
    %v2650 = vsel %vm291, %v2647, 0
    %v2652 = vsel %vm291, %v2649, 0
    %2654 = vmatprep.subr.mxu0 0.0
    %2655 = vmatpush1.xpose.msra.mxu0 0.0
    %2656 = vmatprep.subr.mxu0 0.0
    %2657 = vmatpush1.xpose.msra.mxu0 0.0
    %2658 = vmatprep.subr.mxu0 0.0
    %2659 = vmatpush1.xpose.msra.mxu0 0.0
    %2660 = vmatprep.subr.mxu0 0.0
    %2661 = vmatpush1.xpose.msra.mxu0 0.0
    %2662 = vmatprep.subr.mxu0 0.0
    %2663 = vmatpush1.xpose.msra.mxu0 0.0
    %2664 = vmatprep.subr.mxu0 0.0
    %2665 = vmatpush1.xpose.msra.mxu0 0.0
    %2666 = vmatprep.subr.mxu0 0.0
    %2667 = vmatpush1.xpose.msra.mxu0 0.0
    %2668 = vmatprep.subr.mxu0 0.0
    %2669 = vmatpush1.xpose.msra.mxu0 0.0
    %2670 = vmatprep.subr.mxu0 0.0
    %2671 = vmatpush1.xpose.msra.mxu0 0.0
    %2672 = vmatprep.subr.mxu0 0.0
    %2673 = vmatpush1.xpose.msra.mxu0 0.0
    %2674 = vmatprep.subr.mxu0 0.0
    %2675 = vmatpush1.xpose.msra.mxu0 0.0
    %2676 = vmatprep.subr.mxu0 0.0
    %2677 = vmatpush1.xpose.msra.mxu0 0.0
    %2678 = vmatprep.subr.mxu0 0.0
    %2679 = vmatpush1.xpose.msra.mxu0 0.0
    %2680 = vmatprep.subr.mxu0 0.0
    %2681 = vmatpush1.xpose.msra.mxu0 0.0
    %2682 = vmatprep.subr.mxu0 0.0
    %2683 = vmatpush1.xpose.msra.mxu0 0.0
    %2684 = vmatprep.subr.mxu0 0.0
    %2685 = vmatpush1.xpose.msra.mxu0 %v2652
    %2686 = vmatprep.subr.mxu0 0.0
    %2687 = vmatpush2.xpose.msra.mxu0 0.0
    %2688 = vmatprep.subr.mxu0 0.0
    %2689 = vmatpush2.xpose.msra.mxu0 0.0
    %2690 = vmatprep.subr.mxu0 0.0
    %2691 = vmatpush2.xpose.msra.mxu0 0.0
    %2692 = vmatprep.subr.mxu0 0.0
    %2693 = vmatpush2.xpose.msra.mxu0 0.0
    %2694 = vmatprep.subr.mxu0 0.0
    %2695 = vmatpush2.xpose.msra.mxu0 0.0
    %2696 = vmatprep.subr.mxu0 0.0
    %2697 = vmatpush2.xpose.msra.mxu0 0.0
    %2698 = vmatprep.subr.mxu0 0.0
    %2699 = vmatpush2.xpose.msra.mxu0 0.0
    %2700 = vmatprep.subr.mxu0 0.0
    %2701 = vmatpush2.xpose.msra.mxu0 0.0
    %2702 = vmatprep.subr.mxu0 0.0
    %2703 = vmatpush2.xpose.msra.mxu0 0.0
    %2704 = vmatprep.subr.mxu0 0.0
    %2705 = vmatpush2.xpose.msra.mxu0 0.0
    %2706 = vmatprep.subr.mxu0 0.0
    %2707 = vmatpush2.xpose.msra.mxu0 0.0
    %2708 = vmatprep.subr.mxu0 0.0
    %2709 = vmatpush2.xpose.msra.mxu0 0.0
    %2710 = vmatprep.subr.mxu0 0.0
    %2711 = vmatpush2.xpose.msra.mxu0 0.0
    %2712 = vmatprep.subr.mxu0 0.0
    %2713 = vmatpush2.xpose.msra.mxu0 0.0
    %2714 = vmatprep.subr.mxu0 0.0
    %2715 = vmatpush2.xpose.msra.mxu0 0.0
    %2716 = vmatprep.subr.mxu0 0.0
    %2717 = vmatpush2.xpose.msra.mxu0 0.0
    %2718 = vmatprep.mubr.f32.mxu0 0.0
    %2719 = vmatmul.mubr.f32.gmra.mxu0 %v2650
    %v2720 = vpop.f32.mrf.mxu0
    %v2721 = vadd.f32 0.0, %v2720
    %v2722 = vpop.f32.mrf.mxu0
    %2723 = vdwg.mxu0
    %2724 = vrot.lane.b32.xlu0 %v166, 104
    %v2725 = vpop.permute.xlu0 %2724
    %2726 = vrot.lane.b32.xlu0 %v283, 104
    %v2727 = vpop.permute.xlu0 %2726
    %v2728 = vsel %vm291, %v2725, 0
    %v2730 = vsel %vm291, %v2727, 0
    %2732 = vmatprep.subr.mxu0 0.0
    %2733 = vmatpush1.xpose.msra.mxu0 0.0
    %2734 = vmatprep.subr.mxu0 0.0
    %2735 = vmatpush1.xpose.msra.mxu0 0.0
    %2736 = vmatprep.subr.mxu0 0.0
    %2737 = vmatpush1.xpose.msra.mxu0 0.0
    %2738 = vmatprep.subr.mxu0 0.0
    %2739 = vmatpush1.xpose.msra.mxu0 0.0
    %2740 = vmatprep.subr.mxu0 0.0
    %2741 = vmatpush1.xpose.msra.mxu0 0.0
    %2742 = vmatprep.subr.mxu0 0.0
    %2743 = vmatpush1.xpose.msra.mxu0 0.0
    %2744 = vmatprep.subr.mxu0 0.0
    %2745 = vmatpush1.xpose.msra.mxu0 0.0
    %2746 = vmatprep.subr.mxu0 0.0
    %2747 = vmatpush1.xpose.msra.mxu0 0.0
    %2748 = vmatprep.subr.mxu0 0.0
    %2749 = vmatpush1.xpose.msra.mxu0 0.0
    %2750 = vmatprep.subr.mxu0 0.0
    %2751 = vmatpush1.xpose.msra.mxu0 0.0
    %2752 = vmatprep.subr.mxu0 0.0
    %2753 = vmatpush1.xpose.msra.mxu0 0.0
    %2754 = vmatprep.subr.mxu0 0.0
    %2755 = vmatpush1.xpose.msra.mxu0 0.0
    %2756 = vmatprep.subr.mxu0 0.0
    %2757 = vmatpush1.xpose.msra.mxu0 0.0
    %2758 = vmatprep.subr.mxu0 0.0
    %2759 = vmatpush1.xpose.msra.mxu0 0.0
    %2760 = vmatprep.subr.mxu0 0.0
    %2761 = vmatpush1.xpose.msra.mxu0 0.0
    %2762 = vmatprep.subr.mxu0 0.0
    %2763 = vmatpush1.xpose.msra.mxu0 %v2730
    %2764 = vmatprep.subr.mxu0 0.0
    %2765 = vmatpush2.xpose.msra.mxu0 0.0
    %2766 = vmatprep.subr.mxu0 0.0
    %2767 = vmatpush2.xpose.msra.mxu0 0.0
    %2768 = vmatprep.subr.mxu0 0.0
    %2769 = vmatpush2.xpose.msra.mxu0 0.0
    %2770 = vmatprep.subr.mxu0 0.0
    %2771 = vmatpush2.xpose.msra.mxu0 0.0
    %2772 = vmatprep.subr.mxu0 0.0
    %2773 = vmatpush2.xpose.msra.mxu0 0.0
    %2774 = vmatprep.subr.mxu0 0.0
    %2775 = vmatpush2.xpose.msra.mxu0 0.0
    %2776 = vmatprep.subr.mxu0 0.0
    %2777 = vmatpush2.xpose.msra.mxu0 0.0
    %2778 = vmatprep.subr.mxu0 0.0
    %2779 = vmatpush2.xpose.msra.mxu0 0.0
    %2780 = vmatprep.subr.mxu0 0.0
    %2781 = vmatpush2.xpose.msra.mxu0 0.0
    %2782 = vmatprep.subr.mxu0 0.0
    %2783 = vmatpush2.xpose.msra.mxu0 0.0
    %2784 = vmatprep.subr.mxu0 0.0
    %2785 = vmatpush2.xpose.msra.mxu0 0.0
    %2786 = vmatprep.subr.mxu0 0.0
    %2787 = vmatpush2.xpose.msra.mxu0 0.0
    %2788 = vmatprep.subr.mxu0 0.0
    %2789 = vmatpush2.xpose.msra.mxu0 0.0
    %2790 = vmatprep.subr.mxu0 0.0
    %2791 = vmatpush2.xpose.msra.mxu0 0.0
    %2792 = vmatprep.subr.mxu0 0.0
    %2793 = vmatpush2.xpose.msra.mxu0 0.0
    %2794 = vmatprep.subr.mxu0 0.0
    %2795 = vmatpush2.xpose.msra.mxu0 0.0
    %2796 = vmatprep.mubr.f32.mxu0 0.0
    %2797 = vmatmul.mubr.f32.gmra.mxu0 %v2728
    %v2798 = vpop.f32.mrf.mxu0
    %v2799 = vadd.f32 0.0, %v2798
    %v2800 = vpop.f32.mrf.mxu0
    %2801 = vdwg.mxu0
    %2802 = vrot.lane.b32.xlu0 %v171, 104
    %v2803 = vpop.permute.xlu0 %2802
    %2804 = vrot.lane.b32.xlu0 %v288, 104
    %v2805 = vpop.permute.xlu0 %2804
    %v2806 = vsel %vm291, %v2803, 0
    %v2808 = vsel %vm291, %v2805, 0
    %2810 = vmatprep.subr.mxu0 0.0
    %2811 = vmatpush1.xpose.msra.mxu0 0.0
    %2812 = vmatprep.subr.mxu0 0.0
    %2813 = vmatpush1.xpose.msra.mxu0 0.0
    %2814 = vmatprep.subr.mxu0 0.0
    %2815 = vmatpush1.xpose.msra.mxu0 0.0
    %2816 = vmatprep.subr.mxu0 0.0
    %2817 = vmatpush1.xpose.msra.mxu0 0.0
    %2818 = vmatprep.subr.mxu0 0.0
    %2819 = vmatpush1.xpose.msra.mxu0 0.0
    %2820 = vmatprep.subr.mxu0 0.0
    %2821 = vmatpush1.xpose.msra.mxu0 0.0
    %2822 = vmatprep.subr.mxu0 0.0
    %2823 = vmatpush1.xpose.msra.mxu0 0.0
    %2824 = vmatprep.subr.mxu0 0.0
    %2825 = vmatpush1.xpose.msra.mxu0 0.0
    %2826 = vmatprep.subr.mxu0 0.0
    %2827 = vmatpush1.xpose.msra.mxu0 0.0
    %2828 = vmatprep.subr.mxu0 0.0
    %2829 = vmatpush1.xpose.msra.mxu0 0.0
    %2830 = vmatprep.subr.mxu0 0.0
    %2831 = vmatpush1.xpose.msra.mxu0 0.0
    %2832 = vmatprep.subr.mxu0 0.0
    %2833 = vmatpush1.xpose.msra.mxu0 0.0
    %2834 = vmatprep.subr.mxu0 0.0
    %2835 = vmatpush1.xpose.msra.mxu0 0.0
    %2836 = vmatprep.subr.mxu0 0.0
    %2837 = vmatpush1.xpose.msra.mxu0 0.0
    %2838 = vmatprep.subr.mxu0 0.0
    %2839 = vmatpush1.xpose.msra.mxu0 0.0
    %2840 = vmatprep.subr.mxu0 0.0
    %2841 = vmatpush1.xpose.msra.mxu0 %v2808
    %2842 = vmatprep.subr.mxu0 0.0
    %2843 = vmatpush2.xpose.msra.mxu0 0.0
    %2844 = vmatprep.subr.mxu0 0.0
    %2845 = vmatpush2.xpose.msra.mxu0 0.0
    %2846 = vmatprep.subr.mxu0 0.0
    %2847 = vmatpush2.xpose.msra.mxu0 0.0
    %2848 = vmatprep.subr.mxu0 0.0
    %2849 = vmatpush2.xpose.msra.mxu0 0.0
    %2850 = vmatprep.subr.mxu0 0.0
    %2851 = vmatpush2.xpose.msra.mxu0 0.0
    %2852 = vmatprep.subr.mxu0 0.0
    %2853 = vmatpush2.xpose.msra.mxu0 0.0
    %2854 = vmatprep.subr.mxu0 0.0
    %2855 = vmatpush2.xpose.msra.mxu0 0.0
    %2856 = vmatprep.subr.mxu0 0.0
    %2857 = vmatpush2.xpose.msra.mxu0 0.0
    %2858 = vmatprep.subr.mxu0 0.0
    %2859 = vmatpush2.xpose.msra.mxu0 0.0
    %2860 = vmatprep.subr.mxu0 0.0
    %2861 = vmatpush2.xpose.msra.mxu0 0.0
    %2862 = vmatprep.subr.mxu0 0.0
    %2863 = vmatpush2.xpose.msra.mxu0 0.0
    %2864 = vmatprep.subr.mxu0 0.0
    %2865 = vmatpush2.xpose.msra.mxu0 0.0
    %2866 = vmatprep.subr.mxu0 0.0
    %2867 = vmatpush2.xpose.msra.mxu0 0.0
    %2868 = vmatprep.subr.mxu0 0.0
    %2869 = vmatpush2.xpose.msra.mxu0 0.0
    %2870 = vmatprep.subr.mxu0 0.0
    %2871 = vmatpush2.xpose.msra.mxu0 0.0
    %2872 = vmatprep.subr.mxu0 0.0
    %2873 = vmatpush2.xpose.msra.mxu0 0.0
    %2874 = vmatprep.mubr.f32.mxu0 0.0
    %2875 = vmatmul.mubr.f32.gmra.mxu0 %v2806
    %v2876 = vpop.f32.mrf.mxu0
    %v2877 = vadd.f32 0.0, %v2876
    %v2878 = vpop.f32.mrf.mxu0
    %2879 = vdwg.mxu0
    %v2880 = vsel %vm291, %v2643, -inf
    %2881 = vmax.xlane.f32.xlu0 %v2880
    %v2882 = vpop.xlane.xlu0 %2881
    %v2883 = vsel %vm291, %v2721, -inf
    %2884 = vmax.xlane.f32.xlu0 %v2883
    %v2885 = vpop.xlane.xlu0 %2884
    %v2886 = vsel %vm291, %v2799, -inf
    %2887 = vmax.xlane.f32.xlu0 %v2886
    %v2888 = vpop.xlane.xlu0 %2887
    %v2889 = vsel %vm291, %v2877, -inf
    %2890 = vmax.xlane.f32.xlu0 %v2889
    %v2891 = vpop.xlane.xlu0 %2890
    %v2892 = vsub.f32 %v2643, %v2882
    %v2893 = vsub.f32 %v2721, %v2885
    %v2894 = vsub.f32 %v2799, %v2888
    %v2895 = vsub.f32 %v2877, %v2891
    %v2896 = vmul.f32 %v2892, 1.442695
    %v2897 = vpow.pop %v2896
    %v2898 = vmul.f32 %v2893, 1.442695
    %v2899 = vpow.pop %v2898
    %v2900 = vmul.f32 %v2894, 1.442695
    %v2901 = vpow.pop %v2900
    %v2902 = vmul.f32 %v2895, 1.442695
    %v2903 = vpow.pop %v2902
    %v2904 = vsel %vm291, %v2897, 0.0
    %2905 = vadd.xlane.f32.xlu0 %v2904
    %v2906 = vpop.xlane.xlu0 %2905
    %v2907 = vsel %vm291, %v2899, 0.0
    %2908 = vadd.xlane.f32.xlu0 %v2907
    %v2909 = vpop.xlane.xlu0 %2908
    %v2910 = vsel %vm291, %v2901, 0.0
    %2911 = vadd.xlane.f32.xlu0 %v2910
    %v2912 = vpop.xlane.xlu0 %2911
    %v2913 = vsel %vm291, %v2903, 0.0
    %2914 = vadd.xlane.f32.xlu0 %v2913
    %v2915 = vpop.xlane.xlu0 %2914
    %2916 = vrot.lane.b32.xlu0 %v273, 72
    %v2917 = vpop.permute.xlu0 %2916
    %v2920 = vsel %vm291, %v2897, 0
    %2922 = vmatprep.subr.mxu0 0.0
    %2923 = vmatpush1.msra.mxu0 0.0
    %2924 = vmatprep.subr.mxu0 0.0
    %2925 = vmatpush1.msra.mxu0 0.0
    %2926 = vmatprep.subr.mxu0 0.0
    %2927 = vmatpush1.msra.mxu0 0.0
    %2928 = vmatprep.subr.mxu0 0.0
    %2929 = vmatpush1.msra.mxu0 0.0
    %2930 = vmatprep.subr.mxu0 0.0
    %2931 = vmatpush1.msra.mxu0 0.0
    %2932 = vmatprep.subr.mxu0 0.0
    %2933 = vmatpush1.msra.mxu0 0.0
    %2934 = vmatprep.subr.mxu0 0.0
    %2935 = vmatpush1.msra.mxu0 0.0
    %2936 = vmatprep.subr.mxu0 0.0
    %2937 = vmatpush1.msra.mxu0 0.0
    %2938 = vmatprep.subr.mxu0 0.0
    %2939 = vmatpush1.msra.mxu0 0.0
    %2940 = vmatprep.subr.mxu0 0.0
    %2941 = vmatpush1.msra.mxu0 0.0
    %2942 = vmatprep.subr.mxu0 0.0
    %2943 = vmatpush1.msra.mxu0 0.0
    %2944 = vmatprep.subr.mxu0 0.0
    %2945 = vmatpush1.msra.mxu0 0.0
    %2946 = vmatprep.subr.mxu0 0.0
    %2947 = vmatpush1.msra.mxu0 0.0
    %2948 = vmatprep.subr.mxu0 0.0
    %2949 = vmatpush1.msra.mxu0 0.0
    %2950 = vmatprep.subr.mxu0 0.0
    %2951 = vmatpush1.msra.mxu0 0.0
    %2952 = vmatprep.subr.mxu0 0.0
    %2953 = vmatpush1.msra.mxu0 %v2917
    %2954 = vmatprep.subr.mxu0 0.0
    %2955 = vmatpush2.msra.mxu0 0.0
    %2956 = vmatprep.subr.mxu0 0.0
    %2957 = vmatpush2.msra.mxu0 0.0
    %2958 = vmatprep.subr.mxu0 0.0
    %2959 = vmatpush2.msra.mxu0 0.0
    %2960 = vmatprep.subr.mxu0 0.0
    %2961 = vmatpush2.msra.mxu0 0.0
    %2962 = vmatprep.subr.mxu0 0.0
    %2963 = vmatpush2.msra.mxu0 0.0
    %2964 = vmatprep.subr.mxu0 0.0
    %2965 = vmatpush2.msra.mxu0 0.0
    %2966 = vmatprep.subr.mxu0 0.0
    %2967 = vmatpush2.msra.mxu0 0.0
    %2968 = vmatprep.subr.mxu0 0.0
    %2969 = vmatpush2.msra.mxu0 0.0
    %2970 = vmatprep.subr.mxu0 0.0
    %2971 = vmatpush2.msra.mxu0 0.0
    %2972 = vmatprep.subr.mxu0 0.0
    %2973 = vmatpush2.msra.mxu0 0.0
    %2974 = vmatprep.subr.mxu0 0.0
    %2975 = vmatpush2.msra.mxu0 0.0
    %2976 = vmatprep.subr.mxu0 0.0
    %2977 = vmatpush2.msra.mxu0 0.0
    %2978 = vmatprep.subr.mxu0 0.0
    %2979 = vmatpush2.msra.mxu0 0.0
    %2980 = vmatprep.subr.mxu0 0.0
    %2981 = vmatpush2.msra.mxu0 0.0
    %2982 = vmatprep.subr.mxu0 0.0
    %2983 = vmatpush2.msra.mxu0 0.0
    %2984 = vmatprep.subr.mxu0 0.0
    %2985 = vmatpush2.msra.mxu0 0.0
    %2986 = vmatprep.mubr.f32.mxu0 0.0
    %2987 = vmatmul.mubr.f32.gmra.mxu0 %v2920
    %v2988 = vpop.f32.mrf.mxu0
    %v2989 = vadd.f32 0.0, %v2988
    %v2990 = vpop.f32.mrf.mxu0
    %2991 = vdwg.mxu0
    %2992 = vrot.lane.b32.xlu0 %v278, 72
    %v2993 = vpop.permute.xlu0 %2992
    %v2996 = vsel %vm291, %v2899, 0
    %2998 = vmatprep.subr.mxu0 0.0
    %2999 = vmatpush1.msra.mxu0 0.0
    %3000 = vmatprep.subr.mxu0 0.0
    %3001 = vmatpush1.msra.mxu0 0.0
    %3002 = vmatprep.subr.mxu0 0.0
    %3003 = vmatpush1.msra.mxu0 0.0
    %3004 = vmatprep.subr.mxu0 0.0
    %3005 = vmatpush1.msra.mxu0 0.0
    %3006 = vmatprep.subr.mxu0 0.0
    %3007 = vmatpush1.msra.mxu0 0.0
    %3008 = vmatprep.subr.mxu0 0.0
    %3009 = vmatpush1.msra.mxu0 0.0
    %3010 = vmatprep.subr.mxu0 0.0
    %3011 = vmatpush1.msra.mxu0 0.0
    %3012 = vmatprep.subr.mxu0 0.0
    %3013 = vmatpush1.msra.mxu0 0.0
    %3014 = vmatprep.subr.mxu0 0.0
    %3015 = vmatpush1.msra.mxu0 0.0
    %3016 = vmatprep.subr.mxu0 0.0
    %3017 = vmatpush1.msra.mxu0 0.0
    %3018 = vmatprep.subr.mxu0 0.0
    %3019 = vmatpush1.msra.mxu0 0.0
    %3020 = vmatprep.subr.mxu0 0.0
    %3021 = vmatpush1.msra.mxu0 0.0
    %3022 = vmatprep.subr.mxu0 0.0
    %3023 = vmatpush1.msra.mxu0 0.0
    %3024 = vmatprep.subr.mxu0 0.0
    %3025 = vmatpush1.msra.mxu0 0.0
    %3026 = vmatprep.subr.mxu0 0.0
    %3027 = vmatpush1.msra.mxu0 0.0
    %3028 = vmatprep.subr.mxu0 0.0
    %3029 = vmatpush1.msra.mxu0 %v2993
    %3030 = vmatprep.subr.mxu0 0.0
    %3031 = vmatpush2.msra.mxu0 0.0
    %3032 = vmatprep.subr.mxu0 0.0
    %3033 = vmatpush2.msra.mxu0 0.0
    %3034 = vmatprep.subr.mxu0 0.0
    %3035 = vmatpush2.msra.mxu0 0.0
    %3036 = vmatprep.subr.mxu0 0.0
    %3037 = vmatpush2.msra.mxu0 0.0
    %3038 = vmatprep.subr.mxu0 0.0
    %3039 = vmatpush2.msra.mxu0 0.0
    %3040 = vmatprep.subr.mxu0 0.0
    %3041 = vmatpush2.msra.mxu0 0.0
    %3042 = vmatprep.subr.mxu0 0.0
    %3043 = vmatpush2.msra.mxu0 0.0
    %3044 = vmatprep.subr.mxu0 0.0
    %3045 = vmatpush2.msra.mxu0 0.0
    %3046 = vmatprep.subr.mxu0 0.0
    %3047 = vmatpush2.msra.mxu0 0.0
    %3048 = vmatprep.subr.mxu0 0.0
    %3049 = vmatpush2.msra.mxu0 0.0
    %3050 = vmatprep.subr.mxu0 0.0
    %3051 = vmatpush2.msra.mxu0 0.0
    %3052 = vmatprep.subr.mxu0 0.0
    %3053 = vmatpush2.msra.mxu0 0.0
    %3054 = vmatprep.subr.mxu0 0.0
    %3055 = vmatpush2.msra.mxu0 0.0
    %3056 = vmatprep.subr.mxu0 0.0
    %3057 = vmatpush2.msra.mxu0 0.0
    %3058 = vmatprep.subr.mxu0 0.0
    %3059 = vmatpush2.msra.mxu0 0.0
    %3060 = vmatprep.subr.mxu0 0.0
    %3061 = vmatpush2.msra.mxu0 0.0
    %3062 = vmatprep.mubr.f32.mxu0 0.0
    %3063 = vmatmul.mubr.f32.gmra.mxu0 %v2996
    %v3064 = vpop.f32.mrf.mxu0
    %v3065 = vadd.f32 0.0, %v3064
    %v3066 = vpop.f32.mrf.mxu0
    %3067 = vdwg.mxu0
    %3068 = vrot.lane.b32.xlu0 %v283, 72
    %v3069 = vpop.permute.xlu0 %3068
    %v3072 = vsel %vm291, %v2901, 0
    %3074 = vmatprep.subr.mxu0 0.0
    %3075 = vmatpush1.msra.mxu0 0.0
    %3076 = vmatprep.subr.mxu0 0.0
    %3077 = vmatpush1.msra.mxu0 0.0
    %3078 = vmatprep.subr.mxu0 0.0
    %3079 = vmatpush1.msra.mxu0 0.0
    %3080 = vmatprep.subr.mxu0 0.0
    %3081 = vmatpush1.msra.mxu0 0.0
    %3082 = vmatprep.subr.mxu0 0.0
    %3083 = vmatpush1.msra.mxu0 0.0
    %3084 = vmatprep.subr.mxu0 0.0
    %3085 = vmatpush1.msra.mxu0 0.0
    %3086 = vmatprep.subr.mxu0 0.0
    %3087 = vmatpush1.msra.mxu0 0.0
    %3088 = vmatprep.subr.mxu0 0.0
    %3089 = vmatpush1.msra.mxu0 0.0
    %3090 = vmatprep.subr.mxu0 0.0
    %3091 = vmatpush1.msra.mxu0 0.0
    %3092 = vmatprep.subr.mxu0 0.0
    %3093 = vmatpush1.msra.mxu0 0.0
    %3094 = vmatprep.subr.mxu0 0.0
    %3095 = vmatpush1.msra.mxu0 0.0
    %3096 = vmatprep.subr.mxu0 0.0
    %3097 = vmatpush1.msra.mxu0 0.0
    %3098 = vmatprep.subr.mxu0 0.0
    %3099 = vmatpush1.msra.mxu0 0.0
    %3100 = vmatprep.subr.mxu0 0.0
    %3101 = vmatpush1.msra.mxu0 0.0
    %3102 = vmatprep.subr.mxu0 0.0
    %3103 = vmatpush1.msra.mxu0 0.0
    %3104 = vmatprep.subr.mxu0 0.0
    %3105 = vmatpush1.msra.mxu0 %v3069
    %3106 = vmatprep.subr.mxu0 0.0
    %3107 = vmatpush2.msra.mxu0 0.0
    %3108 = vmatprep.subr.mxu0 0.0
    %3109 = vmatpush2.msra.mxu0 0.0
    %3110 = vmatprep.subr.mxu0 0.0
    %3111 = vmatpush2.msra.mxu0 0.0
    %3112 = vmatprep.subr.mxu0 0.0
    %3113 = vmatpush2.msra.mxu0 0.0
    %3114 = vmatprep.subr.mxu0 0.0
    %3115 = vmatpush2.msra.mxu0 0.0
    %3116 = vmatprep.subr.mxu0 0.0
    %3117 = vmatpush2.msra.mxu0 0.0
    %3118 = vmatprep.subr.mxu0 0.0
    %3119 = vmatpush2.msra.mxu0 0.0
    %3120 = vmatprep.subr.mxu0 0.0
    %3121 = vmatpush2.msra.mxu0 0.0
    %3122 = vmatprep.subr.mxu0 0.0
    %3123 = vmatpush2.msra.mxu0 0.0
    %3124 = vmatprep.subr.mxu0 0.0
    %3125 = vmatpush2.msra.mxu0 0.0
    %3126 = vmatprep.subr.mxu0 0.0
    %3127 = vmatpush2.msra.mxu0 0.0
    %3128 = vmatprep.subr.mxu0 0.0
    %3129 = vmatpush2.msra.mxu0 0.0
    %3130 = vmatprep.subr.mxu0 0.0
    %3131 = vmatpush2.msra.mxu0 0.0
    %3132 = vmatprep.subr.mxu0 0.0
    %3133 = vmatpush2.msra.mxu0 0.0
    %3134 = vmatprep.subr.mxu0 0.0
    %3135 = vmatpush2.msra.mxu0 0.0
    %3136 = vmatprep.subr.mxu0 0.0
    %3137 = vmatpush2.msra.mxu0 0.0
    %3138 = vmatprep.mubr.f32.mxu0 0.0
    %3139 = vmatmul.mubr.f32.gmra.mxu0 %v3072
    %v3140 = vpop.f32.mrf.mxu0
    %v3141 = vadd.f32 0.0, %v3140
    %v3142 = vpop.f32.mrf.mxu0
    %3143 = vdwg.mxu0
    %3144 = vrot.lane.b32.xlu0 %v288, 72
    %v3145 = vpop.permute.xlu0 %3144
    %v3148 = vsel %vm291, %v2903, 0
    %3150 = vmatprep.subr.mxu0 0.0
    %3151 = vmatpush1.msra.mxu0 0.0
    %3152 = vmatprep.subr.mxu0 0.0
    %3153 = vmatpush1.msra.mxu0 0.0
    %3154 = vmatprep.subr.mxu0 0.0
    %3155 = vmatpush1.msra.mxu0 0.0
    %3156 = vmatprep.subr.mxu0 0.0
    %3157 = vmatpush1.msra.mxu0 0.0
    %3158 = vmatprep.subr.mxu0 0.0
    %3159 = vmatpush1.msra.mxu0 0.0
    %3160 = vmatprep.subr.mxu0 0.0
    %3161 = vmatpush1.msra.mxu0 0.0
    %3162 = vmatprep.subr.mxu0 0.0
    %3163 = vmatpush1.msra.mxu0 0.0
    %3164 = vmatprep.subr.mxu0 0.0
    %3165 = vmatpush1.msra.mxu0 0.0
    %3166 = vmatprep.subr.mxu0 0.0
    %3167 = vmatpush1.msra.mxu0 0.0
    %3168 = vmatprep.subr.mxu0 0.0
    %3169 = vmatpush1.msra.mxu0 0.0
    %3170 = vmatprep.subr.mxu0 0.0
    %3171 = vmatpush1.msra.mxu0 0.0
    %3172 = vmatprep.subr.mxu0 0.0
    %3173 = vmatpush1.msra.mxu0 0.0
    %3174 = vmatprep.subr.mxu0 0.0
    %3175 = vmatpush1.msra.mxu0 0.0
    %3176 = vmatprep.subr.mxu0 0.0
    %3177 = vmatpush1.msra.mxu0 0.0
    %3178 = vmatprep.subr.mxu0 0.0
    %3179 = vmatpush1.msra.mxu0 0.0
    %3180 = vmatprep.subr.mxu0 0.0
    %3181 = vmatpush1.msra.mxu0 %v3145
    %3182 = vmatprep.subr.mxu0 0.0
    %3183 = vmatpush2.msra.mxu0 0.0
    %3184 = vmatprep.subr.mxu0 0.0
    %3185 = vmatpush2.msra.mxu0 0.0
    %3186 = vmatprep.subr.mxu0 0.0
    %3187 = vmatpush2.msra.mxu0 0.0
    %3188 = vmatprep.subr.mxu0 0.0
    %3189 = vmatpush2.msra.mxu0 0.0
    %3190 = vmatprep.subr.mxu0 0.0
    %3191 = vmatpush2.msra.mxu0 0.0
    %3192 = vmatprep.subr.mxu0 0.0
    %3193 = vmatpush2.msra.mxu0 0.0
    %3194 = vmatprep.subr.mxu0 0.0
    %3195 = vmatpush2.msra.mxu0 0.0
    %3196 = vmatprep.subr.mxu0 0.0
    %3197 = vmatpush2.msra.mxu0 0.0
    %3198 = vmatprep.subr.mxu0 0.0
    %3199 = vmatpush2.msra.mxu0 0.0
    %3200 = vmatprep.subr.mxu0 0.0
    %3201 = vmatpush2.msra.mxu0 0.0
    %3202 = vmatprep.subr.mxu0 0.0
    %3203 = vmatpush2.msra.mxu0 0.0
    %3204 = vmatprep.subr.mxu0 0.0
    %3205 = vmatpush2.msra.mxu0 0.0
    %3206 = vmatprep.subr.mxu0 0.0
    %3207 = vmatpush2.msra.mxu0 0.0
    %3208 = vmatprep.subr.mxu0 0.0
    %3209 = vmatpush2.msra.mxu0 0.0
    %3210 = vmatprep.subr.mxu0 0.0
    %3211 = vmatpush2.msra.mxu0 0.0
    %3212 = vmatprep.subr.mxu0 0.0
    %3213 = vmatpush2.msra.mxu0 0.0
    %3214 = vmatprep.mubr.f32.mxu0 0.0
    %3215 = vmatmul.mubr.f32.gmra.mxu0 %v3148
    %v3216 = vpop.f32.mrf.mxu0
    %v3217 = vadd.f32 0.0, %v3216
    %v3218 = vpop.f32.mrf.mxu0
    %3219 = vdwg.mxu0
    %v3220 = vrcp.pop %v2906
    %v3221 = vmul.f32 %v2989, %v3220
    %v3222 = vrcp.pop %v2909
    %v3223 = vmul.f32 %v3065, %v3222
    %v3224 = vrcp.pop %v2912
    %v3225 = vmul.f32 %v3141, %v3224
    %v3226 = vrcp.pop %v2915
    %v3227 = vmul.f32 %v3217, %v3226
    %3228 = vrot.lane.b32.xlu0 %v70, 32
    %v3229 = vpop.permute.xlu0 %3228
    %v3232 = vsel %vm291, %v3221, 0
    %v3235 = vsel %vm291, %v3223, 0
    %v3238 = vsel %vm291, %v3225, 0
    %v3241 = vsel %vm291, %v3227, 0
    %3243 = vmatprep.subr.mxu0 0.0
    %3244 = vmatpush1.msra.mxu0 0.0
    %3245 = vmatprep.subr.mxu0 0.0
    %3246 = vmatpush1.msra.mxu0 0.0
    %3247 = vmatprep.subr.mxu0 0.0
    %3248 = vmatpush1.msra.mxu0 0.0
    %3249 = vmatprep.subr.mxu0 0.0
    %3250 = vmatpush1.msra.mxu0 0.0
    %3251 = vmatprep.subr.mxu0 0.0
    %3252 = vmatpush1.msra.mxu0 0.0
    %3253 = vmatprep.subr.mxu0 0.0
    %3254 = vmatpush1.msra.mxu0 0.0
    %3255 = vmatprep.subr.mxu0 0.0
    %3256 = vmatpush1.msra.mxu0 0.0
    %3257 = vmatprep.subr.mxu0 0.0
    %3258 = vmatpush1.msra.mxu0 0.0
    %3259 = vmatprep.subr.mxu0 0.0
    %3260 = vmatpush1.msra.mxu0 0.0
    %3261 = vmatprep.subr.mxu0 0.0
    %3262 = vmatpush1.msra.mxu0 0.0
    %3263 = vmatprep.subr.mxu0 0.0
    %3264 = vmatpush1.msra.mxu0 0.0
    %3265 = vmatprep.subr.mxu0 0.0
    %3266 = vmatpush1.msra.mxu0 0.0
    %3267 = vmatprep.subr.mxu0 0.0
    %3268 = vmatpush1.msra.mxu0 0.0
    %3269 = vmatprep.subr.mxu0 0.0
    %3270 = vmatpush1.msra.mxu0 0.0
    %3271 = vmatprep.subr.mxu0 0.0
    %3272 = vmatpush1.msra.mxu0 0.0
    %3273 = vmatprep.subr.mxu0 0.0
    %3274 = vmatpush1.msra.mxu0 %v3229
    %3275 = vmatprep.subr.mxu0 0.0
    %3276 = vmatpush2.msra.mxu0 0.0
    %3277 = vmatprep.subr.mxu0 0.0
    %3278 = vmatpush2.msra.mxu0 0.0
    %3279 = vmatprep.subr.mxu0 0.0
    %3280 = vmatpush2.msra.mxu0 0.0
    %3281 = vmatprep.subr.mxu0 0.0
    %3282 = vmatpush2.msra.mxu0 0.0
    %3283 = vmatprep.subr.mxu0 0.0
    %3284 = vmatpush2.msra.mxu0 0.0
    %3285 = vmatprep.subr.mxu0 0.0
    %3286 = vmatpush2.msra.mxu0 0.0
    %3287 = vmatprep.subr.mxu0 0.0
    %3288 = vmatpush2.msra.mxu0 0.0
    %3289 = vmatprep.subr.mxu0 0.0
    %3290 = vmatpush2.msra.mxu0 0.0
    %3291 = vmatprep.subr.mxu0 0.0
    %3292 = vmatpush2.msra.mxu0 0.0
    %3293 = vmatprep.subr.mxu0 0.0
    %3294 = vmatpush2.msra.mxu0 0.0
    %3295 = vmatprep.subr.mxu0 0.0
    %3296 = vmatpush2.msra.mxu0 0.0
    %3297 = vmatprep.subr.mxu0 0.0
    %3298 = vmatpush2.msra.mxu0 0.0
    %3299 = vmatprep.subr.mxu0 0.0
    %3300 = vmatpush2.msra.mxu0 0.0
    %3301 = vmatprep.subr.mxu0 0.0
    %3302 = vmatpush2.msra.mxu0 0.0
    %3303 = vmatprep.subr.mxu0 0.0
    %3304 = vmatpush2.msra.mxu0 0.0
    %3305 = vmatprep.subr.mxu0 0.0
    %3306 = vmatpush2.msra.mxu0 0.0
    %3307 = vmatprep.mubr.f32.mxu0 0.0
    %3308 = vmatmul.mubr.f32.gmra.mxu0 %v3232
    %v3309 = vpop.f32.mrf.mxu0
    %v3310 = vadd.f32 0.0, %v3309
    %v3311 = vpop.f32.mrf.mxu0
    %3312 = vmatprep.mubr.f32.mxu0 0.0
    %3313 = vmatmul.mubr.f32.gmra.mxu0 %v3235
    %v3314 = vpop.f32.mrf.mxu0
    %v3315 = vadd.f32 0.0, %v3314
    %v3316 = vpop.f32.mrf.mxu0
    %3317 = vmatprep.mubr.f32.mxu0 0.0
    %3318 = vmatmul.mubr.f32.gmra.mxu0 %v3238
    %v3319 = vpop.f32.mrf.mxu0
    %v3320 = vadd.f32 0.0, %v3319
    %v3321 = vpop.f32.mrf.mxu0
    %3322 = vmatprep.mubr.f32.mxu0 0.0
    %3323 = vmatmul.mubr.f32.gmra.mxu0 %v3241
    %v3324 = vpop.f32.mrf.mxu0
    %v3325 = vadd.f32 0.0, %v3324
    %v3326 = vpop.f32.mrf.mxu0
    %3327 = vdwg.mxu0
    %v3328 = vadd.f32 %v2564, %v3310
    %v3329 = vadd.f32 %v2565, %v3315
    %v3330 = vadd.f32 %v2566, %v3320
    %v3331 = vadd.f32 %v2567, %v3325
    %3333 = vrot.lane.b32.xlu0 %v75, 96
    %v3334 = vpop.permute.xlu0 %3333
    %v3336 = vadd.f32 %v3328, %v3334
    %v3337 = vadd.f32 %v3329, %v3334
    %v3338 = vadd.f32 %v3330, %v3334
    %v3339 = vadd.f32 %v3331, %v3334
    %v3340 = vsel %vm76, %v3336, 0.0
    %3341 = vadd.xlane.f32.xlu0 %v3340
    %v3342 = vpop.xlane.xlu0 %3341
    %v3343 = vsel %vm76, %v3337, 0.0
    %3344 = vadd.xlane.f32.xlu0 %v3343
    %v3345 = vpop.xlane.xlu0 %3344
    %v3346 = vsel %vm76, %v3338, 0.0
    %3347 = vadd.xlane.f32.xlu0 %v3346
    %v3348 = vpop.xlane.xlu0 %3347
    %v3349 = vsel %vm76, %v3339, 0.0
    %3350 = vadd.xlane.f32.xlu0 %v3349
    %v3351 = vpop.xlane.xlu0 %3350
    %v3352 = vrcp.pop 32.0
    %v3353 = vmul.f32 %v3342, %v3352
    %v3354 = vmul.f32 %v3345, %v3352
    %v3355 = vmul.f32 %v3348, %v3352
    %v3356 = vmul.f32 %v3351, %v3352
    %v3357 = vsub.f32 %v3336, %v3353
    %v3358 = vsub.f32 %v3337, %v3354
    %v3359 = vsub.f32 %v3338, %v3355
    %v3360 = vsub.f32 %v3339, %v3356
    %v3361 = vmul.f32 %v3357, %v3357
    %v3362 = vmul.f32 %v3358, %v3358
    %v3363 = vmul.f32 %v3359, %v3359
    %v3364 = vmul.f32 %v3360, %v3360
    %v3365 = vsel %vm76, %v3361, 0.0
    %3366 = vadd.xlane.f32.xlu0 %v3365
    %v3367 = vpop.xlane.xlu0 %3366
    %v3368 = vsel %vm76, %v3362, 0.0
    %3369 = vadd.xlane.f32.xlu0 %v3368
    %v3370 = vpop.xlane.xlu0 %3369
    %v3371 = vsel %vm76, %v3363, 0.0
    %3372 = vadd.xlane.f32.xlu0 %v3371
    %v3373 = vpop.xlane.xlu0 %3372
    %v3374 = vsel %vm76, %v3364, 0.0
    %3375 = vadd.xlane.f32.xlu0 %v3374
    %v3376 = vpop.xlane.xlu0 %3375
    %v3377 = vmul.f32 %v3367, %v3352
    %v3378 = vmul.f32 %v3370, %v3352
    %v3379 = vmul.f32 %v3373, %v3352
    %v3380 = vmul.f32 %v3376, %v3352
    %v3381 = vadd.f32 %v3377, 1e-05
    %v3382 = vadd.f32 %v3378, 1e-05
    %v3383 = vadd.f32 %v3379, 1e-05
    %v3384 = vadd.f32 %v3380, 1e-05
    %v3385 = vrsqrt.pop %v3381
    %v3386 = vrsqrt.pop %v3382
    %v3387 = vrsqrt.pop %v3383
    %v3388 = vrsqrt.pop %v3384
    %v3389 = vmul.f32 %v3357, %v3385
    %v3390 = vmul.f32 %v3358, %v3386
    %v3391 = vmul.f32 %v3359, %v3387
    %v3392 = vmul.f32 %v3360, %v3388
    %v3393 = vlaneseq
    %v3394 = vshrl.u32 %v3393, 7
    %v3395 = vsub.s32 2, %v3394
    %v3396 = vrot.slane %v71, %v3395
    %v3397 = vmul.f32 %v3389, %v3396
    %v3398 = vmul.f32 %v3390, %v3396
    %v3399 = vmul.f32 %v3391, %v3396
    %v3400 = vmul.f32 %v3392, %v3396
    %3402 = vrot.lane.b32.xlu0 %v3396, 96
    %v3403 = vpop.permute.xlu0 %3402
    %v3405 = vadd.f32 %v3397, %v3403
    %v3406 = vadd.f32 %v3398, %v3403
    %v3407 = vadd.f32 %v3399, %v3403
    %v3408 = vadd.f32 %v3400, %v3403
    %3409 = vst.msk [vmem:[#allocation8] sm:$0xff] %vm76, %v3405
    %3410 = vst.msk [vmem:[#allocation8 + $0x8] sm:$0xff] %vm76, %v3406
    %3411 = vst.msk [vmem:[#allocation8 + $0x10] sm:$0xff] %vm76, %v3407
    %3412 = vst.msk [vmem:[#allocation8 + $0x18] sm:$0xff] %vm76, %v3408
    // Predicated region
    $region30: #{tpu_custom_call.1} parent=1 // pred_check
      _
    $region31: #{tpu_custom_call.1} parent=1 // pred_check_branch
      %3414 = sbr.rel (0) target = $region33
    $region32: #{tpu_custom_call.1} parent=1 // pred_region
      %s3416 = ssub.s32 512, 512
      %3417 = vsyncadd [#allocation4], %s3416
      %s3418 = sshll.u32 [#allocation8], 4
      %s3419 = int_to_ptr.vmem [resolvable:$true] %s3418
      %3424 = dma.vmem_to_hbm [thread:$0]  %s3419, 512, %s4, [#allocation4], 128, 128, 8
    $region33: #{tpu_custom_call.1} parent=1 // pred_fallthru
      _
    // Predicated region
    $region34: #{tpu_custom_call.1} parent=1 // pred_check
      _
    $region35: #{tpu_custom_call.1} parent=1 // pred_check_branch
      %3426 = sbr.rel (0) target = $region37
    $region36: #{tpu_custom_call.1} parent=1 // pred_region
      %3427 = dma.done [#allocation4], 512
    $region37: #{tpu_custom_call.1} parent=1 // pred_fallthru
      _
    %3428 = vsyncpa [#allocation3], 1
    %3429 = vsyncpa [#allocation6], 1
    %3430 = vsyncpa [#allocation4], 1

</llo_original>
